<compile_context>
chip_gen: v6e
topology: v6e:2x2x1
jax: 0.10.0
libtpu: 0.0.40
codegen_flags: <defaults>
</compile_context>

<pallas_src>
import jax
import jax.numpy as jnp
import numpy as np
from jax.experimental import pallas as pl
from jax.experimental.pallas import tpu as pltpu


def _make_kernel(s_valid, s_pad):
    def kernel(q_ref, k_ref, wa_wt_ref, ua_wt_ref, bias_ref, va_w_ref, ctx_ref, w_ref):
        BT, S, H = k_ref.shape
        k = k_ref[...]                                                       # (BT, S, H)

        # nn.Linear projections (weights pre-transposed in the wrapper).
        # Both projection biases are folded into bias_ref and added once to q_proj.
        q_proj = jnp.dot(q_ref[...], wa_wt_ref[...],
                         preferred_element_type=jnp.float32) + bias_ref[...]  # (BT, H)
        k_proj = jnp.dot(k.reshape(BT * S, H), ua_wt_ref[...],
                         preferred_element_type=jnp.float32)                  # (BT*S, H)

        e = jnp.tanh(k_proj.reshape(BT, S, H) + q_proj[:, None, :])           # (BT, S, H)

        # Va: Linear(H, 1) as VPU multiply + lane reduction -> lane-dense scores.
        # (Va's bias is a per-row constant -> cancels in softmax; dropped.)
        scores = jnp.sum(e * va_w_ref[...], axis=-1)                          # (BT, S)
        if s_valid < s_pad:
            lane = jax.lax.broadcasted_iota(jnp.int32, scores.shape, 1)
            scores = jnp.where(lane < s_valid, scores, -jnp.inf)

        # Numerically stable softmax over the sequence (lane) axis.
        m = jnp.max(scores, axis=-1, keepdims=True)                           # (BT, 1)
        p = jnp.exp(scores - m)                                               # (BT, S)
        denom = jnp.sum(p, axis=-1, keepdims=True)                            # (BT, 1)
        r = pl.reciprocal(denom, approx=True)      # EUP slot (idle after exp)
        r = r * (2.0 - denom * r)                  # one Newton step -> full f32 accuracy
        w = p * r                                                             # (BT, S)

        # context = sum_s weights * keys: VPU multiply + sublane (XLU) reduction.
        # Avoids BT separate M=1 MXU matmuls and keeps the output 2D/sublane-dense.
        ctx = jnp.sum(w[:, :, None] * k, axis=1)                              # (BT, H)

        ctx_ref[...] = ctx.astype(ctx_ref.dtype)
        w_ref[...] = w.astype(w_ref.dtype)

    return kernel


def _pick_block_b(B, S_pad, H, itemsize):
    """Largest batch block that (a) divides B, (b) is a multiple of 8 or the full batch
    (dense (8,128) sublane tiling for the 2D blocks), (c) fits a 10 MiB VMEM budget
    (double-buffered keys + ~3x f32 (BT*S,H) intermediates; safe on v5e's 16 MiB
    default scoped VMEM), (d) targets BT*S ~ 2048 MXU rows, and (e) leaves >= 2 grid
    steps when B >= 2 so v7x's two TensorCores both get work."""
    budget = 10 * 1024 * 1024
    per_row = S_pad * H * (2 * itemsize + 3 * 4)
    vmem_cap = max(1, budget // per_row)
    target = max(1, pl.cdiv(2048, S_pad))
    cap = max(1, min(B, target, vmem_cap, B // 2 if B >= 2 else B))

    valid = [d for d in range(1, B + 1) if B % d == 0 and (d % 8 == 0 or d == B)]
    under = [d for d in valid if d <= cap]
    if under:
        return max(under)
    fits = [d for d in valid if d <= vmem_cap]
    return min(fits) if fits else min(valid)


def bahdanau_attention(query, keys, params, *, block_b=None, matmul_dtype=None):
    """query: (B,1,H), keys: (B,S,H) -> (context (B,1,H), weights (B,1,S))."""
    B, Q, H = query.shape
    assert Q == 1
    S = keys.shape[1]
    wa_w, wa_b, ua_w, ua_b, va_w, va_b = params
    del va_b  # scalar shift of every score; softmax is shift-invariant -> no effect

    # Pad the sequence axis to a multiple of 8 so the in-kernel reshape is a layout
    # no-op; padded columns are masked to -inf before the softmax.
    S_pad = ((S + 7) // 8) * 8
    keys_in = keys if S_pad == S else jnp.pad(keys, ((0, 0), (0, S_pad - S), (0, 0)))

    # Query squeezed to 2D so the kernel loads a dense (BT, H) tile.
    q2 = query.reshape(B, H)

    # Pre-transpose Linear weights; fold the two projection biases into one row.
    wa_wt = wa_w.T                               # (H, H)
    ua_wt = ua_w.T                               # (H, H)
    bias = (wa_b + ua_b).reshape(1, H)           # added only to q_proj
    va_w2 = va_w.reshape(1, H)

    # Optional reduced-precision matmul operands (bf16 -> fast MXU path on v5e/v6e and
    # half the keys HBM stream). Accumulation and softmax stay f32.
    if matmul_dtype is not None:
        q2 = q2.astype(matmul_dtype)
        keys_in = keys_in.astype(matmul_dtype)
        wa_wt = wa_wt.astype(matmul_dtype)
        ua_wt = ua_wt.astype(matmul_dtype)

    if block_b is None:
        block_b = _pick_block_b(B, S_pad, H, jnp.dtype(keys_in.dtype).itemsize)
    assert B % block_b == 0, "block_b must divide the batch size"
    BT = block_b

    ctx2d, w2d = pl.pallas_call(
        _make_kernel(S, S_pad),
        out_shape=(
            jax.ShapeDtypeStruct((B, H), query.dtype),
            jax.ShapeDtypeStruct((B, S_pad), jnp.float32),
        ),
        grid_spec=pltpu.PrefetchScalarGridSpec(
            num_scalar_prefetch=0,
            grid=(B // BT,),
            in_specs=[
                pl.BlockSpec((BT, H), lambda b: (b, 0)),            # query block (2D)
                pl.BlockSpec((BT, S_pad, H), lambda b: (b, 0, 0)),  # keys block
                pl.BlockSpec((H, H), lambda b: (0, 0)),             # Wa^T (resident)
                pl.BlockSpec((H, H), lambda b: (0, 0)),             # Ua^T (resident)
                pl.BlockSpec((1, H), lambda b: (0, 0)),             # folded bias row
                pl.BlockSpec((1, H), lambda b: (0, 0)),             # Va weight row
            ],
            out_specs=[
                pl.BlockSpec((BT, H), lambda b: (b, 0)),            # context (2D dense)
                pl.BlockSpec((BT, S_pad), lambda b: (b, 0)),        # weights (2D dense)
            ],
        ),
        compiler_params=pltpu.CompilerParams(dimension_semantics=("parallel",)),
    )(q2, keys_in, wa_wt, ua_wt, bias, va_w2)

    # Re-insert the singleton query dim and drop sequence padding in the wrapper.
    context = ctx2d[:, None, :]                  # (B, 1, H)
    weights = w2d[:, :S][:, None, :]             # (B, 1, S)
    return context, weights


def reference(query, keys, params):
    wa_w, wa_b, ua_w, ua_b, va_w, va_b = params
    e = jnp.tanh(query @ wa_w.T + wa_b + keys @ ua_w.T + ua_b)     # (B,S,H)
    scores = e @ va_w.T + va_b                                     # (B,S,1)
    scores = jnp.transpose(scores, (0, 2, 1))                      # (B,1,S)
    weights = jax.nn.softmax(scores, axis=-1)
    context = jnp.einsum("bqs,bsh->bqh", weights, keys)
    return context, weights


def _make_params(key, H):
    k1, k2, k3, k4, k5, k6 = jax.random.split(key, 6)
    bound = 1.0 / np.sqrt(H)  # PyTorch nn.Linear default init range
    wa_w = jax.random.uniform(k1, (H, H), jnp.float32, -bound, bound)
    wa_b = jax.random.uniform(k2, (H,), jnp.float32, -bound, bound)
    ua_w = jax.random.uniform(k3, (H, H), jnp.float32, -bound, bound)
    ua_b = jax.random.uniform(k4, (H,), jnp.float32, -bound, bound)
    va_w = jax.random.uniform(k5, (1, H), jnp.float32, -bound, bound)
    va_b = jax.random.uniform(k6, (1,), jnp.float32, -bound, bound)
    return (wa_w, wa_b, ua_w, ua_b, va_w, va_b)


if __name__ == "__main__":
    H = 128  # hidden_size in the PyTorch module
    master = jax.random.PRNGKey(0)
    kp, kd = jax.random.split(master)
    params = _make_params(kp, H)

    # Case 1: multi-step grid with dense (8,128) blocks (B=16 -> BT=8, grid=(2,)).
    # Case 2: ragged sequence (S=10 -> padded to 16, masked) with BT=B, grid=(1,).
    for B, S in [(16, 64), (4, 10)]:
        kq, kk, kd = jax.random.split(kd, 3)
        query = jax.random.normal(kq, (B, 1, H), dtype=jnp.float32)
        keys = jax.random.normal(kk, (B, S, H), dtype=jnp.float32)

        ctx, wts = bahdanau_attention(query, keys, params)
        jax.block_until_ready((ctx, wts))

        ctx_ref, wts_ref = reference(query, keys, params)
        np.testing.assert_allclose(np.asarray(ctx), np.asarray(ctx_ref),
                                   rtol=1e-5, atol=1e-5)
        np.testing.assert_allclose(np.asarray(wts), np.asarray(wts_ref),
                                   rtol=1e-5, atol=1e-5)
        assert ctx.shape == (B, 1, H) and wts.shape == (B, 1, S)

    print("KERNEL_OK")
</pallas_src>

<mosaic_0001>
module attributes {stable_mosaic.version = 11 : i64} {
  func.func @kernel(%arg0: i32, %arg1: memref<8x128xf32, #tpu.memory_space<vmem>>, %arg2: memref<8x64x128xf32, #tpu.memory_space<vmem>>, %arg3: memref<128x128xf32, #tpu.memory_space<vmem>>, %arg4: memref<128x128xf32, #tpu.memory_space<vmem>>, %arg5: memref<1x128xf32, #tpu.memory_space<vmem>>, %arg6: memref<1x128xf32, #tpu.memory_space<vmem>>, %arg7: memref<8x128xf32, #tpu.memory_space<vmem>>, %arg8: memref<8x64xf32, #tpu.memory_space<vmem>>) attributes {dimension_semantics = [#tpu.dimension_semantics<parallel>], iteration_bounds = array<i64: 2>, scalar_prefetch = 0 : i64, scratch_operands = 0 : i64, tpu.core_type = #tpu.core_type<tc>, window_params = [{transform_indices = @transform_0, window_bounds = array<i64: 8, 128>}, {transform_indices = @transform_1, window_bounds = array<i64: 8, 64, 128>}, {pipeline_mode = #tpu.pipeline_mode<synchronous>, transform_indices = @transform_2, window_bounds = array<i64: 128, 128>}, {pipeline_mode = #tpu.pipeline_mode<synchronous>, transform_indices = @transform_3, window_bounds = array<i64: 128, 128>}, {pipeline_mode = #tpu.pipeline_mode<synchronous>, transform_indices = @transform_4, window_bounds = array<i64: 1, 128>}, {pipeline_mode = #tpu.pipeline_mode<synchronous>, transform_indices = @transform_5, window_bounds = array<i64: 1, 128>}, {transform_indices = @transform_6, window_bounds = array<i64: 8, 128>}, {transform_indices = @transform_7, window_bounds = array<i64: 8, 64>}]} {
    %c0 = arith.constant 0 : index
    %c0_0 = arith.constant 0 : index
    %c0_1 = arith.constant 0 : index
    %0 = vector.load %arg2[%c0, %c0_0, %c0_1] : memref<8x64x128xf32, #tpu.memory_space<vmem>>, vector<8x64x128xf32>
    %c0_2 = arith.constant 0 : index
    %c0_3 = arith.constant 0 : index
    %1 = vector.load %arg1[%c0_2, %c0_3] : memref<8x128xf32, #tpu.memory_space<vmem>>, vector<8x128xf32>
    %c0_4 = arith.constant 0 : index
    %c0_5 = arith.constant 0 : index
    %2 = vector.load %arg3[%c0_4, %c0_5] : memref<128x128xf32, #tpu.memory_space<vmem>>, vector<128x128xf32>
    %cst = arith.constant dense<0.000000e+00> : vector<8x128xf32>
    %3 = tpu.matmul %1, %2, %cst {dimension_numbers = #tpu.dot_dimension_numbers<[1], [0], [0], [1], [0, 0, 1, 1], [], []>} : vector<8x128xf32>, vector<128x128xf32>, vector<8x128xf32> -> vector<8x128xf32>
    %c0_6 = arith.constant 0 : index
    %c0_7 = arith.constant 0 : index
    %4 = vector.load %arg5[%c0_6, %c0_7] : memref<1x128xf32, #tpu.memory_space<vmem>>, vector<1x128xf32>
    %5 = vector.broadcast %4 : vector<1x128xf32> to vector<8x128xf32>
    %6 = arith.addf %3, %5 : vector<8x128xf32>
    %7 = vector.shape_cast %0 : vector<8x64x128xf32> to vector<512x128xf32>
    %c0_8 = arith.constant 0 : index
    %c0_9 = arith.constant 0 : index
    %8 = vector.load %arg4[%c0_8, %c0_9] : memref<128x128xf32, #tpu.memory_space<vmem>>, vector<128x128xf32>
    %cst_10 = arith.constant dense<0.000000e+00> : vector<512x128xf32>
    %9 = tpu.matmul %7, %8, %cst_10 {dimension_numbers = #tpu.dot_dimension_numbers<[1], [0], [0], [1], [0, 0, 1, 1], [], []>} : vector<512x128xf32>, vector<128x128xf32>, vector<512x128xf32> -> vector<512x128xf32>
    %10 = vector.shape_cast %9 : vector<512x128xf32> to vector<8x64x128xf32>
    %11 = vector.shape_cast %6 : vector<8x128xf32> to vector<8x1x128xf32>
    %12 = vector.broadcast %11 : vector<8x1x128xf32> to vector<8x64x128xf32>
    %13 = arith.addf %10, %12 : vector<8x64x128xf32>
    %14 = math.tanh %13 : vector<8x64x128xf32>
    %c0_11 = arith.constant 0 : index
    %c0_12 = arith.constant 0 : index
    %15 = vector.load %arg6[%c0_11, %c0_12] : memref<1x128xf32, #tpu.memory_space<vmem>>, vector<1x128xf32>
    %16 = vector.shape_cast %15 : vector<1x128xf32> to vector<1x1x128xf32>
    %17 = vector.broadcast %16 : vector<1x1x128xf32> to vector<8x64x128xf32>
    %18 = arith.mulf %14, %17 : vector<8x64x128xf32>
    %cst_13 = arith.constant dense<0.000000e+00> : vector<8x64xf32>
    %19 = vector.multi_reduction <add>, %18, %cst_13 [2] : vector<8x64x128xf32> to vector<8x64xf32>
    %cst_14 = arith.constant dense<0xFF800000> : vector<8xf32>
    %20 = vector.multi_reduction <maximumf>, %19, %cst_14 [1] : vector<8x64xf32> to vector<8xf32>
    %21 = vector.shape_cast %20 : vector<8xf32> to vector<8x1xf32>
    %22 = vector.broadcast %21 : vector<8x1xf32> to vector<8x64xf32>
    %23 = arith.subf %19, %22 : vector<8x64xf32>
    %24 = math.exp %23 : vector<8x64xf32>
    %cst_15 = arith.constant dense<0.000000e+00> : vector<8xf32>
    %25 = vector.multi_reduction <add>, %24, %cst_15 [1] : vector<8x64xf32> to vector<8xf32>
    %26 = vector.shape_cast %25 : vector<8xf32> to vector<8x1xf32>
    %27 = tpu.reciprocal %26 {approx = true} : vector<8x1xf32> -> vector<8x1xf32>
    %28 = arith.mulf %26, %27 : vector<8x1xf32>
    %cst_16 = arith.constant 2.000000e+00 : f32
    %29 = vector.broadcast %cst_16 : f32 to vector<8x1xf32>
    %30 = arith.subf %29, %28 : vector<8x1xf32>
    %31 = arith.mulf %27, %30 : vector<8x1xf32>
    %32 = vector.broadcast %31 : vector<8x1xf32> to vector<8x64xf32>
    %33 = arith.mulf %24, %32 : vector<8x64xf32>
    %34 = vector.shape_cast %33 : vector<8x64xf32> to vector<8x64x1xf32>
    %35 = vector.broadcast %34 : vector<8x64x1xf32> to vector<8x64x128xf32>
    %36 = arith.mulf %35, %0 : vector<8x64x128xf32>
    %cst_17 = arith.constant dense<0.000000e+00> : vector<8x128xf32>
    %37 = vector.multi_reduction <add>, %36, %cst_17 [1] : vector<8x64x128xf32> to vector<8x128xf32>
    %c0_18 = arith.constant 0 : index
    %c0_19 = arith.constant 0 : index
    %38 = vector.load %arg7[%c0_18, %c0_19] : memref<8x128xf32, #tpu.memory_space<vmem>>, vector<8x128xf32>
    tpu.vector_store %arg7[%c0_18, %c0_19], %37 {strides = array<i32>} : memref<8x128xf32, #tpu.memory_space<vmem>>, vector<8x128xf32>,
    %c0_20 = arith.constant 0 : index
    %c0_21 = arith.constant 0 : index
    %39 = vector.load %arg8[%c0_20, %c0_21] : memref<8x64xf32, #tpu.memory_space<vmem>>, vector<8x64xf32>
    tpu.vector_store %arg8[%c0_20, %c0_21], %33 {strides = array<i32>} : memref<8x64xf32, #tpu.memory_space<vmem>>, vector<8x64xf32>,
    return
  }
  func.func @transform_0(%arg0: i32) -> (i32, i32) {
    %c0_i32 = arith.constant 0 : i32
    %c0_i32_0 = arith.constant 0 : i32
    return %arg0, %c0_i32 : i32, i32
  }
  func.func @transform_1(%arg0: i32) -> (i32, i32, i32) {
    %c0_i32 = arith.constant 0 : i32
    %c0_i32_0 = arith.constant 0 : i32
    %c0_i32_1 = arith.constant 0 : i32
    return %arg0, %c0_i32, %c0_i32_0 : i32, i32, i32
  }
  func.func @transform_2(%arg0: i32) -> (i32, i32) {
    %c0_i32 = arith.constant 0 : i32
    %c0_i32_0 = arith.constant 0 : i32
    %c0_i32_1 = arith.constant 0 : i32
    return %c0_i32, %c0_i32_0 : i32, i32
  }
  func.func @transform_3(%arg0: i32) -> (i32, i32) {
    %c0_i32 = arith.constant 0 : i32
    %c0_i32_0 = arith.constant 0 : i32
    %c0_i32_1 = arith.constant 0 : i32
    return %c0_i32, %c0_i32_0 : i32, i32
  }
  func.func @transform_4(%arg0: i32) -> (i32, i32) {
    %c0_i32 = arith.constant 0 : i32
    %c0_i32_0 = arith.constant 0 : i32
    %c0_i32_1 = arith.constant 0 : i32
    return %c0_i32, %c0_i32_0 : i32, i32
  }
  func.func @transform_5(%arg0: i32) -> (i32, i32) {
    %c0_i32 = arith.constant 0 : i32
    %c0_i32_0 = arith.constant 0 : i32
    %c0_i32_1 = arith.constant 0 : i32
    return %c0_i32, %c0_i32_0 : i32, i32
  }
  func.func @transform_6(%arg0: i32) -> (i32, i32) {
    %c0_i32 = arith.constant 0 : i32
    %c0_i32_0 = arith.constant 0 : i32
    return %arg0, %c0_i32 : i32, i32
  }
  func.func @transform_7(%arg0: i32) -> (i32, i32) {
    %c0_i32 = arith.constant 0 : i32
    %c0_i32_0 = arith.constant 0 : i32
    return %arg0, %c0_i32 : i32, i32
  }
}

</mosaic_0001>

<llo_original>
// kernel: tpu_custom_call.1
$region0: #{tpu_custom_call.1}
  #allocation0 [shape = 'u32[]', space=smem, size = 0x4, offset = 0x4, fixed_abs, tag = 'smem constant byte address 0x4 - core index']
  #allocation1 [shape = 'u32[144,128]{1,0:T(1,128)}', space=vmem, size = 0x12000, scoped, tag = 'internal scratch']
  %s0 = inlined_call_operand.hbm [shape: f32[16,128], index: 0, kind: input, shape index: {}]
  %s1 = inlined_call_operand.hbm [shape: f32[16,64,128], index: 1, kind: input, shape index: {}]
  %s2 = inlined_call_operand.hbm [shape: f32[128,128], index: 2, kind: input, shape index: {}]
  %s3 = inlined_call_operand.hbm [shape: f32[128,128], index: 3, kind: input, shape index: {}]
  %s4 = inlined_call_operand.vmem [shape: f32[1,128], index: 4, kind: input, shape index: {}]
  %s5 = inlined_call_operand.vmem [shape: f32[1,128], index: 5, kind: input, shape index: {}]
  %s6 = inlined_call_operand.hbm [shape: f32[16,128], index: 6, kind: output, shape index: {0}]
  %s7 = inlined_call_operand.hbm [shape: f32[16,64], index: 7, kind: output, shape index: {1}]
  %8 = xla_tuple %s6, %s7
  %s9 = sld [smem:[#allocation0]]
  $region81: #{tpu_custom_call.1} parent=0
    _
  %s11 = ssub.s32 1, %s9
  %s12 = scalar_select 0, %s11, %s9
  $region1: #{tpu_custom_call.1} parent=0
    #allocation2 [shape = 'u8[8192]{0}', space=vmem, size = 0x2000, scoped, tag = 'input window, operand 0']
    #allocation3 [shape = 's32[2]{0}', space=sflag, size = 0x8, scoped, tag = 'scoped memory for tpu_custom_call.1']
    #allocation4 [shape = 's32[2]{0}', space=sflag, size = 0x8, scoped, tag = 'scoped memory for tpu_custom_call.1']
    #allocation5 [shape = 'u8[524288]{0}', space=vmem, size = 0x80000, scoped, tag = 'input window, operand 1']
    #allocation6 [shape = 's32[2]{0}', space=sflag, size = 0x8, scoped, tag = 'scoped memory for tpu_custom_call.1']
    #allocation7 [shape = 'u8[65536]{0}', space=vmem, size = 0x10000, scoped, tag = 'input window, operand 2, single buffered']
    #allocation8 [shape = 'u8[65536]{0}', space=vmem, size = 0x10000, scoped, tag = 'input window, operand 3, single buffered']
    #allocation9 [shape = 's32[1]{0}', space=sflag, size = 0x4, scoped, tag = 'scoped memory for tpu_custom_call.1']
    #allocation10 [shape = 'u8[8192]{0}', space=vmem, size = 0x2000, scoped, tag = 'output window, operand 0']
    #allocation11 [shape = 'u8[8192]{0}', space=vmem, size = 0x2000, scoped, tag = 'output window, operand 1']
    #allocation12 [shape = 's32[2]{0}', space=sflag, size = 0x8, scoped, tag = 'scoped memory for tpu_custom_call.1']
    %13 = vsyncpa [#allocation3], 0
    %s14 = scalar_lea.sflag [#allocation3], 1
    %15 = vsyncpa %s14, 0
    %16 = vsyncpa [#allocation6], 0
    %s17 = scalar_lea.sflag [#allocation6], 1
    %18 = vsyncpa %s17, 0
    %19 = vsyncpa [#allocation9], 0
    %20 = vsyncpa [#allocation4], 0
    %s21 = scalar_lea.sflag [#allocation4], 1
    %22 = vsyncpa %s21, 0
    %23 = vsyncpa [#allocation12], 0
    %s24 = scalar_lea.sflag [#allocation12], 1
    %25 = vsyncpa %s24, 0
    loop: start=0, step=1, limit=4
    $region2: #{tpu_custom_call.1} parent=1 // loop_pre_header
      _
    $region3: #{tpu_custom_call.1} parent=1 // loop_header
      %s27 = sphi 0, %s31
      %p28 = scmp.ge.s32.totalorder %s27, 4
      %s37 = sphi 0, %s39
      %s40 = sphi 0, %s37
      %s41 = sphi 0, %s40
      %s57 = sphi 0, %s41
      %s63 = sphi 0, %s65
      %s66 = sphi 0, %s63
      %s67 = sphi 0, %s66
      %s83 = sphi 0, %s67
      %s87 = sphi 0, %s87
      %s89 = sphi 0, %s87
      %s90 = sphi 0, %s89
      %s104 = sphi 0, %s90
      %s108 = sphi 0, %s108
      %s110 = sphi 0, %s108
      %s111 = sphi 0, %s110
      %s125 = sphi 0, %s111
      %s129 = sphi 0, %s129
      %s131 = sphi 0, %s129
      %s132 = sphi 0, %s131
      %s146 = sphi 0, %s132
      %s150 = sphi 0, %s150
      %s152 = sphi 0, %s150
      %s153 = sphi 0, %s152
      %s167 = sphi 0, %s153
      %s173 = sphi 0, %s175
      %s176 = sphi 0, %s173
      %s177 = sphi 0, %s176
      %s193 = sphi 0, %s177
      %s199 = sphi 0, %s201
      %s202 = sphi 0, %s199
      %s203 = sphi 0, %s202
      %s219 = sphi 0, %s203
    $region4: #{tpu_custom_call.1} parent=1 // loop_header_branch
      %30 = sbr.rel (%p28) target = $region8
    $region5: #{tpu_custom_call.1} parent=1 // loop_body
      %s32 = ssub.s32 %s27, 1
      %s33 = ssub.s32 %s27, 2
      %s34 = sadd.s32 %s27, 1
      %s35 = ssub.s32 %s27, %s34
      %p36 = scmp.eq.s32.totalorder %s35, 0
      %s38 = sadd.s32 %s37, 1
      %s39 = scalar_select %p36, %s37, %s38
      %p42 = pneg %p36
      %p43 = scmp.eq.s32.totalorder %s27, 1
      %p44 = por %p42, %p43
      %p45 = scmp.ne.s32.totalorder %s37, %s40
      %p46 = scmp.eq.s32.totalorder %s27, 0
      %p47 = por %p45, %p46
      %p48 = scmp.ne.s32.totalorder %s37, %s40
      %p49 = scmp.eq.s32.totalorder %s32, 1
      %p50 = por %p48, %p49
      %p51 = scmp.ne.s32.totalorder %s40, %s41
      %p52 = scmp.eq.s32.totalorder %s32, 0
      %p53 = por %p51, %p52
      %p54 = scmp.ne.s32.totalorder %s40, %s41
      %p55 = scmp.eq.s32.totalorder %s33, 1
      %p56 = por %p54, %p55
      %p58 = scmp.ne.s32.totalorder %s41, %s57
      %p59 = scmp.eq.s32.totalorder %s33, 0
      %p60 = por %p58, %p59
      %s61 = ssub.s32 %s27, %s34
      %p62 = scmp.eq.s32.totalorder %s61, 0
      %s64 = sadd.s32 %s63, 1
      %s65 = scalar_select %p62, %s63, %s64
      %p68 = pneg %p62
      %p69 = scmp.eq.s32.totalorder %s27, 1
      %p70 = por %p68, %p69
      %p71 = scmp.ne.s32.totalorder %s63, %s66
      %p72 = scmp.eq.s32.totalorder %s27, 0
      %p73 = por %p71, %p72
      %p74 = scmp.ne.s32.totalorder %s63, %s66
      %p75 = scmp.eq.s32.totalorder %s32, 1
      %p76 = por %p74, %p75
      %p77 = scmp.ne.s32.totalorder %s66, %s67
      %p78 = scmp.eq.s32.totalorder %s32, 0
      %p79 = por %p77, %p78
      %p80 = scmp.ne.s32.totalorder %s66, %s67
      %p81 = scmp.eq.s32.totalorder %s33, 1
      %p82 = por %p80, %p81
      %p84 = scmp.ne.s32.totalorder %s67, %s83
      %p85 = scmp.eq.s32.totalorder %s33, 0
      %p86 = por %p84, %p85
      %s88 = sadd.s32 %s87, 1
      %p91 = scmp.eq.s32.totalorder %s27, 1
      %p92 = scmp.ne.s32.totalorder %s87, %s89
      %p93 = scmp.eq.s32.totalorder %s27, 0
      %p94 = por %p92, %p93
      %p95 = scmp.ne.s32.totalorder %s87, %s89
      %p96 = scmp.eq.s32.totalorder %s32, 1
      %p97 = por %p95, %p96
      %p98 = scmp.ne.s32.totalorder %s89, %s90
      %p99 = scmp.eq.s32.totalorder %s32, 0
      %p100 = por %p98, %p99
      %p101 = scmp.ne.s32.totalorder %s89, %s90
      %p102 = scmp.eq.s32.totalorder %s33, 1
      %p103 = por %p101, %p102
      %p105 = scmp.ne.s32.totalorder %s90, %s104
      %p106 = scmp.eq.s32.totalorder %s33, 0
      %p107 = por %p105, %p106
      %s109 = sadd.s32 %s108, 1
      %p112 = scmp.eq.s32.totalorder %s27, 1
      %p113 = scmp.ne.s32.totalorder %s108, %s110
      %p114 = scmp.eq.s32.totalorder %s27, 0
      %p115 = por %p113, %p114
      %p116 = scmp.ne.s32.totalorder %s108, %s110
      %p117 = scmp.eq.s32.totalorder %s32, 1
      %p118 = por %p116, %p117
      %p119 = scmp.ne.s32.totalorder %s110, %s111
      %p120 = scmp.eq.s32.totalorder %s32, 0
      %p121 = por %p119, %p120
      %p122 = scmp.ne.s32.totalorder %s110, %s111
      %p123 = scmp.eq.s32.totalorder %s33, 1
      %p124 = por %p122, %p123
      %p126 = scmp.ne.s32.totalorder %s111, %s125
      %p127 = scmp.eq.s32.totalorder %s33, 0
      %p128 = por %p126, %p127
      %s130 = sadd.s32 %s129, 1
      %p133 = scmp.eq.s32.totalorder %s27, 1
      %p134 = scmp.ne.s32.totalorder %s129, %s131
      %p135 = scmp.eq.s32.totalorder %s27, 0
      %p136 = por %p134, %p135
      %p137 = scmp.ne.s32.totalorder %s129, %s131
      %p138 = scmp.eq.s32.totalorder %s32, 1
      %p139 = por %p137, %p138
      %p140 = scmp.ne.s32.totalorder %s131, %s132
      %p141 = scmp.eq.s32.totalorder %s32, 0
      %p142 = por %p140, %p141
      %p143 = scmp.ne.s32.totalorder %s131, %s132
      %p144 = scmp.eq.s32.totalorder %s33, 1
      %p145 = por %p143, %p144
      %p147 = scmp.ne.s32.totalorder %s132, %s146
      %p148 = scmp.eq.s32.totalorder %s33, 0
      %p149 = por %p147, %p148
      %s151 = sadd.s32 %s150, 1
      %p154 = scmp.eq.s32.totalorder %s27, 1
      %p155 = scmp.ne.s32.totalorder %s150, %s152
      %p156 = scmp.eq.s32.totalorder %s27, 0
      %p157 = por %p155, %p156
      %p158 = scmp.ne.s32.totalorder %s150, %s152
      %p159 = scmp.eq.s32.totalorder %s32, 1
      %p160 = por %p158, %p159
      %p161 = scmp.ne.s32.totalorder %s152, %s153
      %p162 = scmp.eq.s32.totalorder %s32, 0
      %p163 = por %p161, %p162
      %p164 = scmp.ne.s32.totalorder %s152, %s153
      %p165 = scmp.eq.s32.totalorder %s33, 1
      %p166 = por %p164, %p165
      %p168 = scmp.ne.s32.totalorder %s153, %s167
      %p169 = scmp.eq.s32.totalorder %s33, 0
      %p170 = por %p168, %p169
      %s171 = ssub.s32 %s27, %s34
      %p172 = scmp.eq.s32.totalorder %s171, 0
      %s174 = sadd.s32 %s173, 1
      %s175 = scalar_select %p172, %s173, %s174
      %p178 = pneg %p172
      %p179 = scmp.eq.s32.totalorder %s27, 1
      %p180 = por %p178, %p179
      %p181 = scmp.ne.s32.totalorder %s173, %s176
      %p182 = scmp.eq.s32.totalorder %s27, 0
      %p183 = por %p181, %p182
      %p184 = scmp.ne.s32.totalorder %s173, %s176
      %p185 = scmp.eq.s32.totalorder %s32, 1
      %p186 = por %p184, %p185
      %p187 = scmp.ne.s32.totalorder %s176, %s177
      %p188 = scmp.eq.s32.totalorder %s32, 0
      %p189 = por %p187, %p188
      %p190 = scmp.ne.s32.totalorder %s176, %s177
      %p191 = scmp.eq.s32.totalorder %s33, 1
      %p192 = por %p190, %p191
      %p194 = scmp.ne.s32.totalorder %s177, %s193
      %p195 = scmp.eq.s32.totalorder %s33, 0
      %p196 = por %p194, %p195
      %s197 = ssub.s32 %s27, %s34
      %p198 = scmp.eq.s32.totalorder %s197, 0
      %s200 = sadd.s32 %s199, 1
      %s201 = scalar_select %p198, %s199, %s200
      %p204 = pneg %p198
      %p205 = scmp.eq.s32.totalorder %s27, 1
      %p206 = por %p204, %p205
      %p207 = scmp.ne.s32.totalorder %s199, %s202
      %p208 = scmp.eq.s32.totalorder %s27, 0
      %p209 = por %p207, %p208
      %p210 = scmp.ne.s32.totalorder %s199, %s202
      %p211 = scmp.eq.s32.totalorder %s32, 1
      %p212 = por %p210, %p211
      %p213 = scmp.ne.s32.totalorder %s202, %s203
      %p214 = scmp.eq.s32.totalorder %s32, 0
      %p215 = por %p213, %p214
      %p216 = scmp.ne.s32.totalorder %s202, %s203
      %p217 = scmp.eq.s32.totalorder %s33, 1
      %p218 = por %p216, %p217
      %p220 = scmp.ne.s32.totalorder %s203, %s219
      %p221 = scmp.eq.s32.totalorder %s33, 0
      %p222 = por %p220, %p221
      %p223 = scmp.le.s32.totalorder 1, %s27
      %p224 = scmp.lt.s32.totalorder %s27, 3
      %p225 = pnand %p223, %p224
      %p226 = pneg %p225
      // Predicated region
      $region9: #{tpu_custom_call.1} parent=5 // pred_check
        _
      $region10: #{tpu_custom_call.1} parent=5 // pred_check_branch
        %228 = sbr.rel (%p225) target = $region12
      $region11: #{tpu_custom_call.1} parent=5 // pred_region
        %s229 = ssub.s32 %s27, 1
        // Predicated region
        $region13: #{tpu_custom_call.1} parent=11 // pred_check
          %p230 = pneg %p100
        $region14: #{tpu_custom_call.1} parent=11 // pred_check_branch
          %232 = sbr.rel (%p230) target = $region16
        $region15: #{tpu_custom_call.1} parent=11 // pred_region
          %s234 = ssub.s32 2048, 2048
          %235 = vsyncadd [#allocation6], %s234
          %s236 = sshll.u32 [#allocation7], 4
          %s237 = int_to_ptr.vmem [resolvable:$true] %s236
          %242 = dma.hbm_to_vmem [thread:$0]  %s2, 2048, %s237, [#allocation6], 128, 128, 8
        $region16: #{tpu_custom_call.1} parent=11 // pred_fallthru
          _
        // Predicated region
        $region17: #{tpu_custom_call.1} parent=11 // pred_check
          %p243 = pneg %p121
        $region18: #{tpu_custom_call.1} parent=11 // pred_check_branch
          %245 = sbr.rel (%p243) target = $region20
        $region19: #{tpu_custom_call.1} parent=11 // pred_region
          %s247 = ssub.s32 2048, 2048
          %248 = vsyncadd [#allocation9], %s247
          %s249 = sshll.u32 [#allocation8], 4
          %s250 = int_to_ptr.vmem [resolvable:$true] %s249
          %255 = dma.hbm_to_vmem [thread:$0]  %s3, 2048, %s250, [#allocation9], 128, 128, 8
        $region20: #{tpu_custom_call.1} parent=11 // pred_fallthru
          _
        // Predicated region
        $region21: #{tpu_custom_call.1} parent=11 // pred_check
          %p256 = pneg %p142
        $region22: #{tpu_custom_call.1} parent=11 // pred_check_branch
          %258 = sbr.rel (%p256) target = $region24
        $region23: #{tpu_custom_call.1} parent=11 // pred_region
          _
        $region24: #{tpu_custom_call.1} parent=11 // pred_fallthru
          _
        // Predicated region
        $region25: #{tpu_custom_call.1} parent=11 // pred_check
          %p259 = pneg %p163
        $region26: #{tpu_custom_call.1} parent=11 // pred_check_branch
          %261 = sbr.rel (%p259) target = $region28
        $region27: #{tpu_custom_call.1} parent=11 // pred_region
          _
        $region28: #{tpu_custom_call.1} parent=11 // pred_fallthru
          _
      $region12: #{tpu_custom_call.1} parent=5 // pred_fallthru
        _
      %p262 = scmp.lt.s32.totalorder %s27, 2
      // Predicated region
      $region29: #{tpu_custom_call.1} parent=5 // pred_check
        %p263 = pneg %p262
      $region30: #{tpu_custom_call.1} parent=5 // pred_check_branch
        %265 = sbr.rel (%p263) target = $region32
      $region31: #{tpu_custom_call.1} parent=5 // pred_region
        // Predicated region
        $region33: #{tpu_custom_call.1} parent=31 // pred_check
          %p266 = pneg %p47
        $region34: #{tpu_custom_call.1} parent=31 // pred_check_branch
          %268 = sbr.rel (%p266) target = $region36
        $region35: #{tpu_custom_call.1} parent=31 // pred_region
          %s269 = sand.u32 %s37, 1
          %s270 = scalar_lea.sflag [#allocation3], %s269
          %s271 = sand.u32 %s37, 1
          %s272 = smul.addr %s271, 8
          %s273 = scalar_lea.vmem [#allocation2], %s272
          %s275 = ssub.s32 128, 128
          %276 = vsyncadd %s270, %s275
          %s277 = smul.addr %s27, 128
          %s278 = scalar_lea.hbm %s0, %s277
          %s280 = sshll.u32 %s273, 4
          %s281 = int_to_ptr.vmem [resolvable:$true] %s280
          %283 = dma.hbm_to_vmem [thread:$0]  %s278, 128, %s281, %s270
        $region36: #{tpu_custom_call.1} parent=31 // pred_fallthru
          _
        // Predicated region
        $region37: #{tpu_custom_call.1} parent=31 // pred_check
          %p284 = pneg %p73
        $region38: #{tpu_custom_call.1} parent=31 // pred_check_branch
          %286 = sbr.rel (%p284) target = $region40
        $region39: #{tpu_custom_call.1} parent=31 // pred_region
          %s287 = sand.u32 %s27, 1
          %s288 = scalar_lea.sflag [#allocation6], %s287
          %s289 = sand.u32 %s63, 1
          %s290 = smul.addr %s289, 512
          %s291 = scalar_lea.vmem [#allocation5], %s290
          %s292 = smul.u32 8, %s27
          %s294 = ssub.s32 8192, 8192
          %295 = vsyncadd %s288, %s294
          %s296 = smul.addr %s292, 8
          %s297 = smul.addr %s296, 128
          %s298 = scalar_lea.hbm %s1, %s297
          %s299 = sshll.u32 %s291, 4
          %s300 = int_to_ptr.vmem [resolvable:$true] %s299
          %305 = dma.hbm_to_vmem [thread:$0]  %s298, 8192, %s300, %s288, 128, 128, 8
        $region40: #{tpu_custom_call.1} parent=31 // pred_fallthru
          _
      $region32: #{tpu_custom_call.1} parent=5 // pred_fallthru
        _
      %p306 = scmp.le.s32.totalorder 1, %s27
      %p307 = scmp.lt.s32.totalorder %s27, 3
      %p308 = pnand %p306, %p307
      %p309 = pneg %p308
      // Predicated region
      $region41: #{tpu_custom_call.1} parent=5 // pred_check
        _
      $region42: #{tpu_custom_call.1} parent=5 // pred_check_branch
        %311 = sbr.rel (%p308) target = $region44
      $region43: #{tpu_custom_call.1} parent=5 // pred_region
        %s312 = ssub.s32 %s27, 1
        %s313 = sand.u32 %s40, 1
        %s314 = scalar_lea.sflag [#allocation3], %s313
        %s315 = sand.u32 %s40, 1
        %s316 = smul.addr %s315, 8
        %s317 = scalar_lea.vmem [#allocation2], %s316
        // Predicated region
        $region45: #{tpu_custom_call.1} parent=43 // pred_check
          %p318 = pneg %p53
        $region46: #{tpu_custom_call.1} parent=43 // pred_check_branch
          %320 = sbr.rel (%p318) target = $region48
        $region47: #{tpu_custom_call.1} parent=43 // pred_region
          %321 = dma.done %s314, 128
        $region48: #{tpu_custom_call.1} parent=43 // pred_fallthru
          _
        %s322 = sand.u32 %s32, 1
        %s323 = scalar_lea.sflag [#allocation6], %s322
        %s324 = sand.u32 %s66, 1
        %s325 = smul.addr %s324, 512
        %s326 = scalar_lea.vmem [#allocation5], %s325
        // Predicated region
        $region49: #{tpu_custom_call.1} parent=43 // pred_check
          %p327 = pneg %p79
        $region50: #{tpu_custom_call.1} parent=43 // pred_check_branch
          %329 = sbr.rel (%p327) target = $region52
        $region51: #{tpu_custom_call.1} parent=43 // pred_region
          %330 = dma.done %s323, 8192
        $region52: #{tpu_custom_call.1} parent=43 // pred_fallthru
          _
        // Predicated region
        $region53: #{tpu_custom_call.1} parent=43 // pred_check
          %p331 = pneg %p100
        $region54: #{tpu_custom_call.1} parent=43 // pred_check_branch
          %333 = sbr.rel (%p331) target = $region56
        $region55: #{tpu_custom_call.1} parent=43 // pred_region
          %334 = dma.done [#allocation6], 2048
        $region56: #{tpu_custom_call.1} parent=43 // pred_fallthru
          _
        // Predicated region
        $region57: #{tpu_custom_call.1} parent=43 // pred_check
          %p335 = pneg %p121
        $region58: #{tpu_custom_call.1} parent=43 // pred_check_branch
          %337 = sbr.rel (%p335) target = $region60
        $region59: #{tpu_custom_call.1} parent=43 // pred_region
          %338 = dma.done [#allocation9], 2048
        $region60: #{tpu_custom_call.1} parent=43 // pred_fallthru
          _
        %s339 = sand.u32 %s40, 1
        %s340 = scalar_lea.sflag [#allocation3], %s339
        %s341 = sand.u32 %s40, 1
        %s342 = smul.addr %s341, 8
        %s343 = scalar_lea.vmem [#allocation2], %s342
        %p344 = pneg %p53
        %p345 = pneg %p50
        %s346 = sand.u32 %s32, 1
        %s347 = scalar_lea.sflag [#allocation6], %s346
        %s348 = sand.u32 %s66, 1
        %s349 = smul.addr %s348, 512
        %s350 = scalar_lea.vmem [#allocation5], %s349
        %p351 = pneg %p79
        %p352 = pneg %p76
        %p353 = pneg %p100
        %p354 = pneg %p97
        %p355 = pneg %p121
        %p356 = pneg %p118
        %p357 = pneg %p142
        %p358 = pneg %p139
        %p359 = pneg %p163
        %p360 = pneg %p160
        %p361 = pneg %p189
        %p362 = pneg %p186
        %s363 = sand.u32 %s176, 1
        %s364 = scalar_lea.sflag [#allocation4], %s363
        %s365 = sand.u32 %s176, 1
        %s366 = smul.addr %s365, 8
        %s367 = scalar_lea.vmem [#allocation10], %s366
        %p368 = pneg %p215
        %p369 = pneg %p212
        %s370 = sand.u32 %s202, 1
        %s371 = scalar_lea.sflag [#allocation12], %s370
        %s372 = sand.u32 %s202, 1
        %s373 = smul.addr %s372, 8
        %s374 = scalar_lea.vmem [#allocation11], %s373
        %s375 = smul.u32 8, %s32
        %v376 = vld [vmem:[%s326] sm:$0xff]
        %v377 = vld [vmem:[%s326 + $0x8] sm:$0xff]
        %v378 = vld [vmem:[%s326 + $0x10] sm:$0xff]
        %v379 = vld [vmem:[%s326 + $0x18] sm:$0xff]
        %v380 = vld [vmem:[%s326 + $0x20] sm:$0xff]
        %v381 = vld [vmem:[%s326 + $0x28] sm:$0xff]
        %v382 = vld [vmem:[%s326 + $0x30] sm:$0xff]
        %v383 = vld [vmem:[%s326 + $0x38] sm:$0xff]
        %v384 = vld [vmem:[%s326 + $0x40] sm:$0xff]
        %v385 = vld [vmem:[%s326 + $0x48] sm:$0xff]
        %v386 = vld [vmem:[%s326 + $0x50] sm:$0xff]
        %v387 = vld [vmem:[%s326 + $0x58] sm:$0xff]
        %v388 = vld [vmem:[%s326 + $0x60] sm:$0xff]
        %v389 = vld [vmem:[%s326 + $0x68] sm:$0xff]
        %v390 = vld [vmem:[%s326 + $0x70] sm:$0xff]
        %v391 = vld [vmem:[%s326 + $0x78] sm:$0xff]
        %v392 = vld [vmem:[%s326 + $0x80] sm:$0xff]
        %v393 = vld [vmem:[%s326 + $0x88] sm:$0xff]
        %v394 = vld [vmem:[%s326 + $0x90] sm:$0xff]
        %v395 = vld [vmem:[%s326 + $0x98] sm:$0xff]
        %v396 = vld [vmem:[%s326 + $0xa0] sm:$0xff]
        %v397 = vld [vmem:[%s326 + $0xa8] sm:$0xff]
        %v398 = vld [vmem:[%s326 + $0xb0] sm:$0xff]
        %v399 = vld [vmem:[%s326 + $0xb8] sm:$0xff]
        %v400 = vld [vmem:[%s326 + $0xc0] sm:$0xff]
        %v401 = vld [vmem:[%s326 + $0xc8] sm:$0xff]
        %v402 = vld [vmem:[%s326 + $0xd0] sm:$0xff]
        %v403 = vld [vmem:[%s326 + $0xd8] sm:$0xff]
        %v404 = vld [vmem:[%s326 + $0xe0] sm:$0xff]
        %v405 = vld [vmem:[%s326 + $0xe8] sm:$0xff]
        %v406 = vld [vmem:[%s326 + $0xf0] sm:$0xff]
        %v407 = vld [vmem:[%s326 + $0xf8] sm:$0xff]
        %v408 = vld [vmem:[%s326 + $0x100] sm:$0xff]
        %v409 = vld [vmem:[%s326 + $0x108] sm:$0xff]
        %v410 = vld [vmem:[%s326 + $0x110] sm:$0xff]
        %v411 = vld [vmem:[%s326 + $0x118] sm:$0xff]
        %v412 = vld [vmem:[%s326 + $0x120] sm:$0xff]
        %v413 = vld [vmem:[%s326 + $0x128] sm:$0xff]
        %v414 = vld [vmem:[%s326 + $0x130] sm:$0xff]
        %v415 = vld [vmem:[%s326 + $0x138] sm:$0xff]
        %v416 = vld [vmem:[%s326 + $0x140] sm:$0xff]
        %v417 = vld [vmem:[%s326 + $0x148] sm:$0xff]
        %v418 = vld [vmem:[%s326 + $0x150] sm:$0xff]
        %v419 = vld [vmem:[%s326 + $0x158] sm:$0xff]
        %v420 = vld [vmem:[%s326 + $0x160] sm:$0xff]
        %v421 = vld [vmem:[%s326 + $0x168] sm:$0xff]
        %v422 = vld [vmem:[%s326 + $0x170] sm:$0xff]
        %v423 = vld [vmem:[%s326 + $0x178] sm:$0xff]
        %v424 = vld [vmem:[%s326 + $0x180] sm:$0xff]
        %v425 = vld [vmem:[%s326 + $0x188] sm:$0xff]
        %v426 = vld [vmem:[%s326 + $0x190] sm:$0xff]
        %v427 = vld [vmem:[%s326 + $0x198] sm:$0xff]
        %v428 = vld [vmem:[%s326 + $0x1a0] sm:$0xff]
        %v429 = vld [vmem:[%s326 + $0x1a8] sm:$0xff]
        %v430 = vld [vmem:[%s326 + $0x1b0] sm:$0xff]
        %v431 = vld [vmem:[%s326 + $0x1b8] sm:$0xff]
        %v432 = vld [vmem:[%s326 + $0x1c0] sm:$0xff]
        %v433 = vld [vmem:[%s326 + $0x1c8] sm:$0xff]
        %v434 = vld [vmem:[%s326 + $0x1d0] sm:$0xff]
        %v435 = vld [vmem:[%s326 + $0x1d8] sm:$0xff]
        %v436 = vld [vmem:[%s326 + $0x1e0] sm:$0xff]
        %v437 = vld [vmem:[%s326 + $0x1e8] sm:$0xff]
        %v438 = vld [vmem:[%s326 + $0x1f0] sm:$0xff]
        %v439 = vld [vmem:[%s326 + $0x1f8] sm:$0xff]
        %v440 = vld [vmem:[%s317] sm:$0xff]
        %v441 = vld [vmem:[#allocation7] sm:$0xff]
        %v442 = vld [vmem:[#allocation7 + $0x8] sm:$0xff]
        %v443 = vld [vmem:[#allocation7 + $0x10] sm:$0xff]
        %v444 = vld [vmem:[#allocation7 + $0x18] sm:$0xff]
        %v445 = vld [vmem:[#allocation7 + $0x20] sm:$0xff]
        %v446 = vld [vmem:[#allocation7 + $0x28] sm:$0xff]
        %v447 = vld [vmem:[#allocation7 + $0x30] sm:$0xff]
        %v448 = vld [vmem:[#allocation7 + $0x38] sm:$0xff]
        %v449 = vld [vmem:[#allocation7 + $0x40] sm:$0xff]
        %v450 = vld [vmem:[#allocation7 + $0x48] sm:$0xff]
        %v451 = vld [vmem:[#allocation7 + $0x50] sm:$0xff]
        %v452 = vld [vmem:[#allocation7 + $0x58] sm:$0xff]
        %v453 = vld [vmem:[#allocation7 + $0x60] sm:$0xff]
        %v454 = vld [vmem:[#allocation7 + $0x68] sm:$0xff]
        %v455 = vld [vmem:[#allocation7 + $0x70] sm:$0xff]
        %v456 = vld [vmem:[#allocation7 + $0x78] sm:$0xff]
        %v457 = vld [vmem:[%s4] sm:$0x1]
        %v459 = vlaneseq
        %v460 = vshrl.u32 %v459, 7
        %v461 = vsub.s32 0, %v460
        %v462 = vrot.slane %v457, %v461
        %464 = vmatprep.subr.mxu0 0.0
        %465 = vmatpush1.msra.mxu0 %v456
        %466 = vmatprep.subr.mxu0 0.0
        %467 = vmatpush1.msra.mxu0 %v455
        %468 = vmatprep.subr.mxu0 0.0
        %469 = vmatpush1.msra.mxu0 %v454
        %470 = vmatprep.subr.mxu0 0.0
        %471 = vmatpush1.msra.mxu0 %v453
        %472 = vmatprep.subr.mxu0 0.0
        %473 = vmatpush1.msra.mxu0 %v452
        %474 = vmatprep.subr.mxu0 0.0
        %475 = vmatpush1.msra.mxu0 %v451
        %476 = vmatprep.subr.mxu0 0.0
        %477 = vmatpush1.msra.mxu0 %v450
        %478 = vmatprep.subr.mxu0 0.0
        %479 = vmatpush1.msra.mxu0 %v449
        %480 = vmatprep.subr.mxu0 0.0
        %481 = vmatpush1.msra.mxu0 %v448
        %482 = vmatprep.subr.mxu0 0.0
        %483 = vmatpush1.msra.mxu0 %v447
        %484 = vmatprep.subr.mxu0 0.0
        %485 = vmatpush1.msra.mxu0 %v446
        %486 = vmatprep.subr.mxu0 0.0
        %487 = vmatpush1.msra.mxu0 %v445
        %488 = vmatprep.subr.mxu0 0.0
        %489 = vmatpush1.msra.mxu0 %v444
        %490 = vmatprep.subr.mxu0 0.0
        %491 = vmatpush1.msra.mxu0 %v443
        %492 = vmatprep.subr.mxu0 0.0
        %493 = vmatpush1.msra.mxu0 %v442
        %494 = vmatprep.subr.mxu0 0.0
        %495 = vmatpush1.msra.mxu0 %v441
        %496 = vmatprep.subr.mxu0 0.0
        %497 = vmatpush2.msra.mxu0 0.0
        %498 = vmatprep.subr.mxu0 0.0
        %499 = vmatpush2.msra.mxu0 0.0
        %500 = vmatprep.subr.mxu0 0.0
        %501 = vmatpush2.msra.mxu0 0.0
        %502 = vmatprep.subr.mxu0 0.0
        %503 = vmatpush2.msra.mxu0 0.0
        %504 = vmatprep.subr.mxu0 0.0
        %505 = vmatpush2.msra.mxu0 0.0
        %506 = vmatprep.subr.mxu0 0.0
        %507 = vmatpush2.msra.mxu0 0.0
        %508 = vmatprep.subr.mxu0 0.0
        %509 = vmatpush2.msra.mxu0 0.0
        %510 = vmatprep.subr.mxu0 0.0
        %511 = vmatpush2.msra.mxu0 0.0
        %512 = vmatprep.subr.mxu0 0.0
        %513 = vmatpush2.msra.mxu0 0.0
        %514 = vmatprep.subr.mxu0 0.0
        %515 = vmatpush2.msra.mxu0 0.0
        %516 = vmatprep.subr.mxu0 0.0
        %517 = vmatpush2.msra.mxu0 0.0
        %518 = vmatprep.subr.mxu0 0.0
        %519 = vmatpush2.msra.mxu0 0.0
        %520 = vmatprep.subr.mxu0 0.0
        %521 = vmatpush2.msra.mxu0 0.0
        %522 = vmatprep.subr.mxu0 0.0
        %523 = vmatpush2.msra.mxu0 0.0
        %524 = vmatprep.subr.mxu0 0.0
        %525 = vmatpush2.msra.mxu0 0.0
        %526 = vmatprep.subr.mxu0 0.0
        %527 = vmatpush2.msra.mxu0 0.0
        %528 = vmatprep.mubr.f32.mxu0 0.0
        %529 = vmatmul.mubr.f32.gmra.mxu0 %v440
        %v530 = vpop.f32.mrf.mxu0
        %v531 = vadd.f32 %v462, %v530
        %v532 = vpop.f32.mrf.mxu0
        %533 = vdwg.mxu0
        %v534 = vld [vmem:[#allocation8] sm:$0xff]
        %v535 = vld [vmem:[#allocation8 + $0x8] sm:$0xff]
        %v536 = vld [vmem:[#allocation8 + $0x10] sm:$0xff]
        %v537 = vld [vmem:[#allocation8 + $0x18] sm:$0xff]
        %v538 = vld [vmem:[#allocation8 + $0x20] sm:$0xff]
        %v539 = vld [vmem:[#allocation8 + $0x28] sm:$0xff]
        %v540 = vld [vmem:[#allocation8 + $0x30] sm:$0xff]
        %v541 = vld [vmem:[#allocation8 + $0x38] sm:$0xff]
        %v542 = vld [vmem:[#allocation8 + $0x40] sm:$0xff]
        %v543 = vld [vmem:[#allocation8 + $0x48] sm:$0xff]
        %v544 = vld [vmem:[#allocation8 + $0x50] sm:$0xff]
        %v545 = vld [vmem:[#allocation8 + $0x58] sm:$0xff]
        %v546 = vld [vmem:[#allocation8 + $0x60] sm:$0xff]
        %v547 = vld [vmem:[#allocation8 + $0x68] sm:$0xff]
        %v548 = vld [vmem:[#allocation8 + $0x70] sm:$0xff]
        %v549 = vld [vmem:[#allocation8 + $0x78] sm:$0xff]
        %550 = vmatprep.subr.mxu0 0.0
        %551 = vmatpush1.msra.mxu0 %v549
        %552 = vmatprep.subr.mxu0 0.0
        %553 = vmatpush1.msra.mxu0 %v548
        %554 = vmatprep.subr.mxu0 0.0
        %555 = vmatpush1.msra.mxu0 %v547
        %556 = vmatprep.subr.mxu0 0.0
        %557 = vmatpush1.msra.mxu0 %v546
        %558 = vmatprep.subr.mxu0 0.0
        %559 = vmatpush1.msra.mxu0 %v545
        %560 = vmatprep.subr.mxu0 0.0
        %561 = vmatpush1.msra.mxu0 %v544
        %562 = vmatprep.subr.mxu0 0.0
        %563 = vmatpush1.msra.mxu0 %v543
        %564 = vmatprep.subr.mxu0 0.0
        %565 = vmatpush1.msra.mxu0 %v542
        %566 = vmatprep.subr.mxu0 0.0
        %567 = vmatpush1.msra.mxu0 %v541
        %568 = vmatprep.subr.mxu0 0.0
        %569 = vmatpush1.msra.mxu0 %v540
        %570 = vmatprep.subr.mxu0 0.0
        %571 = vmatpush1.msra.mxu0 %v539
        %572 = vmatprep.subr.mxu0 0.0
        %573 = vmatpush1.msra.mxu0 %v538
        %574 = vmatprep.subr.mxu0 0.0
        %575 = vmatpush1.msra.mxu0 %v537
        %576 = vmatprep.subr.mxu0 0.0
        %577 = vmatpush1.msra.mxu0 %v536
        %578 = vmatprep.subr.mxu0 0.0
        %579 = vmatpush1.msra.mxu0 %v535
        %580 = vmatprep.subr.mxu0 0.0
        %581 = vmatpush1.msra.mxu0 %v534
        %582 = vmatprep.subr.mxu0 0.0
        %583 = vmatpush2.msra.mxu0 0.0
        %584 = vmatprep.subr.mxu0 0.0
        %585 = vmatpush2.msra.mxu0 0.0
        %586 = vmatprep.subr.mxu0 0.0
        %587 = vmatpush2.msra.mxu0 0.0
        %588 = vmatprep.subr.mxu0 0.0
        %589 = vmatpush2.msra.mxu0 0.0
        %590 = vmatprep.subr.mxu0 0.0
        %591 = vmatpush2.msra.mxu0 0.0
        %592 = vmatprep.subr.mxu0 0.0
        %593 = vmatpush2.msra.mxu0 0.0
        %594 = vmatprep.subr.mxu0 0.0
        %595 = vmatpush2.msra.mxu0 0.0
        %596 = vmatprep.subr.mxu0 0.0
        %597 = vmatpush2.msra.mxu0 0.0
        %598 = vmatprep.subr.mxu0 0.0
        %599 = vmatpush2.msra.mxu0 0.0
        %600 = vmatprep.subr.mxu0 0.0
        %601 = vmatpush2.msra.mxu0 0.0
        %602 = vmatprep.subr.mxu0 0.0
        %603 = vmatpush2.msra.mxu0 0.0
        %604 = vmatprep.subr.mxu0 0.0
        %605 = vmatpush2.msra.mxu0 0.0
        %606 = vmatprep.subr.mxu0 0.0
        %607 = vmatpush2.msra.mxu0 0.0
        %608 = vmatprep.subr.mxu0 0.0
        %609 = vmatpush2.msra.mxu0 0.0
        %610 = vmatprep.subr.mxu0 0.0
        %611 = vmatpush2.msra.mxu0 0.0
        %612 = vmatprep.subr.mxu0 0.0
        %613 = vmatpush2.msra.mxu0 0.0
        %614 = vmatprep.mubr.f32.mxu0 0.0
        %615 = vmatmul.mubr.f32.gmra.mxu0 %v376
        %v616 = vpop.f32.mrf.mxu0
        %v617 = vadd.f32 0.0, %v616
        %v618 = vpop.f32.mrf.mxu0
        %619 = vmatprep.mubr.f32.mxu0 0.0
        %620 = vmatmul.mubr.f32.gmra.mxu0 %v377
        %v621 = vpop.f32.mrf.mxu0
        %v622 = vadd.f32 0.0, %v621
        %v623 = vpop.f32.mrf.mxu0
        %624 = vmatprep.mubr.f32.mxu0 0.0
        %625 = vmatmul.mubr.f32.gmra.mxu0 %v378
        %v626 = vpop.f32.mrf.mxu0
        %v627 = vadd.f32 0.0, %v626
        %v628 = vpop.f32.mrf.mxu0
        %629 = vmatprep.mubr.f32.mxu0 0.0
        %630 = vmatmul.mubr.f32.gmra.mxu0 %v379
        %v631 = vpop.f32.mrf.mxu0
        %v632 = vadd.f32 0.0, %v631
        %v633 = vpop.f32.mrf.mxu0
        %634 = vmatprep.mubr.f32.mxu0 0.0
        %635 = vmatmul.mubr.f32.gmra.mxu0 %v380
        %v636 = vpop.f32.mrf.mxu0
        %v637 = vadd.f32 0.0, %v636
        %v638 = vpop.f32.mrf.mxu0
        %639 = vmatprep.mubr.f32.mxu0 0.0
        %640 = vmatmul.mubr.f32.gmra.mxu0 %v381
        %v641 = vpop.f32.mrf.mxu0
        %v642 = vadd.f32 0.0, %v641
        %v643 = vpop.f32.mrf.mxu0
        %644 = vmatprep.mubr.f32.mxu0 0.0
        %645 = vmatmul.mubr.f32.gmra.mxu0 %v382
        %v646 = vpop.f32.mrf.mxu0
        %v647 = vadd.f32 0.0, %v646
        %v648 = vpop.f32.mrf.mxu0
        %649 = vmatprep.mubr.f32.mxu0 0.0
        %650 = vmatmul.mubr.f32.gmra.mxu0 %v383
        %v651 = vpop.f32.mrf.mxu0
        %v652 = vadd.f32 0.0, %v651
        %v653 = vpop.f32.mrf.mxu0
        %654 = vmatprep.mubr.f32.mxu0 0.0
        %655 = vmatmul.mubr.f32.gmra.mxu0 %v384
        %v656 = vpop.f32.mrf.mxu0
        %v657 = vadd.f32 0.0, %v656
        %v658 = vpop.f32.mrf.mxu0
        %659 = vmatprep.mubr.f32.mxu0 0.0
        %660 = vmatmul.mubr.f32.gmra.mxu0 %v385
        %v661 = vpop.f32.mrf.mxu0
        %v662 = vadd.f32 0.0, %v661
        %v663 = vpop.f32.mrf.mxu0
        %664 = vmatprep.mubr.f32.mxu0 0.0
        %665 = vmatmul.mubr.f32.gmra.mxu0 %v386
        %v666 = vpop.f32.mrf.mxu0
        %v667 = vadd.f32 0.0, %v666
        %v668 = vpop.f32.mrf.mxu0
        %669 = vmatprep.mubr.f32.mxu0 0.0
        %670 = vmatmul.mubr.f32.gmra.mxu0 %v387
        %v671 = vpop.f32.mrf.mxu0
        %v672 = vadd.f32 0.0, %v671
        %v673 = vpop.f32.mrf.mxu0
        %674 = vmatprep.mubr.f32.mxu0 0.0
        %675 = vmatmul.mubr.f32.gmra.mxu0 %v388
        %v676 = vpop.f32.mrf.mxu0
        %v677 = vadd.f32 0.0, %v676
        %v678 = vpop.f32.mrf.mxu0
        %679 = vmatprep.mubr.f32.mxu0 0.0
        %680 = vmatmul.mubr.f32.gmra.mxu0 %v389
        %v681 = vpop.f32.mrf.mxu0
        %v682 = vadd.f32 0.0, %v681
        %v683 = vpop.f32.mrf.mxu0
        %684 = vmatprep.mubr.f32.mxu0 0.0
        %685 = vmatmul.mubr.f32.gmra.mxu0 %v390
        %v686 = vpop.f32.mrf.mxu0
        %v687 = vadd.f32 0.0, %v686
        %v688 = vpop.f32.mrf.mxu0
        %689 = vmatprep.mubr.f32.mxu0 0.0
        %690 = vmatmul.mubr.f32.gmra.mxu0 %v391
        %v691 = vpop.f32.mrf.mxu0
        %v692 = vadd.f32 0.0, %v691
        %v693 = vpop.f32.mrf.mxu0
        %694 = vmatprep.mubr.f32.mxu0 0.0
        %695 = vmatmul.mubr.f32.gmra.mxu0 %v392
        %v696 = vpop.f32.mrf.mxu0
        %v697 = vadd.f32 0.0, %v696
        %v698 = vpop.f32.mrf.mxu0
        %699 = vmatprep.mubr.f32.mxu0 0.0
        %700 = vmatmul.mubr.f32.gmra.mxu0 %v393
        %v701 = vpop.f32.mrf.mxu0
        %v702 = vadd.f32 0.0, %v701
        %v703 = vpop.f32.mrf.mxu0
        %704 = vmatprep.mubr.f32.mxu0 0.0
        %705 = vmatmul.mubr.f32.gmra.mxu0 %v394
        %v706 = vpop.f32.mrf.mxu0
        %v707 = vadd.f32 0.0, %v706
        %v708 = vpop.f32.mrf.mxu0
        %709 = vmatprep.mubr.f32.mxu0 0.0
        %710 = vmatmul.mubr.f32.gmra.mxu0 %v395
        %v711 = vpop.f32.mrf.mxu0
        %v712 = vadd.f32 0.0, %v711
        %v713 = vpop.f32.mrf.mxu0
        %714 = vmatprep.mubr.f32.mxu0 0.0
        %715 = vmatmul.mubr.f32.gmra.mxu0 %v396
        %v716 = vpop.f32.mrf.mxu0
        %v717 = vadd.f32 0.0, %v716
        %v718 = vpop.f32.mrf.mxu0
        %719 = vmatprep.mubr.f32.mxu0 0.0
        %720 = vmatmul.mubr.f32.gmra.mxu0 %v397
        %v721 = vpop.f32.mrf.mxu0
        %v722 = vadd.f32 0.0, %v721
        %v723 = vpop.f32.mrf.mxu0
        %724 = vmatprep.mubr.f32.mxu0 0.0
        %725 = vmatmul.mubr.f32.gmra.mxu0 %v398
        %v726 = vpop.f32.mrf.mxu0
        %v727 = vadd.f32 0.0, %v726
        %v728 = vpop.f32.mrf.mxu0
        %729 = vmatprep.mubr.f32.mxu0 0.0
        %730 = vmatmul.mubr.f32.gmra.mxu0 %v399
        %v731 = vpop.f32.mrf.mxu0
        %v732 = vadd.f32 0.0, %v731
        %v733 = vpop.f32.mrf.mxu0
        %734 = vmatprep.mubr.f32.mxu0 0.0
        %735 = vmatmul.mubr.f32.gmra.mxu0 %v400
        %v736 = vpop.f32.mrf.mxu0
        %v737 = vadd.f32 0.0, %v736
        %v738 = vpop.f32.mrf.mxu0
        %739 = vmatprep.mubr.f32.mxu0 0.0
        %740 = vmatmul.mubr.f32.gmra.mxu0 %v401
        %v741 = vpop.f32.mrf.mxu0
        %v742 = vadd.f32 0.0, %v741
        %v743 = vpop.f32.mrf.mxu0
        %744 = vmatprep.mubr.f32.mxu0 0.0
        %745 = vmatmul.mubr.f32.gmra.mxu0 %v402
        %v746 = vpop.f32.mrf.mxu0
        %v747 = vadd.f32 0.0, %v746
        %v748 = vpop.f32.mrf.mxu0
        %749 = vmatprep.mubr.f32.mxu0 0.0
        %750 = vmatmul.mubr.f32.gmra.mxu0 %v403
        %v751 = vpop.f32.mrf.mxu0
        %v752 = vadd.f32 0.0, %v751
        %v753 = vpop.f32.mrf.mxu0
        %754 = vmatprep.mubr.f32.mxu0 0.0
        %755 = vmatmul.mubr.f32.gmra.mxu0 %v404
        %v756 = vpop.f32.mrf.mxu0
        %v757 = vadd.f32 0.0, %v756
        %v758 = vpop.f32.mrf.mxu0
        %759 = vmatprep.mubr.f32.mxu0 0.0
        %760 = vmatmul.mubr.f32.gmra.mxu0 %v405
        %v761 = vpop.f32.mrf.mxu0
        %v762 = vadd.f32 0.0, %v761
        %v763 = vpop.f32.mrf.mxu0
        %764 = vmatprep.mubr.f32.mxu0 0.0
        %765 = vmatmul.mubr.f32.gmra.mxu0 %v406
        %v766 = vpop.f32.mrf.mxu0
        %v767 = vadd.f32 0.0, %v766
        %v768 = vpop.f32.mrf.mxu0
        %769 = vmatprep.mubr.f32.mxu0 0.0
        %770 = vmatmul.mubr.f32.gmra.mxu0 %v407
        %v771 = vpop.f32.mrf.mxu0
        %v772 = vadd.f32 0.0, %v771
        %v773 = vpop.f32.mrf.mxu0
        %774 = vmatprep.mubr.f32.mxu0 0.0
        %775 = vmatmul.mubr.f32.gmra.mxu0 %v408
        %v776 = vpop.f32.mrf.mxu0
        %v777 = vadd.f32 0.0, %v776
        %v778 = vpop.f32.mrf.mxu0
        %779 = vmatprep.mubr.f32.mxu0 0.0
        %780 = vmatmul.mubr.f32.gmra.mxu0 %v409
        %v781 = vpop.f32.mrf.mxu0
        %v782 = vadd.f32 0.0, %v781
        %v783 = vpop.f32.mrf.mxu0
        %784 = vmatprep.mubr.f32.mxu0 0.0
        %785 = vmatmul.mubr.f32.gmra.mxu0 %v410
        %v786 = vpop.f32.mrf.mxu0
        %v787 = vadd.f32 0.0, %v786
        %v788 = vpop.f32.mrf.mxu0
        %789 = vmatprep.mubr.f32.mxu0 0.0
        %790 = vmatmul.mubr.f32.gmra.mxu0 %v411
        %v791 = vpop.f32.mrf.mxu0
        %v792 = vadd.f32 0.0, %v791
        %v793 = vpop.f32.mrf.mxu0
        %794 = vmatprep.mubr.f32.mxu0 0.0
        %795 = vmatmul.mubr.f32.gmra.mxu0 %v412
        %v796 = vpop.f32.mrf.mxu0
        %v797 = vadd.f32 0.0, %v796
        %v798 = vpop.f32.mrf.mxu0
        %799 = vmatprep.mubr.f32.mxu0 0.0
        %800 = vmatmul.mubr.f32.gmra.mxu0 %v413
        %v801 = vpop.f32.mrf.mxu0
        %v802 = vadd.f32 0.0, %v801
        %v803 = vpop.f32.mrf.mxu0
        %804 = vmatprep.mubr.f32.mxu0 0.0
        %805 = vmatmul.mubr.f32.gmra.mxu0 %v414
        %v806 = vpop.f32.mrf.mxu0
        %v807 = vadd.f32 0.0, %v806
        %v808 = vpop.f32.mrf.mxu0
        %809 = vmatprep.mubr.f32.mxu0 0.0
        %810 = vmatmul.mubr.f32.gmra.mxu0 %v415
        %v811 = vpop.f32.mrf.mxu0
        %v812 = vadd.f32 0.0, %v811
        %v813 = vpop.f32.mrf.mxu0
        %814 = vmatprep.mubr.f32.mxu0 0.0
        %815 = vmatmul.mubr.f32.gmra.mxu0 %v416
        %v816 = vpop.f32.mrf.mxu0
        %v817 = vadd.f32 0.0, %v816
        %v818 = vpop.f32.mrf.mxu0
        %819 = vmatprep.mubr.f32.mxu0 0.0
        %820 = vmatmul.mubr.f32.gmra.mxu0 %v417
        %v821 = vpop.f32.mrf.mxu0
        %v822 = vadd.f32 0.0, %v821
        %v823 = vpop.f32.mrf.mxu0
        %824 = vmatprep.mubr.f32.mxu0 0.0
        %825 = vmatmul.mubr.f32.gmra.mxu0 %v418
        %v826 = vpop.f32.mrf.mxu0
        %v827 = vadd.f32 0.0, %v826
        %v828 = vpop.f32.mrf.mxu0
        %829 = vmatprep.mubr.f32.mxu0 0.0
        %830 = vmatmul.mubr.f32.gmra.mxu0 %v419
        %v831 = vpop.f32.mrf.mxu0
        %v832 = vadd.f32 0.0, %v831
        %v833 = vpop.f32.mrf.mxu0
        %834 = vmatprep.mubr.f32.mxu0 0.0
        %835 = vmatmul.mubr.f32.gmra.mxu0 %v420
        %v836 = vpop.f32.mrf.mxu0
        %v837 = vadd.f32 0.0, %v836
        %v838 = vpop.f32.mrf.mxu0
        %839 = vmatprep.mubr.f32.mxu0 0.0
        %840 = vmatmul.mubr.f32.gmra.mxu0 %v421
        %v841 = vpop.f32.mrf.mxu0
        %v842 = vadd.f32 0.0, %v841
        %v843 = vpop.f32.mrf.mxu0
        %844 = vmatprep.mubr.f32.mxu0 0.0
        %845 = vmatmul.mubr.f32.gmra.mxu0 %v422
        %v846 = vpop.f32.mrf.mxu0
        %v847 = vadd.f32 0.0, %v846
        %v848 = vpop.f32.mrf.mxu0
        %849 = vmatprep.mubr.f32.mxu0 0.0
        %850 = vmatmul.mubr.f32.gmra.mxu0 %v423
        %v851 = vpop.f32.mrf.mxu0
        %v852 = vadd.f32 0.0, %v851
        %v853 = vpop.f32.mrf.mxu0
        %854 = vmatprep.mubr.f32.mxu0 0.0
        %855 = vmatmul.mubr.f32.gmra.mxu0 %v424
        %v856 = vpop.f32.mrf.mxu0
        %v857 = vadd.f32 0.0, %v856
        %v858 = vpop.f32.mrf.mxu0
        %859 = vmatprep.mubr.f32.mxu0 0.0
        %860 = vmatmul.mubr.f32.gmra.mxu0 %v425
        %v861 = vpop.f32.mrf.mxu0
        %v862 = vadd.f32 0.0, %v861
        %v863 = vpop.f32.mrf.mxu0
        %864 = vmatprep.mubr.f32.mxu0 0.0
        %865 = vmatmul.mubr.f32.gmra.mxu0 %v426
        %v866 = vpop.f32.mrf.mxu0
        %v867 = vadd.f32 0.0, %v866
        %v868 = vpop.f32.mrf.mxu0
        %869 = vmatprep.mubr.f32.mxu0 0.0
        %870 = vmatmul.mubr.f32.gmra.mxu0 %v427
        %v871 = vpop.f32.mrf.mxu0
        %v872 = vadd.f32 0.0, %v871
        %v873 = vpop.f32.mrf.mxu0
        %874 = vmatprep.mubr.f32.mxu0 0.0
        %875 = vmatmul.mubr.f32.gmra.mxu0 %v428
        %v876 = vpop.f32.mrf.mxu0
        %v877 = vadd.f32 0.0, %v876
        %v878 = vpop.f32.mrf.mxu0
        %879 = vmatprep.mubr.f32.mxu0 0.0
        %880 = vmatmul.mubr.f32.gmra.mxu0 %v429
        %v881 = vpop.f32.mrf.mxu0
        %v882 = vadd.f32 0.0, %v881
        %v883 = vpop.f32.mrf.mxu0
        %884 = vmatprep.mubr.f32.mxu0 0.0
        %885 = vmatmul.mubr.f32.gmra.mxu0 %v430
        %v886 = vpop.f32.mrf.mxu0
        %v887 = vadd.f32 0.0, %v886
        %v888 = vpop.f32.mrf.mxu0
        %889 = vmatprep.mubr.f32.mxu0 0.0
        %890 = vmatmul.mubr.f32.gmra.mxu0 %v431
        %v891 = vpop.f32.mrf.mxu0
        %v892 = vadd.f32 0.0, %v891
        %v893 = vpop.f32.mrf.mxu0
        %894 = vmatprep.mubr.f32.mxu0 0.0
        %895 = vmatmul.mubr.f32.gmra.mxu0 %v432
        %v896 = vpop.f32.mrf.mxu0
        %v897 = vadd.f32 0.0, %v896
        %v898 = vpop.f32.mrf.mxu0
        %899 = vmatprep.mubr.f32.mxu0 0.0
        %900 = vmatmul.mubr.f32.gmra.mxu0 %v433
        %v901 = vpop.f32.mrf.mxu0
        %v902 = vadd.f32 0.0, %v901
        %v903 = vpop.f32.mrf.mxu0
        %904 = vmatprep.mubr.f32.mxu0 0.0
        %905 = vmatmul.mubr.f32.gmra.mxu0 %v434
        %v906 = vpop.f32.mrf.mxu0
        %v907 = vadd.f32 0.0, %v906
        %v908 = vpop.f32.mrf.mxu0
        %909 = vmatprep.mubr.f32.mxu0 0.0
        %910 = vmatmul.mubr.f32.gmra.mxu0 %v435
        %v911 = vpop.f32.mrf.mxu0
        %v912 = vadd.f32 0.0, %v911
        %v913 = vpop.f32.mrf.mxu0
        %914 = vmatprep.mubr.f32.mxu0 0.0
        %915 = vmatmul.mubr.f32.gmra.mxu0 %v436
        %v916 = vpop.f32.mrf.mxu0
        %v917 = vadd.f32 0.0, %v916
        %v918 = vpop.f32.mrf.mxu0
        %919 = vmatprep.mubr.f32.mxu0 0.0
        %920 = vmatmul.mubr.f32.gmra.mxu0 %v437
        %v921 = vpop.f32.mrf.mxu0
        %v922 = vadd.f32 0.0, %v921
        %v923 = vpop.f32.mrf.mxu0
        %924 = vmatprep.mubr.f32.mxu0 0.0
        %925 = vmatmul.mubr.f32.gmra.mxu0 %v438
        %v926 = vpop.f32.mrf.mxu0
        %v927 = vadd.f32 0.0, %v926
        %v928 = vpop.f32.mrf.mxu0
        %929 = vmatprep.mubr.f32.mxu0 0.0
        %930 = vmatmul.mubr.f32.gmra.mxu0 %v439
        %v931 = vpop.f32.mrf.mxu0
        %v932 = vadd.f32 0.0, %v931
        %v933 = vpop.f32.mrf.mxu0
        %934 = vdwg.mxu0
        %v936 = vcombine.high %v531, %v531
        %v938 = vunpack.c.l.s4 1966171168
        %v939 = vunpack.c.0.s8 %v938
        %v940 = vlaneseq
        %v941 = vshrl.u32 %v940, 7
        %v942 = vsub.s32 %v939, %v941
        %v943 = vrot.slane %v531, %v942
        %v945 = vunpack.c.l.s4 1966171168
        %v946 = vunpack.c.0.s8 %v945
        %v947 = vlaneseq
        %v948 = vshrl.u32 %v947, 7
        %v949 = vsub.s32 %v946, %v948
        %v950 = vrot.slane %v936, %v949
        %v951 = vcombine.high %v943, %v943
        %v952 = vcombine.high %v950, %v950
        %v954 = vunpack.c.l.s4 1966171168
        %v955 = vunpack.c.0.s8 %v954
        %v956 = vlaneseq
        %v957 = vshrl.u32 %v956, 7
        %v958 = vsub.s32 %v955, %v957
        %v959 = vrot.slane %v943, %v958
        %v961 = vunpack.c.l.s4 1966171168
        %v962 = vunpack.c.0.s8 %v961
        %v963 = vlaneseq
        %v964 = vshrl.u32 %v963, 7
        %v965 = vsub.s32 %v962, %v964
        %v966 = vrot.slane %v950, %v965
        %v968 = vunpack.c.l.s4 1966171168
        %v969 = vunpack.c.0.s8 %v968
        %v970 = vlaneseq
        %v971 = vshrl.u32 %v970, 7
        %v972 = vsub.s32 %v969, %v971
        %v973 = vrot.slane %v951, %v972
        %v975 = vunpack.c.l.s4 1966171168
        %v976 = vunpack.c.0.s8 %v975
        %v977 = vlaneseq
        %v978 = vshrl.u32 %v977, 7
        %v979 = vsub.s32 %v976, %v978
        %v980 = vrot.slane %v952, %v979
        %v981 = vcombine.high %v959, %v959
        %v982 = vcombine.high %v966, %v966
        %v983 = vcombine.high %v973, %v973
        %v984 = vcombine.high %v980, %v980
        %v985 = vlaneseq
        %v986 = vshrl.u32 %v985, 7
        %v987 = vsub.s32 0, %v986
        %v988 = vrot.slane %v959, %v987
        %v989 = vlaneseq
        %v990 = vshrl.u32 %v989, 7
        %v991 = vsub.s32 0, %v990
        %v992 = vrot.slane %v973, %v991
        %v993 = vlaneseq
        %v994 = vshrl.u32 %v993, 7
        %v995 = vsub.s32 0, %v994
        %v996 = vrot.slane %v981, %v995
        %v997 = vlaneseq
        %v998 = vshrl.u32 %v997, 7
        %v999 = vsub.s32 0, %v998
        %v1000 = vrot.slane %v983, %v999
        %v1001 = vlaneseq
        %v1002 = vshrl.u32 %v1001, 7
        %v1003 = vsub.s32 0, %v1002
        %v1004 = vrot.slane %v966, %v1003
        %v1005 = vlaneseq
        %v1006 = vshrl.u32 %v1005, 7
        %v1007 = vsub.s32 0, %v1006
        %v1008 = vrot.slane %v980, %v1007
        %v1009 = vlaneseq
        %v1010 = vshrl.u32 %v1009, 7
        %v1011 = vsub.s32 0, %v1010
        %v1012 = vrot.slane %v982, %v1011
        %v1013 = vlaneseq
        %v1014 = vshrl.u32 %v1013, 7
        %v1015 = vsub.s32 0, %v1014
        %v1016 = vrot.slane %v984, %v1015
        %v1025 = vadd.f32 %v617, %v988
        %v1026 = vadd.f32 %v622, %v988
        %v1027 = vadd.f32 %v627, %v988
        %v1028 = vadd.f32 %v632, %v988
        %v1029 = vadd.f32 %v637, %v988
        %v1030 = vadd.f32 %v642, %v988
        %v1031 = vadd.f32 %v647, %v988
        %v1032 = vadd.f32 %v652, %v988
        %v1033 = vadd.f32 %v657, %v992
        %v1034 = vadd.f32 %v662, %v992
        %v1035 = vadd.f32 %v667, %v992
        %v1036 = vadd.f32 %v672, %v992
        %v1037 = vadd.f32 %v677, %v992
        %v1038 = vadd.f32 %v682, %v992
        %v1039 = vadd.f32 %v687, %v992
        %v1040 = vadd.f32 %v692, %v992
        %v1041 = vadd.f32 %v697, %v996
        %v1042 = vadd.f32 %v702, %v996
        %v1043 = vadd.f32 %v707, %v996
        %v1044 = vadd.f32 %v712, %v996
        %v1045 = vadd.f32 %v717, %v996
        %v1046 = vadd.f32 %v722, %v996
        %v1047 = vadd.f32 %v727, %v996
        %v1048 = vadd.f32 %v732, %v996
        %v1049 = vadd.f32 %v737, %v1000
        %v1050 = vadd.f32 %v742, %v1000
        %v1051 = vadd.f32 %v747, %v1000
        %v1052 = vadd.f32 %v752, %v1000
        %v1053 = vadd.f32 %v757, %v1000
        %v1054 = vadd.f32 %v762, %v1000
        %v1055 = vadd.f32 %v767, %v1000
        %v1056 = vadd.f32 %v772, %v1000
        %v1057 = vadd.f32 %v777, %v1004
        %v1058 = vadd.f32 %v782, %v1004
        %v1059 = vadd.f32 %v787, %v1004
        %v1060 = vadd.f32 %v792, %v1004
        %v1061 = vadd.f32 %v797, %v1004
        %v1062 = vadd.f32 %v802, %v1004
        %v1063 = vadd.f32 %v807, %v1004
        %v1064 = vadd.f32 %v812, %v1004
        %v1065 = vadd.f32 %v817, %v1008
        %v1066 = vadd.f32 %v822, %v1008
        %v1067 = vadd.f32 %v827, %v1008
        %v1068 = vadd.f32 %v832, %v1008
        %v1069 = vadd.f32 %v837, %v1008
        %v1070 = vadd.f32 %v842, %v1008
        %v1071 = vadd.f32 %v847, %v1008
        %v1072 = vadd.f32 %v852, %v1008
        %v1073 = vadd.f32 %v857, %v1012
        %v1074 = vadd.f32 %v862, %v1012
        %v1075 = vadd.f32 %v867, %v1012
        %v1076 = vadd.f32 %v872, %v1012
        %v1077 = vadd.f32 %v877, %v1012
        %v1078 = vadd.f32 %v882, %v1012
        %v1079 = vadd.f32 %v887, %v1012
        %v1080 = vadd.f32 %v892, %v1012
        %v1081 = vadd.f32 %v897, %v1016
        %v1082 = vadd.f32 %v902, %v1016
        %v1083 = vadd.f32 %v907, %v1016
        %v1084 = vadd.f32 %v912, %v1016
        %v1085 = vadd.f32 %v917, %v1016
        %v1086 = vadd.f32 %v922, %v1016
        %v1087 = vadd.f32 %v927, %v1016
        %v1088 = vadd.f32 %v932, %v1016
        %v1089 = vtanh.pop %v1025
        %v1090 = vtanh.pop %v1026
        %v1091 = vtanh.pop %v1027
        %v1092 = vtanh.pop %v1028
        %v1093 = vtanh.pop %v1029
        %v1094 = vtanh.pop %v1030
        %v1095 = vtanh.pop %v1031
        %v1096 = vtanh.pop %v1032
        %v1097 = vtanh.pop %v1033
        %v1098 = vtanh.pop %v1034
        %v1099 = vtanh.pop %v1035
        %v1100 = vtanh.pop %v1036
        %v1101 = vtanh.pop %v1037
        %v1102 = vtanh.pop %v1038
        %v1103 = vtanh.pop %v1039
        %v1104 = vtanh.pop %v1040
        %v1105 = vtanh.pop %v1041
        %v1106 = vtanh.pop %v1042
        %v1107 = vtanh.pop %v1043
        %v1108 = vtanh.pop %v1044
        %v1109 = vtanh.pop %v1045
        %v1110 = vtanh.pop %v1046
        %v1111 = vtanh.pop %v1047
        %v1112 = vtanh.pop %v1048
        %v1113 = vtanh.pop %v1049
        %v1114 = vtanh.pop %v1050
        %v1115 = vtanh.pop %v1051
        %v1116 = vtanh.pop %v1052
        %v1117 = vtanh.pop %v1053
        %v1118 = vtanh.pop %v1054
        %v1119 = vtanh.pop %v1055
        %v1120 = vtanh.pop %v1056
        %v1121 = vtanh.pop %v1057
        %v1122 = vtanh.pop %v1058
        %v1123 = vtanh.pop %v1059
        %v1124 = vtanh.pop %v1060
        %v1125 = vtanh.pop %v1061
        %v1126 = vtanh.pop %v1062
        %v1127 = vtanh.pop %v1063
        %v1128 = vtanh.pop %v1064
        %v1129 = vtanh.pop %v1065
        %v1130 = vtanh.pop %v1066
        %v1131 = vtanh.pop %v1067
        %v1132 = vtanh.pop %v1068
        %v1133 = vtanh.pop %v1069
        %v1134 = vtanh.pop %v1070
        %v1135 = vtanh.pop %v1071
        %v1136 = vtanh.pop %v1072
        %v1137 = vtanh.pop %v1073
        %v1138 = vtanh.pop %v1074
        %v1139 = vtanh.pop %v1075
        %v1140 = vtanh.pop %v1076
        %v1141 = vtanh.pop %v1077
        %v1142 = vtanh.pop %v1078
        %v1143 = vtanh.pop %v1079
        %v1144 = vtanh.pop %v1080
        %v1145 = vtanh.pop %v1081
        %v1146 = vtanh.pop %v1082
        %v1147 = vtanh.pop %v1083
        %v1148 = vtanh.pop %v1084
        %v1149 = vtanh.pop %v1085
        %v1150 = vtanh.pop %v1086
        %v1151 = vtanh.pop %v1087
        %v1152 = vtanh.pop %v1088
        %v1153 = vld [vmem:[%s5] sm:$0x1]
        %v1155 = vlaneseq
        %v1156 = vshrl.u32 %v1155, 7
        %v1157 = vsub.s32 0, %v1156
        %v1158 = vrot.slane %v1153, %v1157
        %v1160 = vmul.f32 %v1089, %v1158
        %v1161 = vmul.f32 %v1090, %v1158
        %v1162 = vmul.f32 %v1091, %v1158
        %v1163 = vmul.f32 %v1092, %v1158
        %v1164 = vmul.f32 %v1093, %v1158
        %v1165 = vmul.f32 %v1094, %v1158
        %v1166 = vmul.f32 %v1095, %v1158
        %v1167 = vmul.f32 %v1096, %v1158
        %v1168 = vmul.f32 %v1097, %v1158
        %v1169 = vmul.f32 %v1098, %v1158
        %v1170 = vmul.f32 %v1099, %v1158
        %v1171 = vmul.f32 %v1100, %v1158
        %v1172 = vmul.f32 %v1101, %v1158
        %v1173 = vmul.f32 %v1102, %v1158
        %v1174 = vmul.f32 %v1103, %v1158
        %v1175 = vmul.f32 %v1104, %v1158
        %v1176 = vmul.f32 %v1105, %v1158
        %v1177 = vmul.f32 %v1106, %v1158
        %v1178 = vmul.f32 %v1107, %v1158
        %v1179 = vmul.f32 %v1108, %v1158
        %v1180 = vmul.f32 %v1109, %v1158
        %v1181 = vmul.f32 %v1110, %v1158
        %v1182 = vmul.f32 %v1111, %v1158
        %v1183 = vmul.f32 %v1112, %v1158
        %v1184 = vmul.f32 %v1113, %v1158
        %v1185 = vmul.f32 %v1114, %v1158
        %v1186 = vmul.f32 %v1115, %v1158
        %v1187 = vmul.f32 %v1116, %v1158
        %v1188 = vmul.f32 %v1117, %v1158
        %v1189 = vmul.f32 %v1118, %v1158
        %v1190 = vmul.f32 %v1119, %v1158
        %v1191 = vmul.f32 %v1120, %v1158
        %v1192 = vmul.f32 %v1121, %v1158
        %v1193 = vmul.f32 %v1122, %v1158
        %v1194 = vmul.f32 %v1123, %v1158
        %v1195 = vmul.f32 %v1124, %v1158
        %v1196 = vmul.f32 %v1125, %v1158
        %v1197 = vmul.f32 %v1126, %v1158
        %v1198 = vmul.f32 %v1127, %v1158
        %v1199 = vmul.f32 %v1128, %v1158
        %v1200 = vmul.f32 %v1129, %v1158
        %v1201 = vmul.f32 %v1130, %v1158
        %v1202 = vmul.f32 %v1131, %v1158
        %v1203 = vmul.f32 %v1132, %v1158
        %v1204 = vmul.f32 %v1133, %v1158
        %v1205 = vmul.f32 %v1134, %v1158
        %v1206 = vmul.f32 %v1135, %v1158
        %v1207 = vmul.f32 %v1136, %v1158
        %v1208 = vmul.f32 %v1137, %v1158
        %v1209 = vmul.f32 %v1138, %v1158
        %v1210 = vmul.f32 %v1139, %v1158
        %v1211 = vmul.f32 %v1140, %v1158
        %v1212 = vmul.f32 %v1141, %v1158
        %v1213 = vmul.f32 %v1142, %v1158
        %v1214 = vmul.f32 %v1143, %v1158
        %v1215 = vmul.f32 %v1144, %v1158
        %v1216 = vmul.f32 %v1145, %v1158
        %v1217 = vmul.f32 %v1146, %v1158
        %v1218 = vmul.f32 %v1147, %v1158
        %v1219 = vmul.f32 %v1148, %v1158
        %v1220 = vmul.f32 %v1149, %v1158
        %v1221 = vmul.f32 %v1150, %v1158
        %v1222 = vmul.f32 %v1151, %v1158
        %v1223 = vmul.f32 %v1152, %v1158
        %1224 = vadd.xlane.f32.xlu0 %v1160
        %v1225 = vpop.xlane.xlu0 %1224
        %1226 = vadd.xlane.f32.xlu0 %v1161
        %v1227 = vpop.xlane.xlu0 %1226
        %1228 = vadd.xlane.f32.xlu0 %v1162
        %v1229 = vpop.xlane.xlu0 %1228
        %1230 = vadd.xlane.f32.xlu0 %v1163
        %v1231 = vpop.xlane.xlu0 %1230
        %1232 = vadd.xlane.f32.xlu0 %v1164
        %v1233 = vpop.xlane.xlu0 %1232
        %1234 = vadd.xlane.f32.xlu0 %v1165
        %v1235 = vpop.xlane.xlu0 %1234
        %1236 = vadd.xlane.f32.xlu0 %v1166
        %v1237 = vpop.xlane.xlu0 %1236
        %1238 = vadd.xlane.f32.xlu0 %v1167
        %v1239 = vpop.xlane.xlu0 %1238
        %1240 = vadd.xlane.f32.xlu0 %v1168
        %v1241 = vpop.xlane.xlu0 %1240
        %1242 = vadd.xlane.f32.xlu0 %v1169
        %v1243 = vpop.xlane.xlu0 %1242
        %1244 = vadd.xlane.f32.xlu0 %v1170
        %v1245 = vpop.xlane.xlu0 %1244
        %1246 = vadd.xlane.f32.xlu0 %v1171
        %v1247 = vpop.xlane.xlu0 %1246
        %1248 = vadd.xlane.f32.xlu0 %v1172
        %v1249 = vpop.xlane.xlu0 %1248
        %1250 = vadd.xlane.f32.xlu0 %v1173
        %v1251 = vpop.xlane.xlu0 %1250
        %1252 = vadd.xlane.f32.xlu0 %v1174
        %v1253 = vpop.xlane.xlu0 %1252
        %1254 = vadd.xlane.f32.xlu0 %v1175
        %v1255 = vpop.xlane.xlu0 %1254
        %1256 = vadd.xlane.f32.xlu0 %v1176
        %v1257 = vpop.xlane.xlu0 %1256
        %1258 = vadd.xlane.f32.xlu0 %v1177
        %v1259 = vpop.xlane.xlu0 %1258
        %1260 = vadd.xlane.f32.xlu0 %v1178
        %v1261 = vpop.xlane.xlu0 %1260
        %1262 = vadd.xlane.f32.xlu0 %v1179
        %v1263 = vpop.xlane.xlu0 %1262
        %1264 = vadd.xlane.f32.xlu0 %v1180
        %v1265 = vpop.xlane.xlu0 %1264
        %1266 = vadd.xlane.f32.xlu0 %v1181
        %v1267 = vpop.xlane.xlu0 %1266
        %1268 = vadd.xlane.f32.xlu0 %v1182
        %v1269 = vpop.xlane.xlu0 %1268
        %1270 = vadd.xlane.f32.xlu0 %v1183
        %v1271 = vpop.xlane.xlu0 %1270
        %1272 = vadd.xlane.f32.xlu0 %v1184
        %v1273 = vpop.xlane.xlu0 %1272
        %1274 = vadd.xlane.f32.xlu0 %v1185
        %v1275 = vpop.xlane.xlu0 %1274
        %1276 = vadd.xlane.f32.xlu0 %v1186
        %v1277 = vpop.xlane.xlu0 %1276
        %1278 = vadd.xlane.f32.xlu0 %v1187
        %v1279 = vpop.xlane.xlu0 %1278
        %1280 = vadd.xlane.f32.xlu0 %v1188
        %v1281 = vpop.xlane.xlu0 %1280
        %1282 = vadd.xlane.f32.xlu0 %v1189
        %v1283 = vpop.xlane.xlu0 %1282
        %1284 = vadd.xlane.f32.xlu0 %v1190
        %v1285 = vpop.xlane.xlu0 %1284
        %1286 = vadd.xlane.f32.xlu0 %v1191
        %v1287 = vpop.xlane.xlu0 %1286
        %1288 = vadd.xlane.f32.xlu0 %v1192
        %v1289 = vpop.xlane.xlu0 %1288
        %1290 = vadd.xlane.f32.xlu0 %v1193
        %v1291 = vpop.xlane.xlu0 %1290
        %1292 = vadd.xlane.f32.xlu0 %v1194
        %v1293 = vpop.xlane.xlu0 %1292
        %1294 = vadd.xlane.f32.xlu0 %v1195
        %v1295 = vpop.xlane.xlu0 %1294
        %1296 = vadd.xlane.f32.xlu0 %v1196
        %v1297 = vpop.xlane.xlu0 %1296
        %1298 = vadd.xlane.f32.xlu0 %v1197
        %v1299 = vpop.xlane.xlu0 %1298
        %1300 = vadd.xlane.f32.xlu0 %v1198
        %v1301 = vpop.xlane.xlu0 %1300
        %1302 = vadd.xlane.f32.xlu0 %v1199
        %v1303 = vpop.xlane.xlu0 %1302
        %1304 = vadd.xlane.f32.xlu0 %v1200
        %v1305 = vpop.xlane.xlu0 %1304
        %1306 = vadd.xlane.f32.xlu0 %v1201
        %v1307 = vpop.xlane.xlu0 %1306
        %1308 = vadd.xlane.f32.xlu0 %v1202
        %v1309 = vpop.xlane.xlu0 %1308
        %1310 = vadd.xlane.f32.xlu0 %v1203
        %v1311 = vpop.xlane.xlu0 %1310
        %1312 = vadd.xlane.f32.xlu0 %v1204
        %v1313 = vpop.xlane.xlu0 %1312
        %1314 = vadd.xlane.f32.xlu0 %v1205
        %v1315 = vpop.xlane.xlu0 %1314
        %1316 = vadd.xlane.f32.xlu0 %v1206
        %v1317 = vpop.xlane.xlu0 %1316
        %1318 = vadd.xlane.f32.xlu0 %v1207
        %v1319 = vpop.xlane.xlu0 %1318
        %1320 = vadd.xlane.f32.xlu0 %v1208
        %v1321 = vpop.xlane.xlu0 %1320
        %1322 = vadd.xlane.f32.xlu0 %v1209
        %v1323 = vpop.xlane.xlu0 %1322
        %1324 = vadd.xlane.f32.xlu0 %v1210
        %v1325 = vpop.xlane.xlu0 %1324
        %1326 = vadd.xlane.f32.xlu0 %v1211
        %v1327 = vpop.xlane.xlu0 %1326
        %1328 = vadd.xlane.f32.xlu0 %v1212
        %v1329 = vpop.xlane.xlu0 %1328
        %1330 = vadd.xlane.f32.xlu0 %v1213
        %v1331 = vpop.xlane.xlu0 %1330
        %1332 = vadd.xlane.f32.xlu0 %v1214
        %v1333 = vpop.xlane.xlu0 %1332
        %1334 = vadd.xlane.f32.xlu0 %v1215
        %v1335 = vpop.xlane.xlu0 %1334
        %1336 = vadd.xlane.f32.xlu0 %v1216
        %v1337 = vpop.xlane.xlu0 %1336
        %1338 = vadd.xlane.f32.xlu0 %v1217
        %v1339 = vpop.xlane.xlu0 %1338
        %1340 = vadd.xlane.f32.xlu0 %v1218
        %v1341 = vpop.xlane.xlu0 %1340
        %1342 = vadd.xlane.f32.xlu0 %v1219
        %v1343 = vpop.xlane.xlu0 %1342
        %1344 = vadd.xlane.f32.xlu0 %v1220
        %v1345 = vpop.xlane.xlu0 %1344
        %1346 = vadd.xlane.f32.xlu0 %v1221
        %v1347 = vpop.xlane.xlu0 %1346
        %1348 = vadd.xlane.f32.xlu0 %v1222
        %v1349 = vpop.xlane.xlu0 %1348
        %1350 = vadd.xlane.f32.xlu0 %v1223
        %v1351 = vpop.xlane.xlu0 %1350
        %v1416 = vlaneseq
        %v1417 = vand.u32 %v1416, 127
        %v1418 = vlaneseq
        %v1419 = vshrl.u32 %v1418, 7
        %v1420 = vsub.s32 %v1417, %v1419
        %v1421 = vrot.slane %v1225, %v1420
        %v1422 = vadd.s32 %v1417, 4294967288
        %v1423 = vlaneseq
        %v1424 = vshrl.u32 %v1423, 7
        %v1425 = vsub.s32 %v1422, %v1424
        %v1426 = vrot.slane %v1227, %v1425
        %vm1427 = vcmask 130112
        %v1428 = vsel %vm1427, %v1426, %v1421
        %v1429 = vadd.s32 %v1417, 4294967280
        %v1430 = vlaneseq
        %v1431 = vshrl.u32 %v1430, 7
        %v1432 = vsub.s32 %v1429, %v1431
        %v1433 = vrot.slane %v1229, %v1432
        %vm1434 = vcmask 195712
        %v1435 = vsel %vm1434, %v1433, %v1428
        %v1436 = vadd.s32 %v1417, 4294967272
        %v1437 = vlaneseq
        %v1438 = vshrl.u32 %v1437, 7
        %v1439 = vsub.s32 %v1436, %v1438
        %v1440 = vrot.slane %v1231, %v1439
        %vm1441 = vcmask 261312
        %v1442 = vsel %vm1441, %v1440, %v1435
        %v1443 = vadd.s32 %v1417, 4294967264
        %v1444 = vlaneseq
        %v1445 = vshrl.u32 %v1444, 7
        %v1446 = vsub.s32 %v1443, %v1445
        %v1447 = vrot.slane %v1233, %v1446
        %vm1448 = vcmask 326912
        %v1449 = vsel %vm1448, %v1447, %v1442
        %v1450 = vadd.s32 %v1417, 4294967256
        %v1451 = vlaneseq
        %v1452 = vshrl.u32 %v1451, 7
        %v1453 = vsub.s32 %v1450, %v1452
        %v1454 = vrot.slane %v1235, %v1453
        %vm1455 = vcmask 392512
        %v1456 = vsel %vm1455, %v1454, %v1449
        %v1457 = vadd.s32 %v1417, 4294967248
        %v1458 = vlaneseq
        %v1459 = vshrl.u32 %v1458, 7
        %v1460 = vsub.s32 %v1457, %v1459
        %v1461 = vrot.slane %v1237, %v1460
        %vm1462 = vcmask 458112
        %v1463 = vsel %vm1462, %v1461, %v1456
        %v1464 = vadd.s32 %v1417, 4294967240
        %v1465 = vlaneseq
        %v1466 = vshrl.u32 %v1465, 7
        %v1467 = vsub.s32 %v1464, %v1466
        %v1468 = vrot.slane %v1239, %v1467
        %vm1469 = vcmask 523712
        %v1470 = vsel %vm1469, %v1468, %v1463
        %v1471 = vlaneseq
        %v1472 = vshrl.u32 %v1471, 7
        %v1473 = vsub.s32 %v1417, %v1472
        %v1474 = vrot.slane %v1241, %v1473
        %v1475 = vlaneseq
        %v1476 = vshrl.u32 %v1475, 7
        %v1477 = vsub.s32 %v1422, %v1476
        %v1478 = vrot.slane %v1243, %v1477
        %v1479 = vsel %vm1427, %v1478, %v1474
        %v1480 = vlaneseq
        %v1481 = vshrl.u32 %v1480, 7
        %v1482 = vsub.s32 %v1429, %v1481
        %v1483 = vrot.slane %v1245, %v1482
        %v1484 = vsel %vm1434, %v1483, %v1479
        %v1485 = vlaneseq
        %v1486 = vshrl.u32 %v1485, 7
        %v1487 = vsub.s32 %v1436, %v1486
        %v1488 = vrot.slane %v1247, %v1487
        %v1489 = vsel %vm1441, %v1488, %v1484
        %v1490 = vlaneseq
        %v1491 = vshrl.u32 %v1490, 7
        %v1492 = vsub.s32 %v1443, %v1491
        %v1493 = vrot.slane %v1249, %v1492
        %v1494 = vsel %vm1448, %v1493, %v1489
        %v1495 = vlaneseq
        %v1496 = vshrl.u32 %v1495, 7
        %v1497 = vsub.s32 %v1450, %v1496
        %v1498 = vrot.slane %v1251, %v1497
        %v1499 = vsel %vm1455, %v1498, %v1494
        %v1500 = vlaneseq
        %v1501 = vshrl.u32 %v1500, 7
        %v1502 = vsub.s32 %v1457, %v1501
        %v1503 = vrot.slane %v1253, %v1502
        %v1504 = vsel %vm1462, %v1503, %v1499
        %v1505 = vlaneseq
        %v1506 = vshrl.u32 %v1505, 7
        %v1507 = vsub.s32 %v1464, %v1506
        %v1508 = vrot.slane %v1255, %v1507
        %v1509 = vsel %vm1469, %v1508, %v1504
        %v1510 = vlaneseq
        %v1511 = vshrl.u32 %v1510, 7
        %v1512 = vsub.s32 %v1417, %v1511
        %v1513 = vrot.slane %v1257, %v1512
        %v1514 = vlaneseq
        %v1515 = vshrl.u32 %v1514, 7
        %v1516 = vsub.s32 %v1422, %v1515
        %v1517 = vrot.slane %v1259, %v1516
        %v1518 = vsel %vm1427, %v1517, %v1513
        %v1519 = vlaneseq
        %v1520 = vshrl.u32 %v1519, 7
        %v1521 = vsub.s32 %v1429, %v1520
        %v1522 = vrot.slane %v1261, %v1521
        %v1523 = vsel %vm1434, %v1522, %v1518
        %v1524 = vlaneseq
        %v1525 = vshrl.u32 %v1524, 7
        %v1526 = vsub.s32 %v1436, %v1525
        %v1527 = vrot.slane %v1263, %v1526
        %v1528 = vsel %vm1441, %v1527, %v1523
        %v1529 = vlaneseq
        %v1530 = vshrl.u32 %v1529, 7
        %v1531 = vsub.s32 %v1443, %v1530
        %v1532 = vrot.slane %v1265, %v1531
        %v1533 = vsel %vm1448, %v1532, %v1528
        %v1534 = vlaneseq
        %v1535 = vshrl.u32 %v1534, 7
        %v1536 = vsub.s32 %v1450, %v1535
        %v1537 = vrot.slane %v1267, %v1536
        %v1538 = vsel %vm1455, %v1537, %v1533
        %v1539 = vlaneseq
        %v1540 = vshrl.u32 %v1539, 7
        %v1541 = vsub.s32 %v1457, %v1540
        %v1542 = vrot.slane %v1269, %v1541
        %v1543 = vsel %vm1462, %v1542, %v1538
        %v1544 = vlaneseq
        %v1545 = vshrl.u32 %v1544, 7
        %v1546 = vsub.s32 %v1464, %v1545
        %v1547 = vrot.slane %v1271, %v1546
        %v1548 = vsel %vm1469, %v1547, %v1543
        %v1549 = vlaneseq
        %v1550 = vshrl.u32 %v1549, 7
        %v1551 = vsub.s32 %v1417, %v1550
        %v1552 = vrot.slane %v1273, %v1551
        %v1553 = vlaneseq
        %v1554 = vshrl.u32 %v1553, 7
        %v1555 = vsub.s32 %v1422, %v1554
        %v1556 = vrot.slane %v1275, %v1555
        %v1557 = vsel %vm1427, %v1556, %v1552
        %v1558 = vlaneseq
        %v1559 = vshrl.u32 %v1558, 7
        %v1560 = vsub.s32 %v1429, %v1559
        %v1561 = vrot.slane %v1277, %v1560
        %v1562 = vsel %vm1434, %v1561, %v1557
        %v1563 = vlaneseq
        %v1564 = vshrl.u32 %v1563, 7
        %v1565 = vsub.s32 %v1436, %v1564
        %v1566 = vrot.slane %v1279, %v1565
        %v1567 = vsel %vm1441, %v1566, %v1562
        %v1568 = vlaneseq
        %v1569 = vshrl.u32 %v1568, 7
        %v1570 = vsub.s32 %v1443, %v1569
        %v1571 = vrot.slane %v1281, %v1570
        %v1572 = vsel %vm1448, %v1571, %v1567
        %v1573 = vlaneseq
        %v1574 = vshrl.u32 %v1573, 7
        %v1575 = vsub.s32 %v1450, %v1574
        %v1576 = vrot.slane %v1283, %v1575
        %v1577 = vsel %vm1455, %v1576, %v1572
        %v1578 = vlaneseq
        %v1579 = vshrl.u32 %v1578, 7
        %v1580 = vsub.s32 %v1457, %v1579
        %v1581 = vrot.slane %v1285, %v1580
        %v1582 = vsel %vm1462, %v1581, %v1577
        %v1583 = vlaneseq
        %v1584 = vshrl.u32 %v1583, 7
        %v1585 = vsub.s32 %v1464, %v1584
        %v1586 = vrot.slane %v1287, %v1585
        %v1587 = vsel %vm1469, %v1586, %v1582
        %v1588 = vlaneseq
        %v1589 = vshrl.u32 %v1588, 7
        %v1590 = vsub.s32 %v1417, %v1589
        %v1591 = vrot.slane %v1289, %v1590
        %v1592 = vlaneseq
        %v1593 = vshrl.u32 %v1592, 7
        %v1594 = vsub.s32 %v1422, %v1593
        %v1595 = vrot.slane %v1291, %v1594
        %v1596 = vsel %vm1427, %v1595, %v1591
        %v1597 = vlaneseq
        %v1598 = vshrl.u32 %v1597, 7
        %v1599 = vsub.s32 %v1429, %v1598
        %v1600 = vrot.slane %v1293, %v1599
        %v1601 = vsel %vm1434, %v1600, %v1596
        %v1602 = vlaneseq
        %v1603 = vshrl.u32 %v1602, 7
        %v1604 = vsub.s32 %v1436, %v1603
        %v1605 = vrot.slane %v1295, %v1604
        %v1606 = vsel %vm1441, %v1605, %v1601
        %v1607 = vlaneseq
        %v1608 = vshrl.u32 %v1607, 7
        %v1609 = vsub.s32 %v1443, %v1608
        %v1610 = vrot.slane %v1297, %v1609
        %v1611 = vsel %vm1448, %v1610, %v1606
        %v1612 = vlaneseq
        %v1613 = vshrl.u32 %v1612, 7
        %v1614 = vsub.s32 %v1450, %v1613
        %v1615 = vrot.slane %v1299, %v1614
        %v1616 = vsel %vm1455, %v1615, %v1611
        %v1617 = vlaneseq
        %v1618 = vshrl.u32 %v1617, 7
        %v1619 = vsub.s32 %v1457, %v1618
        %v1620 = vrot.slane %v1301, %v1619
        %v1621 = vsel %vm1462, %v1620, %v1616
        %v1622 = vlaneseq
        %v1623 = vshrl.u32 %v1622, 7
        %v1624 = vsub.s32 %v1464, %v1623
        %v1625 = vrot.slane %v1303, %v1624
        %v1626 = vsel %vm1469, %v1625, %v1621
        %v1627 = vlaneseq
        %v1628 = vshrl.u32 %v1627, 7
        %v1629 = vsub.s32 %v1417, %v1628
        %v1630 = vrot.slane %v1305, %v1629
        %v1631 = vlaneseq
        %v1632 = vshrl.u32 %v1631, 7
        %v1633 = vsub.s32 %v1422, %v1632
        %v1634 = vrot.slane %v1307, %v1633
        %v1635 = vsel %vm1427, %v1634, %v1630
        %v1636 = vlaneseq
        %v1637 = vshrl.u32 %v1636, 7
        %v1638 = vsub.s32 %v1429, %v1637
        %v1639 = vrot.slane %v1309, %v1638
        %v1640 = vsel %vm1434, %v1639, %v1635
        %v1641 = vlaneseq
        %v1642 = vshrl.u32 %v1641, 7
        %v1643 = vsub.s32 %v1436, %v1642
        %v1644 = vrot.slane %v1311, %v1643
        %v1645 = vsel %vm1441, %v1644, %v1640
        %v1646 = vlaneseq
        %v1647 = vshrl.u32 %v1646, 7
        %v1648 = vsub.s32 %v1443, %v1647
        %v1649 = vrot.slane %v1313, %v1648
        %v1650 = vsel %vm1448, %v1649, %v1645
        %v1651 = vlaneseq
        %v1652 = vshrl.u32 %v1651, 7
        %v1653 = vsub.s32 %v1450, %v1652
        %v1654 = vrot.slane %v1315, %v1653
        %v1655 = vsel %vm1455, %v1654, %v1650
        %v1656 = vlaneseq
        %v1657 = vshrl.u32 %v1656, 7
        %v1658 = vsub.s32 %v1457, %v1657
        %v1659 = vrot.slane %v1317, %v1658
        %v1660 = vsel %vm1462, %v1659, %v1655
        %v1661 = vlaneseq
        %v1662 = vshrl.u32 %v1661, 7
        %v1663 = vsub.s32 %v1464, %v1662
        %v1664 = vrot.slane %v1319, %v1663
        %v1665 = vsel %vm1469, %v1664, %v1660
        %v1666 = vlaneseq
        %v1667 = vshrl.u32 %v1666, 7
        %v1668 = vsub.s32 %v1417, %v1667
        %v1669 = vrot.slane %v1321, %v1668
        %v1670 = vlaneseq
        %v1671 = vshrl.u32 %v1670, 7
        %v1672 = vsub.s32 %v1422, %v1671
        %v1673 = vrot.slane %v1323, %v1672
        %v1674 = vsel %vm1427, %v1673, %v1669
        %v1675 = vlaneseq
        %v1676 = vshrl.u32 %v1675, 7
        %v1677 = vsub.s32 %v1429, %v1676
        %v1678 = vrot.slane %v1325, %v1677
        %v1679 = vsel %vm1434, %v1678, %v1674
        %v1680 = vlaneseq
        %v1681 = vshrl.u32 %v1680, 7
        %v1682 = vsub.s32 %v1436, %v1681
        %v1683 = vrot.slane %v1327, %v1682
        %v1684 = vsel %vm1441, %v1683, %v1679
        %v1685 = vlaneseq
        %v1686 = vshrl.u32 %v1685, 7
        %v1687 = vsub.s32 %v1443, %v1686
        %v1688 = vrot.slane %v1329, %v1687
        %v1689 = vsel %vm1448, %v1688, %v1684
        %v1690 = vlaneseq
        %v1691 = vshrl.u32 %v1690, 7
        %v1692 = vsub.s32 %v1450, %v1691
        %v1693 = vrot.slane %v1331, %v1692
        %v1694 = vsel %vm1455, %v1693, %v1689
        %v1695 = vlaneseq
        %v1696 = vshrl.u32 %v1695, 7
        %v1697 = vsub.s32 %v1457, %v1696
        %v1698 = vrot.slane %v1333, %v1697
        %v1699 = vsel %vm1462, %v1698, %v1694
        %v1700 = vlaneseq
        %v1701 = vshrl.u32 %v1700, 7
        %v1702 = vsub.s32 %v1464, %v1701
        %v1703 = vrot.slane %v1335, %v1702
        %v1704 = vsel %vm1469, %v1703, %v1699
        %v1705 = vlaneseq
        %v1706 = vshrl.u32 %v1705, 7
        %v1707 = vsub.s32 %v1417, %v1706
        %v1708 = vrot.slane %v1337, %v1707
        %v1709 = vlaneseq
        %v1710 = vshrl.u32 %v1709, 7
        %v1711 = vsub.s32 %v1422, %v1710
        %v1712 = vrot.slane %v1339, %v1711
        %v1713 = vsel %vm1427, %v1712, %v1708
        %v1714 = vlaneseq
        %v1715 = vshrl.u32 %v1714, 7
        %v1716 = vsub.s32 %v1429, %v1715
        %v1717 = vrot.slane %v1341, %v1716
        %v1718 = vsel %vm1434, %v1717, %v1713
        %v1719 = vlaneseq
        %v1720 = vshrl.u32 %v1719, 7
        %v1721 = vsub.s32 %v1436, %v1720
        %v1722 = vrot.slane %v1343, %v1721
        %v1723 = vsel %vm1441, %v1722, %v1718
        %v1724 = vlaneseq
        %v1725 = vshrl.u32 %v1724, 7
        %v1726 = vsub.s32 %v1443, %v1725
        %v1727 = vrot.slane %v1345, %v1726
        %v1728 = vsel %vm1448, %v1727, %v1723
        %v1729 = vlaneseq
        %v1730 = vshrl.u32 %v1729, 7
        %v1731 = vsub.s32 %v1450, %v1730
        %v1732 = vrot.slane %v1347, %v1731
        %v1733 = vsel %vm1455, %v1732, %v1728
        %v1734 = vlaneseq
        %v1735 = vshrl.u32 %v1734, 7
        %v1736 = vsub.s32 %v1457, %v1735
        %v1737 = vrot.slane %v1349, %v1736
        %v1738 = vsel %vm1462, %v1737, %v1733
        %v1739 = vlaneseq
        %v1740 = vshrl.u32 %v1739, 7
        %v1741 = vsub.s32 %v1464, %v1740
        %v1742 = vrot.slane %v1351, %v1741
        %v1743 = vsel %vm1469, %v1742, %v1738
        %vm1744 = vcmask 1041409
        %v1745 = vsel %vm1744, %v1509, %v1470
        %vm1746 = vcmask 1042434
        %v1747 = vsel %vm1746, %v1548, %v1745
        %vm1748 = vcmask 1043459
        %v1749 = vsel %vm1748, %v1587, %v1747
        %vm1750 = vcmask 1044484
        %v1751 = vsel %vm1750, %v1626, %v1749
        %vm1752 = vcmask 1045509
        %v1753 = vsel %vm1752, %v1665, %v1751
        %vm1754 = vcmask 1046534
        %v1755 = vsel %vm1754, %v1704, %v1753
        %vm1756 = vcmask 1047559
        %v1757 = vsel %vm1756, %v1743, %v1755
        %vm1759 = vcmask 523264
        %v1760 = vsel %vm1759, %v1757, -inf
        %1761 = vmax.xlane.f32.xlu0 %v1760
        %v1762 = vpop.xlane.xlu0 %1761
        %v1764 = vlaneseq
        %v1765 = vshrl.u32 %v1764, 7
        %v1766 = vsub.s32 0, %v1765
        %v1767 = vrot.slane %v1762, %v1766
        %v1768 = vlaneseq
        %v1769 = vshrl.u32 %v1768, 7
        %v1770 = vsub.s32 1, %v1769
        %v1771 = vrot.slane %v1762, %v1770
        %v1772 = vlaneseq
        %v1773 = vshrl.u32 %v1772, 7
        %v1774 = vsub.s32 2, %v1773
        %v1775 = vrot.slane %v1762, %v1774
        %v1776 = vlaneseq
        %v1777 = vshrl.u32 %v1776, 7
        %v1778 = vsub.s32 3, %v1777
        %v1779 = vrot.slane %v1762, %v1778
        %v1780 = vlaneseq
        %v1781 = vshrl.u32 %v1780, 7
        %v1782 = vsub.s32 4, %v1781
        %v1783 = vrot.slane %v1762, %v1782
        %v1784 = vlaneseq
        %v1785 = vshrl.u32 %v1784, 7
        %v1786 = vsub.s32 5, %v1785
        %v1787 = vrot.slane %v1762, %v1786
        %v1788 = vlaneseq
        %v1789 = vshrl.u32 %v1788, 7
        %v1790 = vsub.s32 6, %v1789
        %v1791 = vrot.slane %v1762, %v1790
        %v1792 = vlaneseq
        %v1793 = vshrl.u32 %v1792, 7
        %v1794 = vsub.s32 7, %v1793
        %v1795 = vrot.slane %v1762, %v1794
        %v1804 = vsub.f32 %v1225, %v1767
        %v1805 = vsub.f32 %v1227, %v1767
        %v1806 = vsub.f32 %v1229, %v1767
        %v1807 = vsub.f32 %v1231, %v1767
        %v1808 = vsub.f32 %v1233, %v1767
        %v1809 = vsub.f32 %v1235, %v1767
        %v1810 = vsub.f32 %v1237, %v1767
        %v1811 = vsub.f32 %v1239, %v1767
        %v1812 = vsub.f32 %v1241, %v1771
        %v1813 = vsub.f32 %v1243, %v1771
        %v1814 = vsub.f32 %v1245, %v1771
        %v1815 = vsub.f32 %v1247, %v1771
        %v1816 = vsub.f32 %v1249, %v1771
        %v1817 = vsub.f32 %v1251, %v1771
        %v1818 = vsub.f32 %v1253, %v1771
        %v1819 = vsub.f32 %v1255, %v1771
        %v1820 = vsub.f32 %v1257, %v1775
        %v1821 = vsub.f32 %v1259, %v1775
        %v1822 = vsub.f32 %v1261, %v1775
        %v1823 = vsub.f32 %v1263, %v1775
        %v1824 = vsub.f32 %v1265, %v1775
        %v1825 = vsub.f32 %v1267, %v1775
        %v1826 = vsub.f32 %v1269, %v1775
        %v1827 = vsub.f32 %v1271, %v1775
        %v1828 = vsub.f32 %v1273, %v1779
        %v1829 = vsub.f32 %v1275, %v1779
        %v1830 = vsub.f32 %v1277, %v1779
        %v1831 = vsub.f32 %v1279, %v1779
        %v1832 = vsub.f32 %v1281, %v1779
        %v1833 = vsub.f32 %v1283, %v1779
        %v1834 = vsub.f32 %v1285, %v1779
        %v1835 = vsub.f32 %v1287, %v1779
        %v1836 = vsub.f32 %v1289, %v1783
        %v1837 = vsub.f32 %v1291, %v1783
        %v1838 = vsub.f32 %v1293, %v1783
        %v1839 = vsub.f32 %v1295, %v1783
        %v1840 = vsub.f32 %v1297, %v1783
        %v1841 = vsub.f32 %v1299, %v1783
        %v1842 = vsub.f32 %v1301, %v1783
        %v1843 = vsub.f32 %v1303, %v1783
        %v1844 = vsub.f32 %v1305, %v1787
        %v1845 = vsub.f32 %v1307, %v1787
        %v1846 = vsub.f32 %v1309, %v1787
        %v1847 = vsub.f32 %v1311, %v1787
        %v1848 = vsub.f32 %v1313, %v1787
        %v1849 = vsub.f32 %v1315, %v1787
        %v1850 = vsub.f32 %v1317, %v1787
        %v1851 = vsub.f32 %v1319, %v1787
        %v1852 = vsub.f32 %v1321, %v1791
        %v1853 = vsub.f32 %v1323, %v1791
        %v1854 = vsub.f32 %v1325, %v1791
        %v1855 = vsub.f32 %v1327, %v1791
        %v1856 = vsub.f32 %v1329, %v1791
        %v1857 = vsub.f32 %v1331, %v1791
        %v1858 = vsub.f32 %v1333, %v1791
        %v1859 = vsub.f32 %v1335, %v1791
        %v1860 = vsub.f32 %v1337, %v1795
        %v1861 = vsub.f32 %v1339, %v1795
        %v1862 = vsub.f32 %v1341, %v1795
        %v1863 = vsub.f32 %v1343, %v1795
        %v1864 = vsub.f32 %v1345, %v1795
        %v1865 = vsub.f32 %v1347, %v1795
        %v1866 = vsub.f32 %v1349, %v1795
        %v1867 = vsub.f32 %v1351, %v1795
        %v1868 = vmul.f32 %v1804, 1.442695
        %v1869 = vpow.pop %v1868
        %v1870 = vmul.f32 %v1805, 1.442695
        %v1871 = vpow.pop %v1870
        %v1872 = vmul.f32 %v1806, 1.442695
        %v1873 = vpow.pop %v1872
        %v1874 = vmul.f32 %v1807, 1.442695
        %v1875 = vpow.pop %v1874
        %v1876 = vmul.f32 %v1808, 1.442695
        %v1877 = vpow.pop %v1876
        %v1878 = vmul.f32 %v1809, 1.442695
        %v1879 = vpow.pop %v1878
        %v1880 = vmul.f32 %v1810, 1.442695
        %v1881 = vpow.pop %v1880
        %v1882 = vmul.f32 %v1811, 1.442695
        %v1883 = vpow.pop %v1882
        %v1884 = vmul.f32 %v1812, 1.442695
        %v1885 = vpow.pop %v1884
        %v1886 = vmul.f32 %v1813, 1.442695
        %v1887 = vpow.pop %v1886
        %v1888 = vmul.f32 %v1814, 1.442695
        %v1889 = vpow.pop %v1888
        %v1890 = vmul.f32 %v1815, 1.442695
        %v1891 = vpow.pop %v1890
        %v1892 = vmul.f32 %v1816, 1.442695
        %v1893 = vpow.pop %v1892
        %v1894 = vmul.f32 %v1817, 1.442695
        %v1895 = vpow.pop %v1894
        %v1896 = vmul.f32 %v1818, 1.442695
        %v1897 = vpow.pop %v1896
        %v1898 = vmul.f32 %v1819, 1.442695
        %v1899 = vpow.pop %v1898
        %v1900 = vmul.f32 %v1820, 1.442695
        %v1901 = vpow.pop %v1900
        %v1902 = vmul.f32 %v1821, 1.442695
        %v1903 = vpow.pop %v1902
        %v1904 = vmul.f32 %v1822, 1.442695
        %v1905 = vpow.pop %v1904
        %v1906 = vmul.f32 %v1823, 1.442695
        %v1907 = vpow.pop %v1906
        %v1908 = vmul.f32 %v1824, 1.442695
        %v1909 = vpow.pop %v1908
        %v1910 = vmul.f32 %v1825, 1.442695
        %v1911 = vpow.pop %v1910
        %v1912 = vmul.f32 %v1826, 1.442695
        %v1913 = vpow.pop %v1912
        %v1914 = vmul.f32 %v1827, 1.442695
        %v1915 = vpow.pop %v1914
        %v1916 = vmul.f32 %v1828, 1.442695
        %v1917 = vpow.pop %v1916
        %v1918 = vmul.f32 %v1829, 1.442695
        %v1919 = vpow.pop %v1918
        %v1920 = vmul.f32 %v1830, 1.442695
        %v1921 = vpow.pop %v1920
        %v1922 = vmul.f32 %v1831, 1.442695
        %v1923 = vpow.pop %v1922
        %v1924 = vmul.f32 %v1832, 1.442695
        %v1925 = vpow.pop %v1924
        %v1926 = vmul.f32 %v1833, 1.442695
        %v1927 = vpow.pop %v1926
        %v1928 = vmul.f32 %v1834, 1.442695
        %v1929 = vpow.pop %v1928
        %v1930 = vmul.f32 %v1835, 1.442695
        %v1931 = vpow.pop %v1930
        %v1932 = vmul.f32 %v1836, 1.442695
        %v1933 = vpow.pop %v1932
        %v1934 = vmul.f32 %v1837, 1.442695
        %v1935 = vpow.pop %v1934
        %v1936 = vmul.f32 %v1838, 1.442695
        %v1937 = vpow.pop %v1936
        %v1938 = vmul.f32 %v1839, 1.442695
        %v1939 = vpow.pop %v1938
        %v1940 = vmul.f32 %v1840, 1.442695
        %v1941 = vpow.pop %v1940
        %v1942 = vmul.f32 %v1841, 1.442695
        %v1943 = vpow.pop %v1942
        %v1944 = vmul.f32 %v1842, 1.442695
        %v1945 = vpow.pop %v1944
        %v1946 = vmul.f32 %v1843, 1.442695
        %v1947 = vpow.pop %v1946
        %v1948 = vmul.f32 %v1844, 1.442695
        %v1949 = vpow.pop %v1948
        %v1950 = vmul.f32 %v1845, 1.442695
        %v1951 = vpow.pop %v1950
        %v1952 = vmul.f32 %v1846, 1.442695
        %v1953 = vpow.pop %v1952
        %v1954 = vmul.f32 %v1847, 1.442695
        %v1955 = vpow.pop %v1954
        %v1956 = vmul.f32 %v1848, 1.442695
        %v1957 = vpow.pop %v1956
        %v1958 = vmul.f32 %v1849, 1.442695
        %v1959 = vpow.pop %v1958
        %v1960 = vmul.f32 %v1850, 1.442695
        %v1961 = vpow.pop %v1960
        %v1962 = vmul.f32 %v1851, 1.442695
        %v1963 = vpow.pop %v1962
        %v1964 = vmul.f32 %v1852, 1.442695
        %v1965 = vpow.pop %v1964
        %v1966 = vmul.f32 %v1853, 1.442695
        %v1967 = vpow.pop %v1966
        %v1968 = vmul.f32 %v1854, 1.442695
        %v1969 = vpow.pop %v1968
        %v1970 = vmul.f32 %v1855, 1.442695
        %v1971 = vpow.pop %v1970
        %v1972 = vmul.f32 %v1856, 1.442695
        %v1973 = vpow.pop %v1972
        %v1974 = vmul.f32 %v1857, 1.442695
        %v1975 = vpow.pop %v1974
        %v1976 = vmul.f32 %v1858, 1.442695
        %v1977 = vpow.pop %v1976
        %v1978 = vmul.f32 %v1859, 1.442695
        %v1979 = vpow.pop %v1978
        %v1980 = vmul.f32 %v1860, 1.442695
        %v1981 = vpow.pop %v1980
        %v1982 = vmul.f32 %v1861, 1.442695
        %v1983 = vpow.pop %v1982
        %v1984 = vmul.f32 %v1862, 1.442695
        %v1985 = vpow.pop %v1984
        %v1986 = vmul.f32 %v1863, 1.442695
        %v1987 = vpow.pop %v1986
        %v1988 = vmul.f32 %v1864, 1.442695
        %v1989 = vpow.pop %v1988
        %v1990 = vmul.f32 %v1865, 1.442695
        %v1991 = vpow.pop %v1990
        %v1992 = vmul.f32 %v1866, 1.442695
        %v1993 = vpow.pop %v1992
        %v1994 = vmul.f32 %v1867, 1.442695
        %v1995 = vpow.pop %v1994
        %2060 = vset.pattern.permute.xlu0 0
        %2061 = vperm.xlu0 %2060, %v1869
        %v2062 = vpop.permute.xlu0 %2061
        %2063 = vset.pattern.permute.xlu0 0
        %2064 = vperm.xlu0 %2063, %v1871
        %v2065 = vpop.permute.xlu0 %2064
        %2066 = vset.pattern.permute.xlu0 0
        %2067 = vperm.xlu0 %2066, %v1873
        %v2068 = vpop.permute.xlu0 %2067
        %2069 = vset.pattern.permute.xlu0 0
        %2070 = vperm.xlu0 %2069, %v1875
        %v2071 = vpop.permute.xlu0 %2070
        %2072 = vset.pattern.permute.xlu0 0
        %2073 = vperm.xlu0 %2072, %v1877
        %v2074 = vpop.permute.xlu0 %2073
        %2075 = vset.pattern.permute.xlu0 0
        %2076 = vperm.xlu0 %2075, %v1879
        %v2077 = vpop.permute.xlu0 %2076
        %2078 = vset.pattern.permute.xlu0 0
        %2079 = vperm.xlu0 %2078, %v1881
        %v2080 = vpop.permute.xlu0 %2079
        %2081 = vset.pattern.permute.xlu0 0
        %2082 = vperm.xlu0 %2081, %v1883
        %v2083 = vpop.permute.xlu0 %2082
        %2084 = vset.pattern.permute.xlu0 0
        %2085 = vperm.xlu0 %2084, %v1885
        %v2086 = vpop.permute.xlu0 %2085
        %2087 = vset.pattern.permute.xlu0 0
        %2088 = vperm.xlu0 %2087, %v1887
        %v2089 = vpop.permute.xlu0 %2088
        %2090 = vset.pattern.permute.xlu0 0
        %2091 = vperm.xlu0 %2090, %v1889
        %v2092 = vpop.permute.xlu0 %2091
        %2093 = vset.pattern.permute.xlu0 0
        %2094 = vperm.xlu0 %2093, %v1891
        %v2095 = vpop.permute.xlu0 %2094
        %2096 = vset.pattern.permute.xlu0 0
        %2097 = vperm.xlu0 %2096, %v1893
        %v2098 = vpop.permute.xlu0 %2097
        %2099 = vset.pattern.permute.xlu0 0
        %2100 = vperm.xlu0 %2099, %v1895
        %v2101 = vpop.permute.xlu0 %2100
        %2102 = vset.pattern.permute.xlu0 0
        %2103 = vperm.xlu0 %2102, %v1897
        %v2104 = vpop.permute.xlu0 %2103
        %2105 = vset.pattern.permute.xlu0 0
        %2106 = vperm.xlu0 %2105, %v1899
        %v2107 = vpop.permute.xlu0 %2106
        %2108 = vset.pattern.permute.xlu0 0
        %2109 = vperm.xlu0 %2108, %v1901
        %v2110 = vpop.permute.xlu0 %2109
        %2111 = vset.pattern.permute.xlu0 0
        %2112 = vperm.xlu0 %2111, %v1903
        %v2113 = vpop.permute.xlu0 %2112
        %2114 = vset.pattern.permute.xlu0 0
        %2115 = vperm.xlu0 %2114, %v1905
        %v2116 = vpop.permute.xlu0 %2115
        %2117 = vset.pattern.permute.xlu0 0
        %2118 = vperm.xlu0 %2117, %v1907
        %v2119 = vpop.permute.xlu0 %2118
        %2120 = vset.pattern.permute.xlu0 0
        %2121 = vperm.xlu0 %2120, %v1909
        %v2122 = vpop.permute.xlu0 %2121
        %2123 = vset.pattern.permute.xlu0 0
        %2124 = vperm.xlu0 %2123, %v1911
        %v2125 = vpop.permute.xlu0 %2124
        %2126 = vset.pattern.permute.xlu0 0
        %2127 = vperm.xlu0 %2126, %v1913
        %v2128 = vpop.permute.xlu0 %2127
        %2129 = vset.pattern.permute.xlu0 0
        %2130 = vperm.xlu0 %2129, %v1915
        %v2131 = vpop.permute.xlu0 %2130
        %2132 = vset.pattern.permute.xlu0 0
        %2133 = vperm.xlu0 %2132, %v1917
        %v2134 = vpop.permute.xlu0 %2133
        %2135 = vset.pattern.permute.xlu0 0
        %2136 = vperm.xlu0 %2135, %v1919
        %v2137 = vpop.permute.xlu0 %2136
        %2138 = vset.pattern.permute.xlu0 0
        %2139 = vperm.xlu0 %2138, %v1921
        %v2140 = vpop.permute.xlu0 %2139
        %2141 = vset.pattern.permute.xlu0 0
        %2142 = vperm.xlu0 %2141, %v1923
        %v2143 = vpop.permute.xlu0 %2142
        %2144 = vset.pattern.permute.xlu0 0
        %2145 = vperm.xlu0 %2144, %v1925
        %v2146 = vpop.permute.xlu0 %2145
        %2147 = vset.pattern.permute.xlu0 0
        %2148 = vperm.xlu0 %2147, %v1927
        %v2149 = vpop.permute.xlu0 %2148
        %2150 = vset.pattern.permute.xlu0 0
        %2151 = vperm.xlu0 %2150, %v1929
        %v2152 = vpop.permute.xlu0 %2151
        %2153 = vset.pattern.permute.xlu0 0
        %2154 = vperm.xlu0 %2153, %v1931
        %v2155 = vpop.permute.xlu0 %2154
        %2156 = vset.pattern.permute.xlu0 0
        %2157 = vperm.xlu0 %2156, %v1933
        %v2158 = vpop.permute.xlu0 %2157
        %2159 = vset.pattern.permute.xlu0 0
        %2160 = vperm.xlu0 %2159, %v1935
        %v2161 = vpop.permute.xlu0 %2160
        %2162 = vset.pattern.permute.xlu0 0
        %2163 = vperm.xlu0 %2162, %v1937
        %v2164 = vpop.permute.xlu0 %2163
        %2165 = vset.pattern.permute.xlu0 0
        %2166 = vperm.xlu0 %2165, %v1939
        %v2167 = vpop.permute.xlu0 %2166
        %2168 = vset.pattern.permute.xlu0 0
        %2169 = vperm.xlu0 %2168, %v1941
        %v2170 = vpop.permute.xlu0 %2169
        %2171 = vset.pattern.permute.xlu0 0
        %2172 = vperm.xlu0 %2171, %v1943
        %v2173 = vpop.permute.xlu0 %2172
        %2174 = vset.pattern.permute.xlu0 0
        %2175 = vperm.xlu0 %2174, %v1945
        %v2176 = vpop.permute.xlu0 %2175
        %2177 = vset.pattern.permute.xlu0 0
        %2178 = vperm.xlu0 %2177, %v1947
        %v2179 = vpop.permute.xlu0 %2178
        %2180 = vset.pattern.permute.xlu0 0
        %2181 = vperm.xlu0 %2180, %v1949
        %v2182 = vpop.permute.xlu0 %2181
        %2183 = vset.pattern.permute.xlu0 0
        %2184 = vperm.xlu0 %2183, %v1951
        %v2185 = vpop.permute.xlu0 %2184
        %2186 = vset.pattern.permute.xlu0 0
        %2187 = vperm.xlu0 %2186, %v1953
        %v2188 = vpop.permute.xlu0 %2187
        %2189 = vset.pattern.permute.xlu0 0
        %2190 = vperm.xlu0 %2189, %v1955
        %v2191 = vpop.permute.xlu0 %2190
        %2192 = vset.pattern.permute.xlu0 0
        %2193 = vperm.xlu0 %2192, %v1957
        %v2194 = vpop.permute.xlu0 %2193
        %2195 = vset.pattern.permute.xlu0 0
        %2196 = vperm.xlu0 %2195, %v1959
        %v2197 = vpop.permute.xlu0 %2196
        %2198 = vset.pattern.permute.xlu0 0
        %2199 = vperm.xlu0 %2198, %v1961
        %v2200 = vpop.permute.xlu0 %2199
        %2201 = vset.pattern.permute.xlu0 0
        %2202 = vperm.xlu0 %2201, %v1963
        %v2203 = vpop.permute.xlu0 %2202
        %2204 = vset.pattern.permute.xlu0 0
        %2205 = vperm.xlu0 %2204, %v1965
        %v2206 = vpop.permute.xlu0 %2205
        %2207 = vset.pattern.permute.xlu0 0
        %2208 = vperm.xlu0 %2207, %v1967
        %v2209 = vpop.permute.xlu0 %2208
        %2210 = vset.pattern.permute.xlu0 0
        %2211 = vperm.xlu0 %2210, %v1969
        %v2212 = vpop.permute.xlu0 %2211
        %2213 = vset.pattern.permute.xlu0 0
        %2214 = vperm.xlu0 %2213, %v1971
        %v2215 = vpop.permute.xlu0 %2214
        %2216 = vset.pattern.permute.xlu0 0
        %2217 = vperm.xlu0 %2216, %v1973
        %v2218 = vpop.permute.xlu0 %2217
        %2219 = vset.pattern.permute.xlu0 0
        %2220 = vperm.xlu0 %2219, %v1975
        %v2221 = vpop.permute.xlu0 %2220
        %2222 = vset.pattern.permute.xlu0 0
        %2223 = vperm.xlu0 %2222, %v1977
        %v2224 = vpop.permute.xlu0 %2223
        %2225 = vset.pattern.permute.xlu0 0
        %2226 = vperm.xlu0 %2225, %v1979
        %v2227 = vpop.permute.xlu0 %2226
        %2228 = vset.pattern.permute.xlu0 0
        %2229 = vperm.xlu0 %2228, %v1981
        %v2230 = vpop.permute.xlu0 %2229
        %2231 = vset.pattern.permute.xlu0 0
        %2232 = vperm.xlu0 %2231, %v1983
        %v2233 = vpop.permute.xlu0 %2232
        %2234 = vset.pattern.permute.xlu0 0
        %2235 = vperm.xlu0 %2234, %v1985
        %v2236 = vpop.permute.xlu0 %2235
        %2237 = vset.pattern.permute.xlu0 0
        %2238 = vperm.xlu0 %2237, %v1987
        %v2239 = vpop.permute.xlu0 %2238
        %2240 = vset.pattern.permute.xlu0 0
        %2241 = vperm.xlu0 %2240, %v1989
        %v2242 = vpop.permute.xlu0 %2241
        %2243 = vset.pattern.permute.xlu0 0
        %2244 = vperm.xlu0 %2243, %v1991
        %v2245 = vpop.permute.xlu0 %2244
        %2246 = vset.pattern.permute.xlu0 0
        %2247 = vperm.xlu0 %2246, %v1993
        %v2248 = vpop.permute.xlu0 %2247
        %2249 = vset.pattern.permute.xlu0 0
        %2250 = vperm.xlu0 %2249, %v1995
        %v2251 = vpop.permute.xlu0 %2250
        %v2252 = vlaneseq
        %v2253 = vshrl.u32 %v2252, 7
        %v2254 = vsub.s32 %v1417, %v2253
        %v2255 = vrot.slane %v2062, %v2254
        %v2256 = vlaneseq
        %v2257 = vshrl.u32 %v2256, 7
        %v2258 = vsub.s32 %v1422, %v2257
        %v2259 = vrot.slane %v2065, %v2258
        %v2260 = vsel %vm1427, %v2259, %v2255
        %v2261 = vlaneseq
        %v2262 = vshrl.u32 %v2261, 7
        %v2263 = vsub.s32 %v1429, %v2262
        %v2264 = vrot.slane %v2068, %v2263
        %v2265 = vsel %vm1434, %v2264, %v2260
        %v2266 = vlaneseq
        %v2267 = vshrl.u32 %v2266, 7
        %v2268 = vsub.s32 %v1436, %v2267
        %v2269 = vrot.slane %v2071, %v2268
        %v2270 = vsel %vm1441, %v2269, %v2265
        %v2271 = vlaneseq
        %v2272 = vshrl.u32 %v2271, 7
        %v2273 = vsub.s32 %v1443, %v2272
        %v2274 = vrot.slane %v2074, %v2273
        %v2275 = vsel %vm1448, %v2274, %v2270
        %v2276 = vlaneseq
        %v2277 = vshrl.u32 %v2276, 7
        %v2278 = vsub.s32 %v1450, %v2277
        %v2279 = vrot.slane %v2077, %v2278
        %v2280 = vsel %vm1455, %v2279, %v2275
        %v2281 = vlaneseq
        %v2282 = vshrl.u32 %v2281, 7
        %v2283 = vsub.s32 %v1457, %v2282
        %v2284 = vrot.slane %v2080, %v2283
        %v2285 = vsel %vm1462, %v2284, %v2280
        %v2286 = vlaneseq
        %v2287 = vshrl.u32 %v2286, 7
        %v2288 = vsub.s32 %v1464, %v2287
        %v2289 = vrot.slane %v2083, %v2288
        %v2290 = vsel %vm1469, %v2289, %v2285
        %v2291 = vlaneseq
        %v2292 = vshrl.u32 %v2291, 7
        %v2293 = vsub.s32 %v1417, %v2292
        %v2294 = vrot.slane %v2086, %v2293
        %v2295 = vlaneseq
        %v2296 = vshrl.u32 %v2295, 7
        %v2297 = vsub.s32 %v1422, %v2296
        %v2298 = vrot.slane %v2089, %v2297
        %v2299 = vsel %vm1427, %v2298, %v2294
        %v2300 = vlaneseq
        %v2301 = vshrl.u32 %v2300, 7
        %v2302 = vsub.s32 %v1429, %v2301
        %v2303 = vrot.slane %v2092, %v2302
        %v2304 = vsel %vm1434, %v2303, %v2299
        %v2305 = vlaneseq
        %v2306 = vshrl.u32 %v2305, 7
        %v2307 = vsub.s32 %v1436, %v2306
        %v2308 = vrot.slane %v2095, %v2307
        %v2309 = vsel %vm1441, %v2308, %v2304
        %v2310 = vlaneseq
        %v2311 = vshrl.u32 %v2310, 7
        %v2312 = vsub.s32 %v1443, %v2311
        %v2313 = vrot.slane %v2098, %v2312
        %v2314 = vsel %vm1448, %v2313, %v2309
        %v2315 = vlaneseq
        %v2316 = vshrl.u32 %v2315, 7
        %v2317 = vsub.s32 %v1450, %v2316
        %v2318 = vrot.slane %v2101, %v2317
        %v2319 = vsel %vm1455, %v2318, %v2314
        %v2320 = vlaneseq
        %v2321 = vshrl.u32 %v2320, 7
        %v2322 = vsub.s32 %v1457, %v2321
        %v2323 = vrot.slane %v2104, %v2322
        %v2324 = vsel %vm1462, %v2323, %v2319
        %v2325 = vlaneseq
        %v2326 = vshrl.u32 %v2325, 7
        %v2327 = vsub.s32 %v1464, %v2326
        %v2328 = vrot.slane %v2107, %v2327
        %v2329 = vsel %vm1469, %v2328, %v2324
        %v2330 = vlaneseq
        %v2331 = vshrl.u32 %v2330, 7
        %v2332 = vsub.s32 %v1417, %v2331
        %v2333 = vrot.slane %v2110, %v2332
        %v2334 = vlaneseq
        %v2335 = vshrl.u32 %v2334, 7
        %v2336 = vsub.s32 %v1422, %v2335
        %v2337 = vrot.slane %v2113, %v2336
        %v2338 = vsel %vm1427, %v2337, %v2333
        %v2339 = vlaneseq
        %v2340 = vshrl.u32 %v2339, 7
        %v2341 = vsub.s32 %v1429, %v2340
        %v2342 = vrot.slane %v2116, %v2341
        %v2343 = vsel %vm1434, %v2342, %v2338
        %v2344 = vlaneseq
        %v2345 = vshrl.u32 %v2344, 7
        %v2346 = vsub.s32 %v1436, %v2345
        %v2347 = vrot.slane %v2119, %v2346
        %v2348 = vsel %vm1441, %v2347, %v2343
        %v2349 = vlaneseq
        %v2350 = vshrl.u32 %v2349, 7
        %v2351 = vsub.s32 %v1443, %v2350
        %v2352 = vrot.slane %v2122, %v2351
        %v2353 = vsel %vm1448, %v2352, %v2348
        %v2354 = vlaneseq
        %v2355 = vshrl.u32 %v2354, 7
        %v2356 = vsub.s32 %v1450, %v2355
        %v2357 = vrot.slane %v2125, %v2356
        %v2358 = vsel %vm1455, %v2357, %v2353
        %v2359 = vlaneseq
        %v2360 = vshrl.u32 %v2359, 7
        %v2361 = vsub.s32 %v1457, %v2360
        %v2362 = vrot.slane %v2128, %v2361
        %v2363 = vsel %vm1462, %v2362, %v2358
        %v2364 = vlaneseq
        %v2365 = vshrl.u32 %v2364, 7
        %v2366 = vsub.s32 %v1464, %v2365
        %v2367 = vrot.slane %v2131, %v2366
        %v2368 = vsel %vm1469, %v2367, %v2363
        %v2369 = vlaneseq
        %v2370 = vshrl.u32 %v2369, 7
        %v2371 = vsub.s32 %v1417, %v2370
        %v2372 = vrot.slane %v2134, %v2371
        %v2373 = vlaneseq
        %v2374 = vshrl.u32 %v2373, 7
        %v2375 = vsub.s32 %v1422, %v2374
        %v2376 = vrot.slane %v2137, %v2375
        %v2377 = vsel %vm1427, %v2376, %v2372
        %v2378 = vlaneseq
        %v2379 = vshrl.u32 %v2378, 7
        %v2380 = vsub.s32 %v1429, %v2379
        %v2381 = vrot.slane %v2140, %v2380
        %v2382 = vsel %vm1434, %v2381, %v2377
        %v2383 = vlaneseq
        %v2384 = vshrl.u32 %v2383, 7
        %v2385 = vsub.s32 %v1436, %v2384
        %v2386 = vrot.slane %v2143, %v2385
        %v2387 = vsel %vm1441, %v2386, %v2382
        %v2388 = vlaneseq
        %v2389 = vshrl.u32 %v2388, 7
        %v2390 = vsub.s32 %v1443, %v2389
        %v2391 = vrot.slane %v2146, %v2390
        %v2392 = vsel %vm1448, %v2391, %v2387
        %v2393 = vlaneseq
        %v2394 = vshrl.u32 %v2393, 7
        %v2395 = vsub.s32 %v1450, %v2394
        %v2396 = vrot.slane %v2149, %v2395
        %v2397 = vsel %vm1455, %v2396, %v2392
        %v2398 = vlaneseq
        %v2399 = vshrl.u32 %v2398, 7
        %v2400 = vsub.s32 %v1457, %v2399
        %v2401 = vrot.slane %v2152, %v2400
        %v2402 = vsel %vm1462, %v2401, %v2397
        %v2403 = vlaneseq
        %v2404 = vshrl.u32 %v2403, 7
        %v2405 = vsub.s32 %v1464, %v2404
        %v2406 = vrot.slane %v2155, %v2405
        %v2407 = vsel %vm1469, %v2406, %v2402
        %v2408 = vlaneseq
        %v2409 = vshrl.u32 %v2408, 7
        %v2410 = vsub.s32 %v1417, %v2409
        %v2411 = vrot.slane %v2158, %v2410
        %v2412 = vlaneseq
        %v2413 = vshrl.u32 %v2412, 7
        %v2414 = vsub.s32 %v1422, %v2413
        %v2415 = vrot.slane %v2161, %v2414
        %v2416 = vsel %vm1427, %v2415, %v2411
        %v2417 = vlaneseq
        %v2418 = vshrl.u32 %v2417, 7
        %v2419 = vsub.s32 %v1429, %v2418
        %v2420 = vrot.slane %v2164, %v2419
        %v2421 = vsel %vm1434, %v2420, %v2416
        %v2422 = vlaneseq
        %v2423 = vshrl.u32 %v2422, 7
        %v2424 = vsub.s32 %v1436, %v2423
        %v2425 = vrot.slane %v2167, %v2424
        %v2426 = vsel %vm1441, %v2425, %v2421
        %v2427 = vlaneseq
        %v2428 = vshrl.u32 %v2427, 7
        %v2429 = vsub.s32 %v1443, %v2428
        %v2430 = vrot.slane %v2170, %v2429
        %v2431 = vsel %vm1448, %v2430, %v2426
        %v2432 = vlaneseq
        %v2433 = vshrl.u32 %v2432, 7
        %v2434 = vsub.s32 %v1450, %v2433
        %v2435 = vrot.slane %v2173, %v2434
        %v2436 = vsel %vm1455, %v2435, %v2431
        %v2437 = vlaneseq
        %v2438 = vshrl.u32 %v2437, 7
        %v2439 = vsub.s32 %v1457, %v2438
        %v2440 = vrot.slane %v2176, %v2439
        %v2441 = vsel %vm1462, %v2440, %v2436
        %v2442 = vlaneseq
        %v2443 = vshrl.u32 %v2442, 7
        %v2444 = vsub.s32 %v1464, %v2443
        %v2445 = vrot.slane %v2179, %v2444
        %v2446 = vsel %vm1469, %v2445, %v2441
        %v2447 = vlaneseq
        %v2448 = vshrl.u32 %v2447, 7
        %v2449 = vsub.s32 %v1417, %v2448
        %v2450 = vrot.slane %v2182, %v2449
        %v2451 = vlaneseq
        %v2452 = vshrl.u32 %v2451, 7
        %v2453 = vsub.s32 %v1422, %v2452
        %v2454 = vrot.slane %v2185, %v2453
        %v2455 = vsel %vm1427, %v2454, %v2450
        %v2456 = vlaneseq
        %v2457 = vshrl.u32 %v2456, 7
        %v2458 = vsub.s32 %v1429, %v2457
        %v2459 = vrot.slane %v2188, %v2458
        %v2460 = vsel %vm1434, %v2459, %v2455
        %v2461 = vlaneseq
        %v2462 = vshrl.u32 %v2461, 7
        %v2463 = vsub.s32 %v1436, %v2462
        %v2464 = vrot.slane %v2191, %v2463
        %v2465 = vsel %vm1441, %v2464, %v2460
        %v2466 = vlaneseq
        %v2467 = vshrl.u32 %v2466, 7
        %v2468 = vsub.s32 %v1443, %v2467
        %v2469 = vrot.slane %v2194, %v2468
        %v2470 = vsel %vm1448, %v2469, %v2465
        %v2471 = vlaneseq
        %v2472 = vshrl.u32 %v2471, 7
        %v2473 = vsub.s32 %v1450, %v2472
        %v2474 = vrot.slane %v2197, %v2473
        %v2475 = vsel %vm1455, %v2474, %v2470
        %v2476 = vlaneseq
        %v2477 = vshrl.u32 %v2476, 7
        %v2478 = vsub.s32 %v1457, %v2477
        %v2479 = vrot.slane %v2200, %v2478
        %v2480 = vsel %vm1462, %v2479, %v2475
        %v2481 = vlaneseq
        %v2482 = vshrl.u32 %v2481, 7
        %v2483 = vsub.s32 %v1464, %v2482
        %v2484 = vrot.slane %v2203, %v2483
        %v2485 = vsel %vm1469, %v2484, %v2480
        %v2486 = vlaneseq
        %v2487 = vshrl.u32 %v2486, 7
        %v2488 = vsub.s32 %v1417, %v2487
        %v2489 = vrot.slane %v2206, %v2488
        %v2490 = vlaneseq
        %v2491 = vshrl.u32 %v2490, 7
        %v2492 = vsub.s32 %v1422, %v2491
        %v2493 = vrot.slane %v2209, %v2492
        %v2494 = vsel %vm1427, %v2493, %v2489
        %v2495 = vlaneseq
        %v2496 = vshrl.u32 %v2495, 7
        %v2497 = vsub.s32 %v1429, %v2496
        %v2498 = vrot.slane %v2212, %v2497
        %v2499 = vsel %vm1434, %v2498, %v2494
        %v2500 = vlaneseq
        %v2501 = vshrl.u32 %v2500, 7
        %v2502 = vsub.s32 %v1436, %v2501
        %v2503 = vrot.slane %v2215, %v2502
        %v2504 = vsel %vm1441, %v2503, %v2499
        %v2505 = vlaneseq
        %v2506 = vshrl.u32 %v2505, 7
        %v2507 = vsub.s32 %v1443, %v2506
        %v2508 = vrot.slane %v2218, %v2507
        %v2509 = vsel %vm1448, %v2508, %v2504
        %v2510 = vlaneseq
        %v2511 = vshrl.u32 %v2510, 7
        %v2512 = vsub.s32 %v1450, %v2511
        %v2513 = vrot.slane %v2221, %v2512
        %v2514 = vsel %vm1455, %v2513, %v2509
        %v2515 = vlaneseq
        %v2516 = vshrl.u32 %v2515, 7
        %v2517 = vsub.s32 %v1457, %v2516
        %v2518 = vrot.slane %v2224, %v2517
        %v2519 = vsel %vm1462, %v2518, %v2514
        %v2520 = vlaneseq
        %v2521 = vshrl.u32 %v2520, 7
        %v2522 = vsub.s32 %v1464, %v2521
        %v2523 = vrot.slane %v2227, %v2522
        %v2524 = vsel %vm1469, %v2523, %v2519
        %v2525 = vlaneseq
        %v2526 = vshrl.u32 %v2525, 7
        %v2527 = vsub.s32 %v1417, %v2526
        %v2528 = vrot.slane %v2230, %v2527
        %v2529 = vlaneseq
        %v2530 = vshrl.u32 %v2529, 7
        %v2531 = vsub.s32 %v1422, %v2530
        %v2532 = vrot.slane %v2233, %v2531
        %v2533 = vsel %vm1427, %v2532, %v2528
        %v2534 = vlaneseq
        %v2535 = vshrl.u32 %v2534, 7
        %v2536 = vsub.s32 %v1429, %v2535
        %v2537 = vrot.slane %v2236, %v2536
        %v2538 = vsel %vm1434, %v2537, %v2533
        %v2539 = vlaneseq
        %v2540 = vshrl.u32 %v2539, 7
        %v2541 = vsub.s32 %v1436, %v2540
        %v2542 = vrot.slane %v2239, %v2541
        %v2543 = vsel %vm1441, %v2542, %v2538
        %v2544 = vlaneseq
        %v2545 = vshrl.u32 %v2544, 7
        %v2546 = vsub.s32 %v1443, %v2545
        %v2547 = vrot.slane %v2242, %v2546
        %v2548 = vsel %vm1448, %v2547, %v2543
        %v2549 = vlaneseq
        %v2550 = vshrl.u32 %v2549, 7
        %v2551 = vsub.s32 %v1450, %v2550
        %v2552 = vrot.slane %v2245, %v2551
        %v2553 = vsel %vm1455, %v2552, %v2548
        %v2554 = vlaneseq
        %v2555 = vshrl.u32 %v2554, 7
        %v2556 = vsub.s32 %v1457, %v2555
        %v2557 = vrot.slane %v2248, %v2556
        %v2558 = vsel %vm1462, %v2557, %v2553
        %v2559 = vlaneseq
        %v2560 = vshrl.u32 %v2559, 7
        %v2561 = vsub.s32 %v1464, %v2560
        %v2562 = vrot.slane %v2251, %v2561
        %v2563 = vsel %vm1469, %v2562, %v2558
        %v2564 = vsel %vm1744, %v2329, %v2290
        %v2565 = vsel %vm1746, %v2368, %v2564
        %v2566 = vsel %vm1748, %v2407, %v2565
        %v2567 = vsel %vm1750, %v2446, %v2566
        %v2568 = vsel %vm1752, %v2485, %v2567
        %v2569 = vsel %vm1754, %v2524, %v2568
        %v2570 = vsel %vm1756, %v2563, %v2569
        %v2572 = vsel %vm1759, %v2570, 0.0
        %2573 = vadd.xlane.f32.xlu0 %v2572
        %v2574 = vpop.xlane.xlu0 %2573
        %v2575 = vrcp.pop %v2574
        %v2576 = vmul.f32 %v2574, %v2575
        %v2577 = vsub.f32 2.0, %v2576
        %v2578 = vmul.f32 %v2575, %v2577
        %v2580 = vlaneseq
        %v2581 = vshrl.u32 %v2580, 7
        %v2582 = vsub.s32 0, %v2581
        %v2583 = vrot.slane %v2578, %v2582
        %v2584 = vlaneseq
        %v2585 = vshrl.u32 %v2584, 7
        %v2586 = vsub.s32 1, %v2585
        %v2587 = vrot.slane %v2578, %v2586
        %v2588 = vlaneseq
        %v2589 = vshrl.u32 %v2588, 7
        %v2590 = vsub.s32 2, %v2589
        %v2591 = vrot.slane %v2578, %v2590
        %v2592 = vlaneseq
        %v2593 = vshrl.u32 %v2592, 7
        %v2594 = vsub.s32 3, %v2593
        %v2595 = vrot.slane %v2578, %v2594
        %v2596 = vlaneseq
        %v2597 = vshrl.u32 %v2596, 7
        %v2598 = vsub.s32 4, %v2597
        %v2599 = vrot.slane %v2578, %v2598
        %v2600 = vlaneseq
        %v2601 = vshrl.u32 %v2600, 7
        %v2602 = vsub.s32 5, %v2601
        %v2603 = vrot.slane %v2578, %v2602
        %v2604 = vlaneseq
        %v2605 = vshrl.u32 %v2604, 7
        %v2606 = vsub.s32 6, %v2605
        %v2607 = vrot.slane %v2578, %v2606
        %v2608 = vlaneseq
        %v2609 = vshrl.u32 %v2608, 7
        %v2610 = vsub.s32 7, %v2609
        %v2611 = vrot.slane %v2578, %v2610
        %v2620 = vmul.f32 %v1869, %v2583
        %v2621 = vmul.f32 %v1871, %v2583
        %v2622 = vmul.f32 %v1873, %v2583
        %v2623 = vmul.f32 %v1875, %v2583
        %v2624 = vmul.f32 %v1877, %v2583
        %v2625 = vmul.f32 %v1879, %v2583
        %v2626 = vmul.f32 %v1881, %v2583
        %v2627 = vmul.f32 %v1883, %v2583
        %v2628 = vmul.f32 %v1885, %v2587
        %v2629 = vmul.f32 %v1887, %v2587
        %v2630 = vmul.f32 %v1889, %v2587
        %v2631 = vmul.f32 %v1891, %v2587
        %v2632 = vmul.f32 %v1893, %v2587
        %v2633 = vmul.f32 %v1895, %v2587
        %v2634 = vmul.f32 %v1897, %v2587
        %v2635 = vmul.f32 %v1899, %v2587
        %v2636 = vmul.f32 %v1901, %v2591
        %v2637 = vmul.f32 %v1903, %v2591
        %v2638 = vmul.f32 %v1905, %v2591
        %v2639 = vmul.f32 %v1907, %v2591
        %v2640 = vmul.f32 %v1909, %v2591
        %v2641 = vmul.f32 %v1911, %v2591
        %v2642 = vmul.f32 %v1913, %v2591
        %v2643 = vmul.f32 %v1915, %v2591
        %v2644 = vmul.f32 %v1917, %v2595
        %v2645 = vmul.f32 %v1919, %v2595
        %v2646 = vmul.f32 %v1921, %v2595
        %v2647 = vmul.f32 %v1923, %v2595
        %v2648 = vmul.f32 %v1925, %v2595
        %v2649 = vmul.f32 %v1927, %v2595
        %v2650 = vmul.f32 %v1929, %v2595
        %v2651 = vmul.f32 %v1931, %v2595
        %v2652 = vmul.f32 %v1933, %v2599
        %v2653 = vmul.f32 %v1935, %v2599
        %v2654 = vmul.f32 %v1937, %v2599
        %v2655 = vmul.f32 %v1939, %v2599
        %v2656 = vmul.f32 %v1941, %v2599
        %v2657 = vmul.f32 %v1943, %v2599
        %v2658 = vmul.f32 %v1945, %v2599
        %v2659 = vmul.f32 %v1947, %v2599
        %v2660 = vmul.f32 %v1949, %v2603
        %v2661 = vmul.f32 %v1951, %v2603
        %v2662 = vmul.f32 %v1953, %v2603
        %v2663 = vmul.f32 %v1955, %v2603
        %v2664 = vmul.f32 %v1957, %v2603
        %v2665 = vmul.f32 %v1959, %v2603
        %v2666 = vmul.f32 %v1961, %v2603
        %v2667 = vmul.f32 %v1963, %v2603
        %v2668 = vmul.f32 %v1965, %v2607
        %v2669 = vmul.f32 %v1967, %v2607
        %v2670 = vmul.f32 %v1969, %v2607
        %v2671 = vmul.f32 %v1971, %v2607
        %v2672 = vmul.f32 %v1973, %v2607
        %v2673 = vmul.f32 %v1975, %v2607
        %v2674 = vmul.f32 %v1977, %v2607
        %v2675 = vmul.f32 %v1979, %v2607
        %v2676 = vmul.f32 %v1981, %v2611
        %v2677 = vmul.f32 %v1983, %v2611
        %v2678 = vmul.f32 %v1985, %v2611
        %v2679 = vmul.f32 %v1987, %v2611
        %v2680 = vmul.f32 %v1989, %v2611
        %v2681 = vmul.f32 %v1991, %v2611
        %v2682 = vmul.f32 %v1993, %v2611
        %v2683 = vmul.f32 %v1995, %v2611
        %2685 = vset.pattern.permute.xlu0 0
        %2686 = vperm.xlu0 %2685, %v2620
        %v2687 = vpop.permute.xlu0 %2686
        %2690 = vset.pattern.permute.xlu0 0
        %2691 = vperm.xlu0 %2690, %v2621
        %v2692 = vpop.permute.xlu0 %2691
        %2695 = vset.pattern.permute.xlu0 0
        %2696 = vperm.xlu0 %2695, %v2622
        %v2697 = vpop.permute.xlu0 %2696
        %2700 = vset.pattern.permute.xlu0 0
        %2701 = vperm.xlu0 %2700, %v2623
        %v2702 = vpop.permute.xlu0 %2701
        %2705 = vset.pattern.permute.xlu0 0
        %2706 = vperm.xlu0 %2705, %v2624
        %v2707 = vpop.permute.xlu0 %2706
        %2710 = vset.pattern.permute.xlu0 0
        %2711 = vperm.xlu0 %2710, %v2625
        %v2712 = vpop.permute.xlu0 %2711
        %2715 = vset.pattern.permute.xlu0 0
        %2716 = vperm.xlu0 %2715, %v2626
        %v2717 = vpop.permute.xlu0 %2716
        %2720 = vset.pattern.permute.xlu0 0
        %2721 = vperm.xlu0 %2720, %v2627
        %v2722 = vpop.permute.xlu0 %2721
        %2725 = vset.pattern.permute.xlu0 0
        %2726 = vperm.xlu0 %2725, %v2628
        %v2727 = vpop.permute.xlu0 %2726
        %2730 = vset.pattern.permute.xlu0 0
        %2731 = vperm.xlu0 %2730, %v2629
        %v2732 = vpop.permute.xlu0 %2731
        %2735 = vset.pattern.permute.xlu0 0
        %2736 = vperm.xlu0 %2735, %v2630
        %v2737 = vpop.permute.xlu0 %2736
        %2740 = vset.pattern.permute.xlu0 0
        %2741 = vperm.xlu0 %2740, %v2631
        %v2742 = vpop.permute.xlu0 %2741
        %2745 = vset.pattern.permute.xlu0 0
        %2746 = vperm.xlu0 %2745, %v2632
        %v2747 = vpop.permute.xlu0 %2746
        %2750 = vset.pattern.permute.xlu0 0
        %2751 = vperm.xlu0 %2750, %v2633
        %v2752 = vpop.permute.xlu0 %2751
        %2755 = vset.pattern.permute.xlu0 0
        %2756 = vperm.xlu0 %2755, %v2634
        %v2757 = vpop.permute.xlu0 %2756
        %2760 = vset.pattern.permute.xlu0 0
        %2761 = vperm.xlu0 %2760, %v2635
        %v2762 = vpop.permute.xlu0 %2761
        %2765 = vset.pattern.permute.xlu0 0
        %2766 = vperm.xlu0 %2765, %v2636
        %v2767 = vpop.permute.xlu0 %2766
        %2770 = vset.pattern.permute.xlu0 0
        %2771 = vperm.xlu0 %2770, %v2637
        %v2772 = vpop.permute.xlu0 %2771
        %2775 = vset.pattern.permute.xlu0 0
        %2776 = vperm.xlu0 %2775, %v2638
        %v2777 = vpop.permute.xlu0 %2776
        %2780 = vset.pattern.permute.xlu0 0
        %2781 = vperm.xlu0 %2780, %v2639
        %v2782 = vpop.permute.xlu0 %2781
        %2785 = vset.pattern.permute.xlu0 0
        %2786 = vperm.xlu0 %2785, %v2640
        %v2787 = vpop.permute.xlu0 %2786
        %2790 = vset.pattern.permute.xlu0 0
        %2791 = vperm.xlu0 %2790, %v2641
        %v2792 = vpop.permute.xlu0 %2791
        %2795 = vset.pattern.permute.xlu0 0
        %2796 = vperm.xlu0 %2795, %v2642
        %v2797 = vpop.permute.xlu0 %2796
        %2800 = vset.pattern.permute.xlu0 0
        %2801 = vperm.xlu0 %2800, %v2643
        %v2802 = vpop.permute.xlu0 %2801
        %2805 = vset.pattern.permute.xlu0 0
        %2806 = vperm.xlu0 %2805, %v2644
        %v2807 = vpop.permute.xlu0 %2806
        %2810 = vset.pattern.permute.xlu0 0
        %2811 = vperm.xlu0 %2810, %v2645
        %v2812 = vpop.permute.xlu0 %2811
        %2815 = vset.pattern.permute.xlu0 0
        %2816 = vperm.xlu0 %2815, %v2646
        %v2817 = vpop.permute.xlu0 %2816
        %2820 = vset.pattern.permute.xlu0 0
        %2821 = vperm.xlu0 %2820, %v2647
        %v2822 = vpop.permute.xlu0 %2821
        %2825 = vset.pattern.permute.xlu0 0
        %2826 = vperm.xlu0 %2825, %v2648
        %v2827 = vpop.permute.xlu0 %2826
        %2830 = vset.pattern.permute.xlu0 0
        %2831 = vperm.xlu0 %2830, %v2649
        %v2832 = vpop.permute.xlu0 %2831
        %2835 = vset.pattern.permute.xlu0 0
        %2836 = vperm.xlu0 %2835, %v2650
        %v2837 = vpop.permute.xlu0 %2836
        %2840 = vset.pattern.permute.xlu0 0
        %2841 = vperm.xlu0 %2840, %v2651
        %v2842 = vpop.permute.xlu0 %2841
        %2845 = vset.pattern.permute.xlu0 0
        %2846 = vperm.xlu0 %2845, %v2652
        %v2847 = vpop.permute.xlu0 %2846
        %2850 = vset.pattern.permute.xlu0 0
        %2851 = vperm.xlu0 %2850, %v2653
        %v2852 = vpop.permute.xlu0 %2851
        %2855 = vset.pattern.permute.xlu0 0
        %2856 = vperm.xlu0 %2855, %v2654
        %v2857 = vpop.permute.xlu0 %2856
        %2860 = vset.pattern.permute.xlu0 0
        %2861 = vperm.xlu0 %2860, %v2655
        %v2862 = vpop.permute.xlu0 %2861
        %2865 = vset.pattern.permute.xlu0 0
        %2866 = vperm.xlu0 %2865, %v2656
        %v2867 = vpop.permute.xlu0 %2866
        %2870 = vset.pattern.permute.xlu0 0
        %2871 = vperm.xlu0 %2870, %v2657
        %v2872 = vpop.permute.xlu0 %2871
        %2875 = vset.pattern.permute.xlu0 0
        %2876 = vperm.xlu0 %2875, %v2658
        %v2877 = vpop.permute.xlu0 %2876
        %2880 = vset.pattern.permute.xlu0 0
        %2881 = vperm.xlu0 %2880, %v2659
        %v2882 = vpop.permute.xlu0 %2881
        %2885 = vset.pattern.permute.xlu0 0
        %2886 = vperm.xlu0 %2885, %v2660
        %v2887 = vpop.permute.xlu0 %2886
        %2890 = vset.pattern.permute.xlu0 0
        %2891 = vperm.xlu0 %2890, %v2661
        %v2892 = vpop.permute.xlu0 %2891
        %2895 = vset.pattern.permute.xlu0 0
        %2896 = vperm.xlu0 %2895, %v2662
        %v2897 = vpop.permute.xlu0 %2896
        %2900 = vset.pattern.permute.xlu0 0
        %2901 = vperm.xlu0 %2900, %v2663
        %v2902 = vpop.permute.xlu0 %2901
        %2905 = vset.pattern.permute.xlu0 0
        %2906 = vperm.xlu0 %2905, %v2664
        %v2907 = vpop.permute.xlu0 %2906
        %2910 = vset.pattern.permute.xlu0 0
        %2911 = vperm.xlu0 %2910, %v2665
        %v2912 = vpop.permute.xlu0 %2911
        %2915 = vset.pattern.permute.xlu0 0
        %2916 = vperm.xlu0 %2915, %v2666
        %v2917 = vpop.permute.xlu0 %2916
        %2920 = vset.pattern.permute.xlu0 0
        %2921 = vperm.xlu0 %2920, %v2667
        %v2922 = vpop.permute.xlu0 %2921
        %2925 = vset.pattern.permute.xlu0 0
        %2926 = vperm.xlu0 %2925, %v2668
        %v2927 = vpop.permute.xlu0 %2926
        %2930 = vset.pattern.permute.xlu0 0
        %2931 = vperm.xlu0 %2930, %v2669
        %v2932 = vpop.permute.xlu0 %2931
        %2935 = vset.pattern.permute.xlu0 0
        %2936 = vperm.xlu0 %2935, %v2670
        %v2937 = vpop.permute.xlu0 %2936
        %2940 = vset.pattern.permute.xlu0 0
        %2941 = vperm.xlu0 %2940, %v2671
        %v2942 = vpop.permute.xlu0 %2941
        %2945 = vset.pattern.permute.xlu0 0
        %2946 = vperm.xlu0 %2945, %v2672
        %v2947 = vpop.permute.xlu0 %2946
        %2950 = vset.pattern.permute.xlu0 0
        %2951 = vperm.xlu0 %2950, %v2673
        %v2952 = vpop.permute.xlu0 %2951
        %2955 = vset.pattern.permute.xlu0 0
        %2956 = vperm.xlu0 %2955, %v2674
        %v2957 = vpop.permute.xlu0 %2956
        %2960 = vset.pattern.permute.xlu0 0
        %2961 = vperm.xlu0 %2960, %v2675
        %v2962 = vpop.permute.xlu0 %2961
        %2965 = vset.pattern.permute.xlu0 0
        %2966 = vperm.xlu0 %2965, %v2676
        %v2967 = vpop.permute.xlu0 %2966
        %2970 = vset.pattern.permute.xlu0 0
        %2971 = vperm.xlu0 %2970, %v2677
        %v2972 = vpop.permute.xlu0 %2971
        %2975 = vset.pattern.permute.xlu0 0
        %2976 = vperm.xlu0 %2975, %v2678
        %v2977 = vpop.permute.xlu0 %2976
        %2980 = vset.pattern.permute.xlu0 0
        %2981 = vperm.xlu0 %2980, %v2679
        %v2982 = vpop.permute.xlu0 %2981
        %2985 = vset.pattern.permute.xlu0 0
        %2986 = vperm.xlu0 %2985, %v2680
        %v2987 = vpop.permute.xlu0 %2986
        %2990 = vset.pattern.permute.xlu0 0
        %2991 = vperm.xlu0 %2990, %v2681
        %v2992 = vpop.permute.xlu0 %2991
        %2995 = vset.pattern.permute.xlu0 0
        %2996 = vperm.xlu0 %2995, %v2682
        %v2997 = vpop.permute.xlu0 %2996
        %3000 = vset.pattern.permute.xlu0 0
        %3001 = vperm.xlu0 %3000, %v2683
        %v3002 = vpop.permute.xlu0 %3001
        %v3004 = vmul.f32 %v2687, %v376
        %v3005 = vmul.f32 %v2692, %v377
        %v3006 = vmul.f32 %v2697, %v378
        %v3007 = vmul.f32 %v2702, %v379
        %v3008 = vmul.f32 %v2707, %v380
        %v3009 = vmul.f32 %v2712, %v381
        %v3010 = vmul.f32 %v2717, %v382
        %v3011 = vmul.f32 %v2722, %v383
        %v3012 = vmul.f32 %v2727, %v384
        %v3013 = vmul.f32 %v2732, %v385
        %v3014 = vmul.f32 %v2737, %v386
        %v3015 = vmul.f32 %v2742, %v387
        %v3016 = vmul.f32 %v2747, %v388
        %v3017 = vmul.f32 %v2752, %v389
        %v3018 = vmul.f32 %v2757, %v390
        %v3019 = vmul.f32 %v2762, %v391
        %v3020 = vmul.f32 %v2767, %v392
        %v3021 = vmul.f32 %v2772, %v393
        %v3022 = vmul.f32 %v2777, %v394
        %v3023 = vmul.f32 %v2782, %v395
        %v3024 = vmul.f32 %v2787, %v396
        %v3025 = vmul.f32 %v2792, %v397
        %v3026 = vmul.f32 %v2797, %v398
        %v3027 = vmul.f32 %v2802, %v399
        %v3028 = vmul.f32 %v2807, %v400
        %v3029 = vmul.f32 %v2812, %v401
        %v3030 = vmul.f32 %v2817, %v402
        %v3031 = vmul.f32 %v2822, %v403
        %v3032 = vmul.f32 %v2827, %v404
        %v3033 = vmul.f32 %v2832, %v405
        %v3034 = vmul.f32 %v2837, %v406
        %v3035 = vmul.f32 %v2842, %v407
        %v3036 = vmul.f32 %v2847, %v408
        %v3037 = vmul.f32 %v2852, %v409
        %v3038 = vmul.f32 %v2857, %v410
        %v3039 = vmul.f32 %v2862, %v411
        %v3040 = vmul.f32 %v2867, %v412
        %v3041 = vmul.f32 %v2872, %v413
        %v3042 = vmul.f32 %v2877, %v414
        %v3043 = vmul.f32 %v2882, %v415
        %v3044 = vmul.f32 %v2887, %v416
        %v3045 = vmul.f32 %v2892, %v417
        %v3046 = vmul.f32 %v2897, %v418
        %v3047 = vmul.f32 %v2902, %v419
        %v3048 = vmul.f32 %v2907, %v420
        %v3049 = vmul.f32 %v2912, %v421
        %v3050 = vmul.f32 %v2917, %v422
        %v3051 = vmul.f32 %v2922, %v423
        %v3052 = vmul.f32 %v2927, %v424
        %v3053 = vmul.f32 %v2932, %v425
        %v3054 = vmul.f32 %v2937, %v426
        %v3055 = vmul.f32 %v2942, %v427
        %v3056 = vmul.f32 %v2947, %v428
        %v3057 = vmul.f32 %v2952, %v429
        %v3058 = vmul.f32 %v2957, %v430
        %v3059 = vmul.f32 %v2962, %v431
        %v3060 = vmul.f32 %v2967, %v432
        %v3061 = vmul.f32 %v2972, %v433
        %v3062 = vmul.f32 %v2977, %v434
        %v3063 = vmul.f32 %v2982, %v435
        %v3064 = vmul.f32 %v2987, %v436
        %v3065 = vmul.f32 %v2992, %v437
        %v3066 = vmul.f32 %v2997, %v438
        %v3067 = vmul.f32 %v3002, %v439
        %v3068 = vadd.f32 %v3004, %v3005
        %v3069 = vadd.f32 %v3068, %v3006
        %v3070 = vadd.f32 %v3069, %v3007
        %v3071 = vadd.f32 %v3070, %v3008
        %v3072 = vadd.f32 %v3071, %v3009
        %v3073 = vadd.f32 %v3072, %v3010
        %v3074 = vadd.f32 %v3073, %v3011
        %v3075 = vrot.slane %v3074, 4
        %v3076 = vadd.f32 %v3074, %v3075
        %v3077 = vrot.slane %v3076, 2
        %v3078 = vadd.f32 %v3076, %v3077
        %v3079 = vrot.slane %v3078, 1
        %v3080 = vadd.f32 %v3078, %v3079
        %v3081 = vadd.f32 %v3012, %v3013
        %v3082 = vadd.f32 %v3081, %v3014
        %v3083 = vadd.f32 %v3082, %v3015
        %v3084 = vadd.f32 %v3083, %v3016
        %v3085 = vadd.f32 %v3084, %v3017
        %v3086 = vadd.f32 %v3085, %v3018
        %v3087 = vadd.f32 %v3086, %v3019
        %v3088 = vrot.slane %v3087, 4
        %v3089 = vadd.f32 %v3087, %v3088
        %v3090 = vrot.slane %v3089, 2
        %v3091 = vadd.f32 %v3089, %v3090
        %v3092 = vrot.slane %v3091, 1
        %v3093 = vadd.f32 %v3091, %v3092
        %v3094 = vadd.f32 %v3020, %v3021
        %v3095 = vadd.f32 %v3094, %v3022
        %v3096 = vadd.f32 %v3095, %v3023
        %v3097 = vadd.f32 %v3096, %v3024
        %v3098 = vadd.f32 %v3097, %v3025
        %v3099 = vadd.f32 %v3098, %v3026
        %v3100 = vadd.f32 %v3099, %v3027
        %v3101 = vrot.slane %v3100, 4
        %v3102 = vadd.f32 %v3100, %v3101
        %v3103 = vrot.slane %v3102, 2
        %v3104 = vadd.f32 %v3102, %v3103
        %v3105 = vrot.slane %v3104, 1
        %v3106 = vadd.f32 %v3104, %v3105
        %v3107 = vadd.f32 %v3028, %v3029
        %v3108 = vadd.f32 %v3107, %v3030
        %v3109 = vadd.f32 %v3108, %v3031
        %v3110 = vadd.f32 %v3109, %v3032
        %v3111 = vadd.f32 %v3110, %v3033
        %v3112 = vadd.f32 %v3111, %v3034
        %v3113 = vadd.f32 %v3112, %v3035
        %v3114 = vrot.slane %v3113, 4
        %v3115 = vadd.f32 %v3113, %v3114
        %v3116 = vrot.slane %v3115, 2
        %v3117 = vadd.f32 %v3115, %v3116
        %v3118 = vrot.slane %v3117, 1
        %v3119 = vadd.f32 %v3117, %v3118
        %v3120 = vadd.f32 %v3036, %v3037
        %v3121 = vadd.f32 %v3120, %v3038
        %v3122 = vadd.f32 %v3121, %v3039
        %v3123 = vadd.f32 %v3122, %v3040
        %v3124 = vadd.f32 %v3123, %v3041
        %v3125 = vadd.f32 %v3124, %v3042
        %v3126 = vadd.f32 %v3125, %v3043
        %v3127 = vrot.slane %v3126, 4
        %v3128 = vadd.f32 %v3126, %v3127
        %v3129 = vrot.slane %v3128, 2
        %v3130 = vadd.f32 %v3128, %v3129
        %v3131 = vrot.slane %v3130, 1
        %v3132 = vadd.f32 %v3130, %v3131
        %v3133 = vadd.f32 %v3044, %v3045
        %v3134 = vadd.f32 %v3133, %v3046
        %v3135 = vadd.f32 %v3134, %v3047
        %v3136 = vadd.f32 %v3135, %v3048
        %v3137 = vadd.f32 %v3136, %v3049
        %v3138 = vadd.f32 %v3137, %v3050
        %v3139 = vadd.f32 %v3138, %v3051
        %v3140 = vrot.slane %v3139, 4
        %v3141 = vadd.f32 %v3139, %v3140
        %v3142 = vrot.slane %v3141, 2
        %v3143 = vadd.f32 %v3141, %v3142
        %v3144 = vrot.slane %v3143, 1
        %v3145 = vadd.f32 %v3143, %v3144
        %v3146 = vadd.f32 %v3052, %v3053
        %v3147 = vadd.f32 %v3146, %v3054
        %v3148 = vadd.f32 %v3147, %v3055
        %v3149 = vadd.f32 %v3148, %v3056
        %v3150 = vadd.f32 %v3149, %v3057
        %v3151 = vadd.f32 %v3150, %v3058
        %v3152 = vadd.f32 %v3151, %v3059
        %v3153 = vrot.slane %v3152, 4
        %v3154 = vadd.f32 %v3152, %v3153
        %v3155 = vrot.slane %v3154, 2
        %v3156 = vadd.f32 %v3154, %v3155
        %v3157 = vrot.slane %v3156, 1
        %v3158 = vadd.f32 %v3156, %v3157
        %v3159 = vadd.f32 %v3060, %v3061
        %v3160 = vadd.f32 %v3159, %v3062
        %v3161 = vadd.f32 %v3160, %v3063
        %v3162 = vadd.f32 %v3161, %v3064
        %v3163 = vadd.f32 %v3162, %v3065
        %v3164 = vadd.f32 %v3163, %v3066
        %v3165 = vadd.f32 %v3164, %v3067
        %v3166 = vrot.slane %v3165, 4
        %v3167 = vadd.f32 %v3165, %v3166
        %v3168 = vrot.slane %v3167, 2
        %v3169 = vadd.f32 %v3167, %v3168
        %v3170 = vrot.slane %v3169, 1
        %v3171 = vadd.f32 %v3169, %v3170
        %v3180 = vsel %vm1744, %v3093, %v3080
        %v3181 = vsel %vm1746, %v3106, %v3180
        %v3182 = vsel %vm1748, %v3119, %v3181
        %v3183 = vsel %vm1750, %v3132, %v3182
        %v3184 = vsel %vm1752, %v3145, %v3183
        %v3185 = vsel %vm1754, %v3158, %v3184
        %v3186 = vsel %vm1756, %v3171, %v3185
        %3188 = vst [vmem:[%s367] sm:$0xff] %v3186
        %v3189 = vlaneseq
        %v3190 = vshrl.u32 %v3189, 7
        %v3191 = vsub.s32 %v1417, %v3190
        %v3192 = vrot.slane %v2687, %v3191
        %v3193 = vlaneseq
        %v3194 = vshrl.u32 %v3193, 7
        %v3195 = vsub.s32 %v1422, %v3194
        %v3196 = vrot.slane %v2692, %v3195
        %v3197 = vsel %vm1427, %v3196, %v3192
        %v3198 = vlaneseq
        %v3199 = vshrl.u32 %v3198, 7
        %v3200 = vsub.s32 %v1429, %v3199
        %v3201 = vrot.slane %v2697, %v3200
        %v3202 = vsel %vm1434, %v3201, %v3197
        %v3203 = vlaneseq
        %v3204 = vshrl.u32 %v3203, 7
        %v3205 = vsub.s32 %v1436, %v3204
        %v3206 = vrot.slane %v2702, %v3205
        %v3207 = vsel %vm1441, %v3206, %v3202
        %v3208 = vlaneseq
        %v3209 = vshrl.u32 %v3208, 7
        %v3210 = vsub.s32 %v1443, %v3209
        %v3211 = vrot.slane %v2707, %v3210
        %v3212 = vsel %vm1448, %v3211, %v3207
        %v3213 = vlaneseq
        %v3214 = vshrl.u32 %v3213, 7
        %v3215 = vsub.s32 %v1450, %v3214
        %v3216 = vrot.slane %v2712, %v3215
        %v3217 = vsel %vm1455, %v3216, %v3212
        %v3218 = vlaneseq
        %v3219 = vshrl.u32 %v3218, 7
        %v3220 = vsub.s32 %v1457, %v3219
        %v3221 = vrot.slane %v2717, %v3220
        %v3222 = vsel %vm1462, %v3221, %v3217
        %v3223 = vlaneseq
        %v3224 = vshrl.u32 %v3223, 7
        %v3225 = vsub.s32 %v1464, %v3224
        %v3226 = vrot.slane %v2722, %v3225
        %v3227 = vsel %vm1469, %v3226, %v3222
        %v3228 = vlaneseq
        %v3229 = vshrl.u32 %v3228, 7
        %v3230 = vsub.s32 %v1417, %v3229
        %v3231 = vrot.slane %v2727, %v3230
        %v3232 = vlaneseq
        %v3233 = vshrl.u32 %v3232, 7
        %v3234 = vsub.s32 %v1422, %v3233
        %v3235 = vrot.slane %v2732, %v3234
        %v3236 = vsel %vm1427, %v3235, %v3231
        %v3237 = vlaneseq
        %v3238 = vshrl.u32 %v3237, 7
        %v3239 = vsub.s32 %v1429, %v3238
        %v3240 = vrot.slane %v2737, %v3239
        %v3241 = vsel %vm1434, %v3240, %v3236
        %v3242 = vlaneseq
        %v3243 = vshrl.u32 %v3242, 7
        %v3244 = vsub.s32 %v1436, %v3243
        %v3245 = vrot.slane %v2742, %v3244
        %v3246 = vsel %vm1441, %v3245, %v3241
        %v3247 = vlaneseq
        %v3248 = vshrl.u32 %v3247, 7
        %v3249 = vsub.s32 %v1443, %v3248
        %v3250 = vrot.slane %v2747, %v3249
        %v3251 = vsel %vm1448, %v3250, %v3246
        %v3252 = vlaneseq
        %v3253 = vshrl.u32 %v3252, 7
        %v3254 = vsub.s32 %v1450, %v3253
        %v3255 = vrot.slane %v2752, %v3254
        %v3256 = vsel %vm1455, %v3255, %v3251
        %v3257 = vlaneseq
        %v3258 = vshrl.u32 %v3257, 7
        %v3259 = vsub.s32 %v1457, %v3258
        %v3260 = vrot.slane %v2757, %v3259
        %v3261 = vsel %vm1462, %v3260, %v3256
        %v3262 = vlaneseq
        %v3263 = vshrl.u32 %v3262, 7
        %v3264 = vsub.s32 %v1464, %v3263
        %v3265 = vrot.slane %v2762, %v3264
        %v3266 = vsel %vm1469, %v3265, %v3261
        %v3267 = vlaneseq
        %v3268 = vshrl.u32 %v3267, 7
        %v3269 = vsub.s32 %v1417, %v3268
        %v3270 = vrot.slane %v2767, %v3269
        %v3271 = vlaneseq
        %v3272 = vshrl.u32 %v3271, 7
        %v3273 = vsub.s32 %v1422, %v3272
        %v3274 = vrot.slane %v2772, %v3273
        %v3275 = vsel %vm1427, %v3274, %v3270
        %v3276 = vlaneseq
        %v3277 = vshrl.u32 %v3276, 7
        %v3278 = vsub.s32 %v1429, %v3277
        %v3279 = vrot.slane %v2777, %v3278
        %v3280 = vsel %vm1434, %v3279, %v3275
        %v3281 = vlaneseq
        %v3282 = vshrl.u32 %v3281, 7
        %v3283 = vsub.s32 %v1436, %v3282
        %v3284 = vrot.slane %v2782, %v3283
        %v3285 = vsel %vm1441, %v3284, %v3280
        %v3286 = vlaneseq
        %v3287 = vshrl.u32 %v3286, 7
        %v3288 = vsub.s32 %v1443, %v3287
        %v3289 = vrot.slane %v2787, %v3288
        %v3290 = vsel %vm1448, %v3289, %v3285
        %v3291 = vlaneseq
        %v3292 = vshrl.u32 %v3291, 7
        %v3293 = vsub.s32 %v1450, %v3292
        %v3294 = vrot.slane %v2792, %v3293
        %v3295 = vsel %vm1455, %v3294, %v3290
        %v3296 = vlaneseq
        %v3297 = vshrl.u32 %v3296, 7
        %v3298 = vsub.s32 %v1457, %v3297
        %v3299 = vrot.slane %v2797, %v3298
        %v3300 = vsel %vm1462, %v3299, %v3295
        %v3301 = vlaneseq
        %v3302 = vshrl.u32 %v3301, 7
        %v3303 = vsub.s32 %v1464, %v3302
        %v3304 = vrot.slane %v2802, %v3303
        %v3305 = vsel %vm1469, %v3304, %v3300
        %v3306 = vlaneseq
        %v3307 = vshrl.u32 %v3306, 7
        %v3308 = vsub.s32 %v1417, %v3307
        %v3309 = vrot.slane %v2807, %v3308
        %v3310 = vlaneseq
        %v3311 = vshrl.u32 %v3310, 7
        %v3312 = vsub.s32 %v1422, %v3311
        %v3313 = vrot.slane %v2812, %v3312
        %v3314 = vsel %vm1427, %v3313, %v3309
        %v3315 = vlaneseq
        %v3316 = vshrl.u32 %v3315, 7
        %v3317 = vsub.s32 %v1429, %v3316
        %v3318 = vrot.slane %v2817, %v3317
        %v3319 = vsel %vm1434, %v3318, %v3314
        %v3320 = vlaneseq
        %v3321 = vshrl.u32 %v3320, 7
        %v3322 = vsub.s32 %v1436, %v3321
        %v3323 = vrot.slane %v2822, %v3322
        %v3324 = vsel %vm1441, %v3323, %v3319
        %v3325 = vlaneseq
        %v3326 = vshrl.u32 %v3325, 7
        %v3327 = vsub.s32 %v1443, %v3326
        %v3328 = vrot.slane %v2827, %v3327
        %v3329 = vsel %vm1448, %v3328, %v3324
        %v3330 = vlaneseq
        %v3331 = vshrl.u32 %v3330, 7
        %v3332 = vsub.s32 %v1450, %v3331
        %v3333 = vrot.slane %v2832, %v3332
        %v3334 = vsel %vm1455, %v3333, %v3329
        %v3335 = vlaneseq
        %v3336 = vshrl.u32 %v3335, 7
        %v3337 = vsub.s32 %v1457, %v3336
        %v3338 = vrot.slane %v2837, %v3337
        %v3339 = vsel %vm1462, %v3338, %v3334
        %v3340 = vlaneseq
        %v3341 = vshrl.u32 %v3340, 7
        %v3342 = vsub.s32 %v1464, %v3341
        %v3343 = vrot.slane %v2842, %v3342
        %v3344 = vsel %vm1469, %v3343, %v3339
        %v3345 = vlaneseq
        %v3346 = vshrl.u32 %v3345, 7
        %v3347 = vsub.s32 %v1417, %v3346
        %v3348 = vrot.slane %v2847, %v3347
        %v3349 = vlaneseq
        %v3350 = vshrl.u32 %v3349, 7
        %v3351 = vsub.s32 %v1422, %v3350
        %v3352 = vrot.slane %v2852, %v3351
        %v3353 = vsel %vm1427, %v3352, %v3348
        %v3354 = vlaneseq
        %v3355 = vshrl.u32 %v3354, 7
        %v3356 = vsub.s32 %v1429, %v3355
        %v3357 = vrot.slane %v2857, %v3356
        %v3358 = vsel %vm1434, %v3357, %v3353
        %v3359 = vlaneseq
        %v3360 = vshrl.u32 %v3359, 7
        %v3361 = vsub.s32 %v1436, %v3360
        %v3362 = vrot.slane %v2862, %v3361
        %v3363 = vsel %vm1441, %v3362, %v3358
        %v3364 = vlaneseq
        %v3365 = vshrl.u32 %v3364, 7
        %v3366 = vsub.s32 %v1443, %v3365
        %v3367 = vrot.slane %v2867, %v3366
        %v3368 = vsel %vm1448, %v3367, %v3363
        %v3369 = vlaneseq
        %v3370 = vshrl.u32 %v3369, 7
        %v3371 = vsub.s32 %v1450, %v3370
        %v3372 = vrot.slane %v2872, %v3371
        %v3373 = vsel %vm1455, %v3372, %v3368
        %v3374 = vlaneseq
        %v3375 = vshrl.u32 %v3374, 7
        %v3376 = vsub.s32 %v1457, %v3375
        %v3377 = vrot.slane %v2877, %v3376
        %v3378 = vsel %vm1462, %v3377, %v3373
        %v3379 = vlaneseq
        %v3380 = vshrl.u32 %v3379, 7
        %v3381 = vsub.s32 %v1464, %v3380
        %v3382 = vrot.slane %v2882, %v3381
        %v3383 = vsel %vm1469, %v3382, %v3378
        %v3384 = vlaneseq
        %v3385 = vshrl.u32 %v3384, 7
        %v3386 = vsub.s32 %v1417, %v3385
        %v3387 = vrot.slane %v2887, %v3386
        %v3388 = vlaneseq
        %v3389 = vshrl.u32 %v3388, 7
        %v3390 = vsub.s32 %v1422, %v3389
        %v3391 = vrot.slane %v2892, %v3390
        %v3392 = vsel %vm1427, %v3391, %v3387
        %v3393 = vlaneseq
        %v3394 = vshrl.u32 %v3393, 7
        %v3395 = vsub.s32 %v1429, %v3394
        %v3396 = vrot.slane %v2897, %v3395
        %v3397 = vsel %vm1434, %v3396, %v3392
        %v3398 = vlaneseq
        %v3399 = vshrl.u32 %v3398, 7
        %v3400 = vsub.s32 %v1436, %v3399
        %v3401 = vrot.slane %v2902, %v3400
        %v3402 = vsel %vm1441, %v3401, %v3397
        %v3403 = vlaneseq
        %v3404 = vshrl.u32 %v3403, 7
        %v3405 = vsub.s32 %v1443, %v3404
        %v3406 = vrot.slane %v2907, %v3405
        %v3407 = vsel %vm1448, %v3406, %v3402
        %v3408 = vlaneseq
        %v3409 = vshrl.u32 %v3408, 7
        %v3410 = vsub.s32 %v1450, %v3409
        %v3411 = vrot.slane %v2912, %v3410
        %v3412 = vsel %vm1455, %v3411, %v3407
        %v3413 = vlaneseq
        %v3414 = vshrl.u32 %v3413, 7
        %v3415 = vsub.s32 %v1457, %v3414
        %v3416 = vrot.slane %v2917, %v3415
        %v3417 = vsel %vm1462, %v3416, %v3412
        %v3418 = vlaneseq
        %v3419 = vshrl.u32 %v3418, 7
        %v3420 = vsub.s32 %v1464, %v3419
        %v3421 = vrot.slane %v2922, %v3420
        %v3422 = vsel %vm1469, %v3421, %v3417
        %v3423 = vlaneseq
        %v3424 = vshrl.u32 %v3423, 7
        %v3425 = vsub.s32 %v1417, %v3424
        %v3426 = vrot.slane %v2927, %v3425
        %v3427 = vlaneseq
        %v3428 = vshrl.u32 %v3427, 7
        %v3429 = vsub.s32 %v1422, %v3428
        %v3430 = vrot.slane %v2932, %v3429
        %v3431 = vsel %vm1427, %v3430, %v3426
        %v3432 = vlaneseq
        %v3433 = vshrl.u32 %v3432, 7
        %v3434 = vsub.s32 %v1429, %v3433
        %v3435 = vrot.slane %v2937, %v3434
        %v3436 = vsel %vm1434, %v3435, %v3431
        %v3437 = vlaneseq
        %v3438 = vshrl.u32 %v3437, 7
        %v3439 = vsub.s32 %v1436, %v3438
        %v3440 = vrot.slane %v2942, %v3439
        %v3441 = vsel %vm1441, %v3440, %v3436
        %v3442 = vlaneseq
        %v3443 = vshrl.u32 %v3442, 7
        %v3444 = vsub.s32 %v1443, %v3443
        %v3445 = vrot.slane %v2947, %v3444
        %v3446 = vsel %vm1448, %v3445, %v3441
        %v3447 = vlaneseq
        %v3448 = vshrl.u32 %v3447, 7
        %v3449 = vsub.s32 %v1450, %v3448
        %v3450 = vrot.slane %v2952, %v3449
        %v3451 = vsel %vm1455, %v3450, %v3446
        %v3452 = vlaneseq
        %v3453 = vshrl.u32 %v3452, 7
        %v3454 = vsub.s32 %v1457, %v3453
        %v3455 = vrot.slane %v2957, %v3454
        %v3456 = vsel %vm1462, %v3455, %v3451
        %v3457 = vlaneseq
        %v3458 = vshrl.u32 %v3457, 7
        %v3459 = vsub.s32 %v1464, %v3458
        %v3460 = vrot.slane %v2962, %v3459
        %v3461 = vsel %vm1469, %v3460, %v3456
        %v3462 = vlaneseq
        %v3463 = vshrl.u32 %v3462, 7
        %v3464 = vsub.s32 %v1417, %v3463
        %v3465 = vrot.slane %v2967, %v3464
        %v3466 = vlaneseq
        %v3467 = vshrl.u32 %v3466, 7
        %v3468 = vsub.s32 %v1422, %v3467
        %v3469 = vrot.slane %v2972, %v3468
        %v3470 = vsel %vm1427, %v3469, %v3465
        %v3471 = vlaneseq
        %v3472 = vshrl.u32 %v3471, 7
        %v3473 = vsub.s32 %v1429, %v3472
        %v3474 = vrot.slane %v2977, %v3473
        %v3475 = vsel %vm1434, %v3474, %v3470
        %v3476 = vlaneseq
        %v3477 = vshrl.u32 %v3476, 7
        %v3478 = vsub.s32 %v1436, %v3477
        %v3479 = vrot.slane %v2982, %v3478
        %v3480 = vsel %vm1441, %v3479, %v3475
        %v3481 = vlaneseq
        %v3482 = vshrl.u32 %v3481, 7
        %v3483 = vsub.s32 %v1443, %v3482
        %v3484 = vrot.slane %v2987, %v3483
        %v3485 = vsel %vm1448, %v3484, %v3480
        %v3486 = vlaneseq
        %v3487 = vshrl.u32 %v3486, 7
        %v3488 = vsub.s32 %v1450, %v3487
        %v3489 = vrot.slane %v2992, %v3488
        %v3490 = vsel %vm1455, %v3489, %v3485
        %v3491 = vlaneseq
        %v3492 = vshrl.u32 %v3491, 7
        %v3493 = vsub.s32 %v1457, %v3492
        %v3494 = vrot.slane %v2997, %v3493
        %v3495 = vsel %vm1462, %v3494, %v3490
        %v3496 = vlaneseq
        %v3497 = vshrl.u32 %v3496, 7
        %v3498 = vsub.s32 %v1464, %v3497
        %v3499 = vrot.slane %v3002, %v3498
        %v3500 = vsel %vm1469, %v3499, %v3495
        %v3501 = vsel %vm1744, %v3266, %v3227
        %v3502 = vsel %vm1746, %v3305, %v3501
        %v3503 = vsel %vm1748, %v3344, %v3502
        %v3504 = vsel %vm1750, %v3383, %v3503
        %v3505 = vsel %vm1752, %v3422, %v3504
        %v3506 = vsel %vm1754, %v3461, %v3505
        %v3507 = vsel %vm1756, %v3500, %v3506
        %3509 = vst.msk [vmem:[%s374] sm:$0xff] %vm1759, %v3507
        %s3510 = sand.u32 %s176, 1
        %s3511 = scalar_lea.sflag [#allocation4], %s3510
        %s3512 = sand.u32 %s176, 1
        %s3513 = smul.addr %s3512, 8
        %s3514 = scalar_lea.vmem [#allocation10], %s3513
        %s3515 = sand.u32 %s202, 1
        %s3516 = scalar_lea.sflag [#allocation12], %s3515
        %s3517 = sand.u32 %s202, 1
        %s3518 = smul.addr %s3517, 8
        %s3519 = scalar_lea.vmem [#allocation11], %s3518
        // Predicated region
        $region61: #{tpu_custom_call.1} parent=43 // pred_check
          %p3520 = pneg %p186
        $region62: #{tpu_custom_call.1} parent=43 // pred_check_branch
          %3522 = sbr.rel (%p3520) target = $region64
        $region63: #{tpu_custom_call.1} parent=43 // pred_region
          %s3524 = ssub.s32 128, 128
          %3525 = vsyncadd %s3511, %s3524
          %s3526 = smul.addr %s32, 128
          %s3527 = scalar_lea.hbm %s6, %s3526
          %s3529 = sshll.u32 %s3514, 4
          %s3530 = int_to_ptr.vmem [resolvable:$true] %s3529
          %3532 = dma.vmem_to_hbm [thread:$0]  %s3530, 128, %s3527, %s3511
        $region64: #{tpu_custom_call.1} parent=43 // pred_fallthru
          _
        // Predicated region
        $region65: #{tpu_custom_call.1} parent=43 // pred_check
          %p3533 = pneg %p212
        $region66: #{tpu_custom_call.1} parent=43 // pred_check_branch
          %3535 = sbr.rel (%p3533) target = $region68
        $region67: #{tpu_custom_call.1} parent=43 // pred_region
          %s3537 = ssub.s32 128, 128
          %3538 = vsyncadd %s3516, %s3537
          %s3539 = smul.addr %s32, 128
          %s3540 = scalar_lea.hbm %s7, %s3539
          %s3542 = sshll.u32 %s3519, 4
          %s3543 = int_to_ptr.vmem [resolvable:$true] %s3542
          %3545 = dma.vmem_to_hbm [thread:$0]  %s3543, 128, %s3540, %s3516
        $region68: #{tpu_custom_call.1} parent=43 // pred_fallthru
          _
      $region44: #{tpu_custom_call.1} parent=5 // pred_fallthru
        _
      %p3546 = scmp.le.s32.totalorder 2, %s27
      // Predicated region
      $region69: #{tpu_custom_call.1} parent=5 // pred_check
        %p3547 = pneg %p3546
      $region70: #{tpu_custom_call.1} parent=5 // pred_check_branch
        %3549 = sbr.rel (%p3547) target = $region72
      $region71: #{tpu_custom_call.1} parent=5 // pred_region
        %s3550 = ssub.s32 %s27, 2
        // Predicated region
        $region73: #{tpu_custom_call.1} parent=71 // pred_check
          %p3551 = pneg %p192
        $region74: #{tpu_custom_call.1} parent=71 // pred_check_branch
          %3553 = sbr.rel (%p3551) target = $region76
        $region75: #{tpu_custom_call.1} parent=71 // pred_region
          %s3554 = sand.u32 %s177, 1
          %s3555 = scalar_lea.sflag [#allocation4], %s3554
          %s3556 = sand.u32 %s177, 1
          %s3557 = smul.addr %s3556, 8
          %s3558 = scalar_lea.vmem [#allocation10], %s3557
          %3559 = dma.done %s3555, 128
        $region76: #{tpu_custom_call.1} parent=71 // pred_fallthru
          _
        // Predicated region
        $region77: #{tpu_custom_call.1} parent=71 // pred_check
          %p3560 = pneg %p218
        $region78: #{tpu_custom_call.1} parent=71 // pred_check_branch
          %3562 = sbr.rel (%p3560) target = $region80
        $region79: #{tpu_custom_call.1} parent=71 // pred_region
          %s3563 = sand.u32 %s203, 1
          %s3564 = scalar_lea.sflag [#allocation12], %s3563
          %s3565 = sand.u32 %s203, 1
          %s3566 = smul.addr %s3565, 8
          %s3567 = scalar_lea.vmem [#allocation11], %s3566
          %3568 = dma.done %s3564, 128
        $region80: #{tpu_custom_call.1} parent=71 // pred_fallthru
          _
      $region72: #{tpu_custom_call.1} parent=5 // pred_fallthru
        _
    $region6: #{tpu_custom_call.1} parent=1 // loop_footer
      %s31 = sadd.s32 1, %s27
    $region7: #{tpu_custom_call.1} parent=1 // loop_footer_branch
      %26 = sbr.rel target = $region3
    $region8: #{tpu_custom_call.1} parent=1 // loop_exit
      _
    %3569 = vsyncpa [#allocation3], 1
    %s3570 = scalar_lea.sflag [#allocation3], 1
    %3571 = vsyncpa %s3570, 1
    %3572 = vsyncpa [#allocation6], 1
    %s3573 = scalar_lea.sflag [#allocation6], 1
    %3574 = vsyncpa %s3573, 1
    %3575 = vsyncpa [#allocation9], 1
    %3576 = vsyncpa [#allocation4], 1
    %s3577 = scalar_lea.sflag [#allocation4], 1
    %3578 = vsyncpa %s3577, 1
    %3579 = vsyncpa [#allocation12], 1
    %s3580 = scalar_lea.sflag [#allocation12], 1
    %3581 = vsyncpa %s3580, 1

</llo_original>
